<compile_context>
chip_gen: v7x
topology: tpu7x:2x2x1
jax: 0.10.0
libtpu: 0.0.40
codegen_flags: <defaults>
</compile_context>

<pallas_src>
import functools

import jax
import jax.numpy as jnp
from jax import lax
from jax.experimental import pallas as pl
from jax.experimental.pallas import tpu as pltpu


def _gelu(x):
    # tanh-approximate GELU (BERT-style), EUP-friendly; shared by kernel & ref.
    return 0.5 * x * (1.0 + jnp.tanh(0.7978845608028654 * (x + 0.044715 * x * x * x)))


def _layer_norm(x, gamma, beta, eps=1e-12):
    mu = jnp.mean(x, axis=-1, keepdims=True)
    var = jnp.mean((x - mu) ** 2, axis=-1, keepdims=True)
    return (x - mu) * lax.rsqrt(var + eps) * gamma + beta


def encoder_kernel(prompt_ref, embed_ref,
                   wqkv_ref, bqkv_ref, wo_ref, bo_ref,
                   w1_ref, b1_ref, w2_ref, b2_ref, ln_ref,
                   o_ref, *, num_heads):
    # One grid step == one text: [learnable prompt ; token embeddings] -> CLS.
    D = wqkv_ref.shape[1]
    num_layers = wqkv_ref.shape[0]
    dh = D // num_heads
    scale = 1.0 / (dh ** 0.5)

    # Concat prompt + token embeddings; hidden state carried in f32.
    h = jnp.concatenate(
        [prompt_ref[0].astype(jnp.float32), embed_ref[0].astype(jnp.float32)],
        axis=0)                                                   # (S, D) f32

    for l in range(num_layers):                                   # short, unrolled
        # ---- multi-head self-attention (full attention; mask is all-ones) ----
        wqkv = wqkv_ref[l]                                        # (D, 3D) bf16
        qkv = jnp.dot(h.astype(wqkv.dtype), wqkv,
                      preferred_element_type=jnp.float32) + bqkv_ref[l]  # (S, 3D)
        q = qkv[:, 0:D]
        k = qkv[:, D:2 * D]
        v = qkv[:, 2 * D:3 * D]

        ctx_parts = []
        for hh in range(num_heads):
            qh = q[:, hh * dh:(hh + 1) * dh]                      # (S, dh)
            kh = k[:, hh * dh:(hh + 1) * dh]
            vh = v[:, hh * dh:(hh + 1) * dh]
            # q @ k^T via contraction on the feature dim (no explicit transpose)
            s = lax.dot_general(qh, kh, (((1,), (1,)), ((), ())),
                                preferred_element_type=jnp.float32) * scale
            s = s - jnp.max(s, axis=-1, keepdims=True)
            p = jnp.exp(s)
            p = p * pl.reciprocal(jnp.sum(p, axis=-1, keepdims=True), approx=True)
            ctx_parts.append(jnp.dot(p, vh, preferred_element_type=jnp.float32))
        ctx = jnp.concatenate(ctx_parts, axis=-1)                 # (S, D)

        wo = wo_ref[l]
        attn_out = jnp.dot(ctx.astype(wo.dtype), wo,
                           preferred_element_type=jnp.float32) + bo_ref[l]

        ln_l = ln_ref[l]                                          # (4, D) packed
        h = _layer_norm(h + attn_out, ln_l[0:1, :], ln_l[1:2, :])

        # ---- feed-forward ----
        w1 = w1_ref[l]
        ff = jnp.dot(h.astype(w1.dtype), w1,
                     preferred_element_type=jnp.float32) + b1_ref[l]
        ff = _gelu(ff)
        w2 = w2_ref[l]
        ff = jnp.dot(ff.astype(w2.dtype), w2,
                     preferred_element_type=jnp.float32) + b2_ref[l]
        h = _layer_norm(h + ff, ln_l[2:3, :], ln_l[3:4, :])

    # CLS embedding (position 0) — lane-dense (1, D) store.
    o_ref[0] = h[0:1, :]


def prompt_encode_pallas(prompts, embeds, params, num_heads):
    """prompts: (B, P, D); embeds: (B, L, D)  ->  (B, D) CLS embeddings."""
    B, P, D = prompts.shape
    L = embeds.shape[1]

    weight_args = (params["wqkv"], params["bqkv"], params["wo"], params["bo"],
                   params["w1"], params["b1"], params["w2"], params["b2"],
                   params["ln"])

    def resident(a):
        # constant index map -> fetched to VMEM once, stays resident across grid
        nd = a.ndim
        return pl.BlockSpec(a.shape, lambda b, _nd=nd: (0,) * _nd)

    in_specs = [
        pl.BlockSpec((1, P, D), lambda b: (b, 0, 0)),   # per-text learnable prompt
        pl.BlockSpec((1, L, D), lambda b: (b, 0, 0)),   # per-text token embeddings
    ] + [resident(a) for a in weight_args]

    out = pl.pallas_call(
        functools.partial(encoder_kernel, num_heads=num_heads),
        out_shape=jax.ShapeDtypeStruct((B, 1, D), jnp.float32),
        grid=(B,),
        in_specs=in_specs,
        out_specs=pl.BlockSpec((1, 1, D), lambda b: (b, 0, 0)),
        compiler_params=pltpu.CompilerParams(
            dimension_semantics=("parallel",),          # v7x: 2 TCs split the texts
            vmem_limit_bytes=64 * 1024 * 1024),
    )(prompts, embeds, *weight_args)
    return out.reshape(B, D)


def prompt_encode_reference(prompts, embeds, params, num_heads):
    """Pure-JAX mirror of the encoder forward (for correctness check)."""
    p = params
    h = jnp.concatenate([prompts.astype(jnp.float32),
                         embeds.astype(jnp.float32)], axis=1)     # (B, S, D)
    B, S, D = h.shape
    dh = D // num_heads
    num_layers = p["wqkv"].shape[0]

    def mm(a, w):   # bf16 operands, f32 accumulation — mirrors the kernel dots
        return jnp.einsum("bsd,df->bsf", a.astype(w.dtype), w,
                          preferred_element_type=jnp.float32)

    for l in range(num_layers):
        qkv = mm(h, p["wqkv"][l]) + p["bqkv"][l]
        q, k, v = qkv[..., :D], qkv[..., D:2 * D], qkv[..., 2 * D:]
        q = q.reshape(B, S, num_heads, dh)
        k = k.reshape(B, S, num_heads, dh)
        v = v.reshape(B, S, num_heads, dh)
        s = jnp.einsum("bqhd,bkhd->bhqk", q, k,
                       preferred_element_type=jnp.float32) / (dh ** 0.5)
        a = jax.nn.softmax(s, axis=-1)
        ctx = jnp.einsum("bhqk,bkhd->bqhd", a, v,
                         preferred_element_type=jnp.float32).reshape(B, S, D)
        h = _layer_norm(h + mm(ctx, p["wo"][l]) + p["bo"][l],
                        p["ln"][l, 0], p["ln"][l, 1])
        ff = _gelu(mm(h, p["w1"][l]) + p["b1"][l])
        h = _layer_norm(h + mm(ff, p["w2"][l]) + p["b2"][l],
                        p["ln"][l, 2], p["ln"][l, 3])
    return h[:, 0, :]


def init_params(key, num_layers, d_model, d_ff, weight_dtype=jnp.bfloat16):
    """Stand-in for the frozen BioBERT encoder weights (BERT-style init)."""
    nl, D, F = num_layers, d_model, d_ff
    ks = jax.random.split(key, 8)
    std = 0.02

    def rnd(k, shape):
        return std * jax.random.normal(k, shape, jnp.float32)

    ln = jnp.stack([jnp.ones((nl, D)), jnp.zeros((nl, D)),
                    jnp.ones((nl, D)), jnp.zeros((nl, D))], axis=1)  # (nl,4,D)

    return {
        "wqkv": rnd(ks[0], (nl, D, 3 * D)).astype(weight_dtype),  # fused Q/K/V
        "bqkv": rnd(ks[1], (nl, 1, 3 * D)),
        "wo":   rnd(ks[2], (nl, D, D)).astype(weight_dtype),
        "bo":   rnd(ks[3], (nl, 1, D)),
        "w1":   rnd(ks[4], (nl, D, F)).astype(weight_dtype),
        "b1":   rnd(ks[5], (nl, 1, F)),
        "w2":   rnd(ks[6], (nl, F, D)).astype(weight_dtype),
        "b2":   rnd(ks[7], (nl, 1, D)),
        "ln":   ln.astype(jnp.float32),                           # packed gamma/beta
    }


if __name__ == "__main__":
    # Small shapes consistent with the module: patch_count=4 -> B = 5 texts,
    # learnable_n scaled 40 -> 16, padded token length 32, hidden 768 -> 128,
    # FFN 3072 -> 256, 12 layers -> 2, head_dim 64 (BERT-like) -> 2 heads.
    patch_count = 4
    B = patch_count + 1
    learnable_n = 16
    L = 32
    D = 128
    F = 256
    num_layers = 2
    num_heads = 2

    key = jax.random.PRNGKey(0)
    k_prompt, k_embed, k_param = jax.random.split(key, 3)

    # learnable_prompts: nn.init.normal_ -> standard normal, one per text.
    prompts = jax.random.normal(k_prompt, (B, learnable_n, D), jnp.float32)
    # TODO(synk): BioBERT tokenizer + frozen embedding lookup have no Pallas
    # equivalent; random token embeddings stand in for their (B, L, D) output.
    embeds = jax.random.normal(k_embed, (B, L, D), jnp.float32)
    params = init_params(k_param, num_layers, D, F)

    # bf16 activations on the HBM side (halved DMA traffic); f32 math in-kernel.
    prompts_bf = prompts.astype(jnp.bfloat16)
    embeds_bf = embeds.astype(jnp.bfloat16)

    out = prompt_encode_pallas(prompts_bf, embeds_bf, params, num_heads)
    out = jax.block_until_ready(out)

    ref = prompt_encode_reference(prompts_bf, embeds_bf, params, num_heads)
    assert out.shape == (B, D)
    assert jnp.allclose(out, ref, rtol=2e-2, atol=2e-2), (out[0, :8], ref[0, :8])

    print("KERNEL_OK")
</pallas_src>

<mosaic_0001>
module attributes {stable_mosaic.version = 11 : i64} {
  func.func @encoder_kernel(%arg0: i32, %arg1: memref<1x16x128xbf16, #tpu.memory_space<vmem>>, %arg2: memref<1x32x128xbf16, #tpu.memory_space<vmem>>, %arg3: memref<2x128x384xbf16, #tpu.memory_space<vmem>>, %arg4: memref<2x1x384xf32, #tpu.memory_space<vmem>>, %arg5: memref<2x128x128xbf16, #tpu.memory_space<vmem>>, %arg6: memref<2x1x128xf32, #tpu.memory_space<vmem>>, %arg7: memref<2x128x256xbf16, #tpu.memory_space<vmem>>, %arg8: memref<2x1x256xf32, #tpu.memory_space<vmem>>, %arg9: memref<2x256x128xbf16, #tpu.memory_space<vmem>>, %arg10: memref<2x1x128xf32, #tpu.memory_space<vmem>>, %arg11: memref<2x4x128xf32, #tpu.memory_space<vmem>>, %arg12: memref<1x1x128xf32, #tpu.memory_space<vmem>>) attributes {dimension_semantics = [#tpu.dimension_semantics<parallel>], iteration_bounds = array<i64: 5>, scalar_prefetch = 0 : i64, scratch_operands = 0 : i64, tpu.core_type = #tpu.core_type<tc>, window_params = [{transform_indices = @transform_0, window_bounds = array<i64: 1, 16, 128>}, {transform_indices = @transform_1, window_bounds = array<i64: 1, 32, 128>}, {pipeline_mode = #tpu.pipeline_mode<synchronous>, transform_indices = @transform_2, window_bounds = array<i64: 2, 128, 384>}, {pipeline_mode = #tpu.pipeline_mode<synchronous>, transform_indices = @transform_3, window_bounds = array<i64: 2, 1, 384>}, {pipeline_mode = #tpu.pipeline_mode<synchronous>, transform_indices = @transform_4, window_bounds = array<i64: 2, 128, 128>}, {pipeline_mode = #tpu.pipeline_mode<synchronous>, transform_indices = @transform_5, window_bounds = array<i64: 2, 1, 128>}, {pipeline_mode = #tpu.pipeline_mode<synchronous>, transform_indices = @transform_6, window_bounds = array<i64: 2, 128, 256>}, {pipeline_mode = #tpu.pipeline_mode<synchronous>, transform_indices = @transform_7, window_bounds = array<i64: 2, 1, 256>}, {pipeline_mode = #tpu.pipeline_mode<synchronous>, transform_indices = @transform_8, window_bounds = array<i64: 2, 256, 128>}, {pipeline_mode = #tpu.pipeline_mode<synchronous>, transform_indices = @transform_9, window_bounds = array<i64: 2, 1, 128>}, {pipeline_mode = #tpu.pipeline_mode<synchronous>, transform_indices = @transform_10, window_bounds = array<i64: 2, 4, 128>}, {transform_indices = @transform_11, window_bounds = array<i64: 1, 1, 128>}]} {
    %c0 = arith.constant 0 : index
    %c0_0 = arith.constant 0 : index
    %c0_1 = arith.constant 0 : index
    %0 = vector.load %arg1[%c0, %c0_0, %c0_1] : memref<1x16x128xbf16, #tpu.memory_space<vmem>>, vector<1x16x128xbf16>
    %1 = vector.shape_cast %0 : vector<1x16x128xbf16> to vector<16x128xbf16>
    %2 = arith.extf %1 : vector<16x128xbf16> to vector<16x128xf32>
    %c0_2 = arith.constant 0 : index
    %c0_3 = arith.constant 0 : index
    %c0_4 = arith.constant 0 : index
    %3 = vector.load %arg2[%c0_2, %c0_3, %c0_4] : memref<1x32x128xbf16, #tpu.memory_space<vmem>>, vector<1x32x128xbf16>
    %4 = vector.shape_cast %3 : vector<1x32x128xbf16> to vector<32x128xbf16>
    %5 = arith.extf %4 : vector<32x128xbf16> to vector<32x128xf32>
    %6 = tpu.concatenate %2, %5 in 0 : vector<16x128xf32>, vector<32x128xf32> -> vector<48x128xf32>
    %c0_5 = arith.constant 0 : index
    %c0_6 = arith.constant 0 : index
    %c0_7 = arith.constant 0 : index
    %7 = vector.load %arg3[%c0_5, %c0_6, %c0_7] : memref<2x128x384xbf16, #tpu.memory_space<vmem>>, vector<1x128x384xbf16>
    %8 = vector.shape_cast %7 : vector<1x128x384xbf16> to vector<128x384xbf16>
    %9 = arith.truncf %6 : vector<48x128xf32> to vector<48x128xbf16>
    %cst = arith.constant dense<0.000000e+00> : vector<48x384xf32>
    %10 = tpu.matmul %9, %8, %cst {dimension_numbers = #tpu.dot_dimension_numbers<[1], [0], [0], [1], [0, 0, 1, 1], [], []>} : vector<48x128xbf16>, vector<128x384xbf16>, vector<48x384xf32> -> vector<48x384xf32>
    %c0_8 = arith.constant 0 : index
    %c0_9 = arith.constant 0 : index
    %c0_10 = arith.constant 0 : index
    %11 = vector.load %arg4[%c0_8, %c0_9, %c0_10] : memref<2x1x384xf32, #tpu.memory_space<vmem>>, vector<1x1x384xf32>
    %12 = vector.shape_cast %11 : vector<1x1x384xf32> to vector<1x384xf32>
    %13 = vector.broadcast %12 : vector<1x384xf32> to vector<48x384xf32>
    %14 = arith.addf %10, %13 : vector<48x384xf32>
    %15 = vector.extract_strided_slice %14 {offsets = [0, 0], sizes = [48, 128], strides = [1, 1]} : vector<48x384xf32> to vector<48x128xf32>
    %16 = vector.extract_strided_slice %14 {offsets = [0, 128], sizes = [48, 128], strides = [1, 1]} : vector<48x384xf32> to vector<48x128xf32>
    %17 = vector.extract_strided_slice %14 {offsets = [0, 256], sizes = [48, 128], strides = [1, 1]} : vector<48x384xf32> to vector<48x128xf32>
    %18 = vector.extract_strided_slice %15 {offsets = [0, 0], sizes = [48, 64], strides = [1, 1]} : vector<48x128xf32> to vector<48x64xf32>
    %19 = vector.extract_strided_slice %16 {offsets = [0, 0], sizes = [48, 64], strides = [1, 1]} : vector<48x128xf32> to vector<48x64xf32>
    %20 = vector.extract_strided_slice %17 {offsets = [0, 0], sizes = [48, 64], strides = [1, 1]} : vector<48x128xf32> to vector<48x64xf32>
    %cst_11 = arith.constant dense<0.000000e+00> : vector<48x48xf32>
    %21 = tpu.matmul %18, %19, %cst_11 {dimension_numbers = #tpu.dot_dimension_numbers<[1], [1], [0], [0], [0, 0, 1, 0], [], []>} : vector<48x64xf32>, vector<48x64xf32>, vector<48x48xf32> -> vector<48x48xf32>
    %cst_12 = arith.constant 1.250000e-01 : f32
    %22 = vector.broadcast %cst_12 : f32 to vector<48x48xf32>
    %23 = arith.mulf %21, %22 : vector<48x48xf32>
    %cst_13 = arith.constant dense<0xFF800000> : vector<48xf32>
    %24 = vector.multi_reduction <maximumf>, %23, %cst_13 [1] : vector<48x48xf32> to vector<48xf32>
    %25 = vector.shape_cast %24 : vector<48xf32> to vector<48x1xf32>
    %26 = vector.broadcast %25 : vector<48x1xf32> to vector<48x48xf32>
    %27 = arith.subf %23, %26 : vector<48x48xf32>
    %28 = math.exp %27 : vector<48x48xf32>
    %cst_14 = arith.constant dense<0.000000e+00> : vector<48xf32>
    %29 = vector.multi_reduction <add>, %28, %cst_14 [1] : vector<48x48xf32> to vector<48xf32>
    %30 = vector.shape_cast %29 : vector<48xf32> to vector<48x1xf32>
    %31 = tpu.reciprocal %30 {approx = true} : vector<48x1xf32> -> vector<48x1xf32>
    %32 = vector.broadcast %31 : vector<48x1xf32> to vector<48x48xf32>
    %33 = arith.mulf %28, %32 : vector<48x48xf32>
    %cst_15 = arith.constant dense<0.000000e+00> : vector<48x64xf32>
    %34 = tpu.matmul %33, %20, %cst_15 {dimension_numbers = #tpu.dot_dimension_numbers<[1], [0], [0], [1], [0, 0, 1, 1], [], []>} : vector<48x48xf32>, vector<48x64xf32>, vector<48x64xf32> -> vector<48x64xf32>
    %35 = vector.extract_strided_slice %15 {offsets = [0, 64], sizes = [48, 64], strides = [1, 1]} : vector<48x128xf32> to vector<48x64xf32>
    %36 = vector.extract_strided_slice %16 {offsets = [0, 64], sizes = [48, 64], strides = [1, 1]} : vector<48x128xf32> to vector<48x64xf32>
    %37 = vector.extract_strided_slice %17 {offsets = [0, 64], sizes = [48, 64], strides = [1, 1]} : vector<48x128xf32> to vector<48x64xf32>
    %cst_16 = arith.constant dense<0.000000e+00> : vector<48x48xf32>
    %38 = tpu.matmul %35, %36, %cst_16 {dimension_numbers = #tpu.dot_dimension_numbers<[1], [1], [0], [0], [0, 0, 1, 0], [], []>} : vector<48x64xf32>, vector<48x64xf32>, vector<48x48xf32> -> vector<48x48xf32>
    %cst_17 = arith.constant 1.250000e-01 : f32
    %39 = vector.broadcast %cst_17 : f32 to vector<48x48xf32>
    %40 = arith.mulf %38, %39 : vector<48x48xf32>
    %cst_18 = arith.constant dense<0xFF800000> : vector<48xf32>
    %41 = vector.multi_reduction <maximumf>, %40, %cst_18 [1] : vector<48x48xf32> to vector<48xf32>
    %42 = vector.shape_cast %41 : vector<48xf32> to vector<48x1xf32>
    %43 = vector.broadcast %42 : vector<48x1xf32> to vector<48x48xf32>
    %44 = arith.subf %40, %43 : vector<48x48xf32>
    %45 = math.exp %44 : vector<48x48xf32>
    %cst_19 = arith.constant dense<0.000000e+00> : vector<48xf32>
    %46 = vector.multi_reduction <add>, %45, %cst_19 [1] : vector<48x48xf32> to vector<48xf32>
    %47 = vector.shape_cast %46 : vector<48xf32> to vector<48x1xf32>
    %48 = tpu.reciprocal %47 {approx = true} : vector<48x1xf32> -> vector<48x1xf32>
    %49 = vector.broadcast %48 : vector<48x1xf32> to vector<48x48xf32>
    %50 = arith.mulf %45, %49 : vector<48x48xf32>
    %cst_20 = arith.constant dense<0.000000e+00> : vector<48x64xf32>
    %51 = tpu.matmul %50, %37, %cst_20 {dimension_numbers = #tpu.dot_dimension_numbers<[1], [0], [0], [1], [0, 0, 1, 1], [], []>} : vector<48x48xf32>, vector<48x64xf32>, vector<48x64xf32> -> vector<48x64xf32>
    %52 = tpu.concatenate %34, %51 in 1 : vector<48x64xf32>, vector<48x64xf32> -> vector<48x128xf32>
    %c0_21 = arith.constant 0 : index
    %c0_22 = arith.constant 0 : index
    %c0_23 = arith.constant 0 : index
    %53 = vector.load %arg5[%c0_21, %c0_22, %c0_23] : memref<2x128x128xbf16, #tpu.memory_space<vmem>>, vector<1x128x128xbf16>
    %54 = vector.shape_cast %53 : vector<1x128x128xbf16> to vector<128x128xbf16>
    %55 = arith.truncf %52 : vector<48x128xf32> to vector<48x128xbf16>
    %cst_24 = arith.constant dense<0.000000e+00> : vector<48x128xf32>
    %56 = tpu.matmul %55, %54, %cst_24 {dimension_numbers = #tpu.dot_dimension_numbers<[1], [0], [0], [1], [0, 0, 1, 1], [], []>} : vector<48x128xbf16>, vector<128x128xbf16>, vector<48x128xf32> -> vector<48x128xf32>
    %c0_25 = arith.constant 0 : index
    %c0_26 = arith.constant 0 : index
    %c0_27 = arith.constant 0 : index
    %57 = vector.load %arg6[%c0_25, %c0_26, %c0_27] : memref<2x1x128xf32, #tpu.memory_space<vmem>>, vector<1x1x128xf32>
    %58 = vector.shape_cast %57 : vector<1x1x128xf32> to vector<1x128xf32>
    %59 = vector.broadcast %58 : vector<1x128xf32> to vector<48x128xf32>
    %60 = arith.addf %56, %59 : vector<48x128xf32>
    %c0_28 = arith.constant 0 : index
    %c0_29 = arith.constant 0 : index
    %c0_30 = arith.constant 0 : index
    %61 = vector.load %arg11[%c0_28, %c0_29, %c0_30] : memref<2x4x128xf32, #tpu.memory_space<vmem>>, vector<1x4x128xf32>
    %62 = vector.shape_cast %61 : vector<1x4x128xf32> to vector<4x128xf32>
    %63 = arith.addf %6, %60 : vector<48x128xf32>
    %64 = vector.extract_strided_slice %62 {offsets = [0, 0], sizes = [1, 128], strides = [1, 1]} : vector<4x128xf32> to vector<1x128xf32>
    %65 = vector.extract_strided_slice %62 {offsets = [1, 0], sizes = [1, 128], strides = [1, 1]} : vector<4x128xf32> to vector<1x128xf32>
    %cst_31 = arith.constant dense<0.000000e+00> : vector<48xf32>
    %66 = vector.multi_reduction <add>, %63, %cst_31 [1] : vector<48x128xf32> to vector<48xf32>
    %67 = vector.shape_cast %66 : vector<48xf32> to vector<48x1xf32>
    %cst_32 = arith.constant 1.280000e+02 : f32
    %68 = vector.broadcast %cst_32 : f32 to vector<48x1xf32>
    %69 = arith.divf %67, %68 : vector<48x1xf32>
    %70 = vector.broadcast %69 : vector<48x1xf32> to vector<48x128xf32>
    %71 = arith.subf %63, %70 : vector<48x128xf32>
    %72 = arith.mulf %71, %71 : vector<48x128xf32>
    %cst_33 = arith.constant dense<0.000000e+00> : vector<48xf32>
    %73 = vector.multi_reduction <add>, %72, %cst_33 [1] : vector<48x128xf32> to vector<48xf32>
    %74 = vector.shape_cast %73 : vector<48xf32> to vector<48x1xf32>
    %cst_34 = arith.constant 1.280000e+02 : f32
    %75 = vector.broadcast %cst_34 : f32 to vector<48x1xf32>
    %76 = arith.divf %74, %75 : vector<48x1xf32>
    %77 = vector.broadcast %69 : vector<48x1xf32> to vector<48x128xf32>
    %78 = arith.subf %63, %77 : vector<48x128xf32>
    %cst_35 = arith.constant 9.99999996E-13 : f32
    %79 = vector.broadcast %cst_35 : f32 to vector<48x1xf32>
    %80 = arith.addf %76, %79 : vector<48x1xf32>
    %81 = math.rsqrt %80 : vector<48x1xf32>
    %82 = vector.broadcast %81 : vector<48x1xf32> to vector<48x128xf32>
    %83 = arith.mulf %78, %82 : vector<48x128xf32>
    %84 = vector.broadcast %64 : vector<1x128xf32> to vector<48x128xf32>
    %85 = arith.mulf %83, %84 : vector<48x128xf32>
    %86 = vector.broadcast %65 : vector<1x128xf32> to vector<48x128xf32>
    %87 = arith.addf %85, %86 : vector<48x128xf32>
    %c0_36 = arith.constant 0 : index
    %c0_37 = arith.constant 0 : index
    %c0_38 = arith.constant 0 : index
    %88 = vector.load %arg7[%c0_36, %c0_37, %c0_38] : memref<2x128x256xbf16, #tpu.memory_space<vmem>>, vector<1x128x256xbf16>
    %89 = vector.shape_cast %88 : vector<1x128x256xbf16> to vector<128x256xbf16>
    %90 = arith.truncf %87 : vector<48x128xf32> to vector<48x128xbf16>
    %cst_39 = arith.constant dense<0.000000e+00> : vector<48x256xf32>
    %91 = tpu.matmul %90, %89, %cst_39 {dimension_numbers = #tpu.dot_dimension_numbers<[1], [0], [0], [1], [0, 0, 1, 1], [], []>} : vector<48x128xbf16>, vector<128x256xbf16>, vector<48x256xf32> -> vector<48x256xf32>
    %c0_40 = arith.constant 0 : index
    %c0_41 = arith.constant 0 : index
    %c0_42 = arith.constant 0 : index
    %92 = vector.load %arg8[%c0_40, %c0_41, %c0_42] : memref<2x1x256xf32, #tpu.memory_space<vmem>>, vector<1x1x256xf32>
    %93 = vector.shape_cast %92 : vector<1x1x256xf32> to vector<1x256xf32>
    %94 = vector.broadcast %93 : vector<1x256xf32> to vector<48x256xf32>
    %95 = arith.addf %91, %94 : vector<48x256xf32>
    %cst_43 = arith.constant 5.000000e-01 : f32
    %96 = vector.broadcast %cst_43 : f32 to vector<48x256xf32>
    %97 = arith.mulf %96, %95 : vector<48x256xf32>
    %cst_44 = arith.constant 4.471500e-02 : f32
    %98 = vector.broadcast %cst_44 : f32 to vector<48x256xf32>
    %99 = arith.mulf %98, %95 : vector<48x256xf32>
    %100 = arith.mulf %99, %95 : vector<48x256xf32>
    %101 = arith.mulf %100, %95 : vector<48x256xf32>
    %102 = arith.addf %95, %101 : vector<48x256xf32>
    %cst_45 = arith.constant 0.797884583 : f32
    %103 = vector.broadcast %cst_45 : f32 to vector<48x256xf32>
    %104 = arith.mulf %103, %102 : vector<48x256xf32>
    %105 = math.tanh %104 : vector<48x256xf32>
    %cst_46 = arith.constant 1.000000e+00 : f32
    %106 = vector.broadcast %cst_46 : f32 to vector<48x256xf32>
    %107 = arith.addf %106, %105 : vector<48x256xf32>
    %108 = arith.mulf %97, %107 : vector<48x256xf32>
    %c0_47 = arith.constant 0 : index
    %c0_48 = arith.constant 0 : index
    %c0_49 = arith.constant 0 : index
    %109 = vector.load %arg9[%c0_47, %c0_48, %c0_49] : memref<2x256x128xbf16, #tpu.memory_space<vmem>>, vector<1x256x128xbf16>
    %110 = vector.shape_cast %109 : vector<1x256x128xbf16> to vector<256x128xbf16>
    %111 = arith.truncf %108 : vector<48x256xf32> to vector<48x256xbf16>
    %cst_50 = arith.constant dense<0.000000e+00> : vector<48x128xf32>
    %112 = tpu.matmul %111, %110, %cst_50 {dimension_numbers = #tpu.dot_dimension_numbers<[1], [0], [0], [1], [0, 0, 1, 1], [], []>} : vector<48x256xbf16>, vector<256x128xbf16>, vector<48x128xf32> -> vector<48x128xf32>
    %c0_51 = arith.constant 0 : index
    %c0_52 = arith.constant 0 : index
    %c0_53 = arith.constant 0 : index
    %113 = vector.load %arg10[%c0_51, %c0_52, %c0_53] : memref<2x1x128xf32, #tpu.memory_space<vmem>>, vector<1x1x128xf32>
    %114 = vector.shape_cast %113 : vector<1x1x128xf32> to vector<1x128xf32>
    %115 = vector.broadcast %114 : vector<1x128xf32> to vector<48x128xf32>
    %116 = arith.addf %112, %115 : vector<48x128xf32>
    %117 = arith.addf %87, %116 : vector<48x128xf32>
    %118 = vector.extract_strided_slice %62 {offsets = [2, 0], sizes = [1, 128], strides = [1, 1]} : vector<4x128xf32> to vector<1x128xf32>
    %119 = vector.extract_strided_slice %62 {offsets = [3, 0], sizes = [1, 128], strides = [1, 1]} : vector<4x128xf32> to vector<1x128xf32>
    %cst_54 = arith.constant dense<0.000000e+00> : vector<48xf32>
    %120 = vector.multi_reduction <add>, %117, %cst_54 [1] : vector<48x128xf32> to vector<48xf32>
    %121 = vector.shape_cast %120 : vector<48xf32> to vector<48x1xf32>
    %cst_55 = arith.constant 1.280000e+02 : f32
    %122 = vector.broadcast %cst_55 : f32 to vector<48x1xf32>
    %123 = arith.divf %121, %122 : vector<48x1xf32>
    %124 = vector.broadcast %123 : vector<48x1xf32> to vector<48x128xf32>
    %125 = arith.subf %117, %124 : vector<48x128xf32>
    %126 = arith.mulf %125, %125 : vector<48x128xf32>
    %cst_56 = arith.constant dense<0.000000e+00> : vector<48xf32>
    %127 = vector.multi_reduction <add>, %126, %cst_56 [1] : vector<48x128xf32> to vector<48xf32>
    %128 = vector.shape_cast %127 : vector<48xf32> to vector<48x1xf32>
    %cst_57 = arith.constant 1.280000e+02 : f32
    %129 = vector.broadcast %cst_57 : f32 to vector<48x1xf32>
    %130 = arith.divf %128, %129 : vector<48x1xf32>
    %131 = vector.broadcast %123 : vector<48x1xf32> to vector<48x128xf32>
    %132 = arith.subf %117, %131 : vector<48x128xf32>
    %cst_58 = arith.constant 9.99999996E-13 : f32
    %133 = vector.broadcast %cst_58 : f32 to vector<48x1xf32>
    %134 = arith.addf %130, %133 : vector<48x1xf32>
    %135 = math.rsqrt %134 : vector<48x1xf32>
    %136 = vector.broadcast %135 : vector<48x1xf32> to vector<48x128xf32>
    %137 = arith.mulf %132, %136 : vector<48x128xf32>
    %138 = vector.broadcast %118 : vector<1x128xf32> to vector<48x128xf32>
    %139 = arith.mulf %137, %138 : vector<48x128xf32>
    %140 = vector.broadcast %119 : vector<1x128xf32> to vector<48x128xf32>
    %141 = arith.addf %139, %140 : vector<48x128xf32>
    %c1 = arith.constant 1 : index
    %c0_59 = arith.constant 0 : index
    %c0_60 = arith.constant 0 : index
    %142 = vector.load %arg3[%c1, %c0_59, %c0_60] : memref<2x128x384xbf16, #tpu.memory_space<vmem>>, vector<1x128x384xbf16>
    %143 = vector.shape_cast %142 : vector<1x128x384xbf16> to vector<128x384xbf16>
    %144 = arith.truncf %141 : vector<48x128xf32> to vector<48x128xbf16>
    %cst_61 = arith.constant dense<0.000000e+00> : vector<48x384xf32>
    %145 = tpu.matmul %144, %143, %cst_61 {dimension_numbers = #tpu.dot_dimension_numbers<[1], [0], [0], [1], [0, 0, 1, 1], [], []>} : vector<48x128xbf16>, vector<128x384xbf16>, vector<48x384xf32> -> vector<48x384xf32>
    %c1_62 = arith.constant 1 : index
    %c0_63 = arith.constant 0 : index
    %c0_64 = arith.constant 0 : index
    %146 = vector.load %arg4[%c1_62, %c0_63, %c0_64] : memref<2x1x384xf32, #tpu.memory_space<vmem>>, vector<1x1x384xf32>
    %147 = vector.shape_cast %146 : vector<1x1x384xf32> to vector<1x384xf32>
    %148 = vector.broadcast %147 : vector<1x384xf32> to vector<48x384xf32>
    %149 = arith.addf %145, %148 : vector<48x384xf32>
    %150 = vector.extract_strided_slice %149 {offsets = [0, 0], sizes = [48, 128], strides = [1, 1]} : vector<48x384xf32> to vector<48x128xf32>
    %151 = vector.extract_strided_slice %149 {offsets = [0, 128], sizes = [48, 128], strides = [1, 1]} : vector<48x384xf32> to vector<48x128xf32>
    %152 = vector.extract_strided_slice %149 {offsets = [0, 256], sizes = [48, 128], strides = [1, 1]} : vector<48x384xf32> to vector<48x128xf32>
    %153 = vector.extract_strided_slice %150 {offsets = [0, 0], sizes = [48, 64], strides = [1, 1]} : vector<48x128xf32> to vector<48x64xf32>
    %154 = vector.extract_strided_slice %151 {offsets = [0, 0], sizes = [48, 64], strides = [1, 1]} : vector<48x128xf32> to vector<48x64xf32>
    %155 = vector.extract_strided_slice %152 {offsets = [0, 0], sizes = [48, 64], strides = [1, 1]} : vector<48x128xf32> to vector<48x64xf32>
    %cst_65 = arith.constant dense<0.000000e+00> : vector<48x48xf32>
    %156 = tpu.matmul %153, %154, %cst_65 {dimension_numbers = #tpu.dot_dimension_numbers<[1], [1], [0], [0], [0, 0, 1, 0], [], []>} : vector<48x64xf32>, vector<48x64xf32>, vector<48x48xf32> -> vector<48x48xf32>
    %cst_66 = arith.constant 1.250000e-01 : f32
    %157 = vector.broadcast %cst_66 : f32 to vector<48x48xf32>
    %158 = arith.mulf %156, %157 : vector<48x48xf32>
    %cst_67 = arith.constant dense<0xFF800000> : vector<48xf32>
    %159 = vector.multi_reduction <maximumf>, %158, %cst_67 [1] : vector<48x48xf32> to vector<48xf32>
    %160 = vector.shape_cast %159 : vector<48xf32> to vector<48x1xf32>
    %161 = vector.broadcast %160 : vector<48x1xf32> to vector<48x48xf32>
    %162 = arith.subf %158, %161 : vector<48x48xf32>
    %163 = math.exp %162 : vector<48x48xf32>
    %cst_68 = arith.constant dense<0.000000e+00> : vector<48xf32>
    %164 = vector.multi_reduction <add>, %163, %cst_68 [1] : vector<48x48xf32> to vector<48xf32>
    %165 = vector.shape_cast %164 : vector<48xf32> to vector<48x1xf32>
    %166 = tpu.reciprocal %165 {approx = true} : vector<48x1xf32> -> vector<48x1xf32>
    %167 = vector.broadcast %166 : vector<48x1xf32> to vector<48x48xf32>
    %168 = arith.mulf %163, %167 : vector<48x48xf32>
    %cst_69 = arith.constant dense<0.000000e+00> : vector<48x64xf32>
    %169 = tpu.matmul %168, %155, %cst_69 {dimension_numbers = #tpu.dot_dimension_numbers<[1], [0], [0], [1], [0, 0, 1, 1], [], []>} : vector<48x48xf32>, vector<48x64xf32>, vector<48x64xf32> -> vector<48x64xf32>
    %170 = vector.extract_strided_slice %150 {offsets = [0, 64], sizes = [48, 64], strides = [1, 1]} : vector<48x128xf32> to vector<48x64xf32>
    %171 = vector.extract_strided_slice %151 {offsets = [0, 64], sizes = [48, 64], strides = [1, 1]} : vector<48x128xf32> to vector<48x64xf32>
    %172 = vector.extract_strided_slice %152 {offsets = [0, 64], sizes = [48, 64], strides = [1, 1]} : vector<48x128xf32> to vector<48x64xf32>
    %cst_70 = arith.constant dense<0.000000e+00> : vector<48x48xf32>
    %173 = tpu.matmul %170, %171, %cst_70 {dimension_numbers = #tpu.dot_dimension_numbers<[1], [1], [0], [0], [0, 0, 1, 0], [], []>} : vector<48x64xf32>, vector<48x64xf32>, vector<48x48xf32> -> vector<48x48xf32>
    %cst_71 = arith.constant 1.250000e-01 : f32
    %174 = vector.broadcast %cst_71 : f32 to vector<48x48xf32>
    %175 = arith.mulf %173, %174 : vector<48x48xf32>
    %cst_72 = arith.constant dense<0xFF800000> : vector<48xf32>
    %176 = vector.multi_reduction <maximumf>, %175, %cst_72 [1] : vector<48x48xf32> to vector<48xf32>
    %177 = vector.shape_cast %176 : vector<48xf32> to vector<48x1xf32>
    %178 = vector.broadcast %177 : vector<48x1xf32> to vector<48x48xf32>
    %179 = arith.subf %175, %178 : vector<48x48xf32>
    %180 = math.exp %179 : vector<48x48xf32>
    %cst_73 = arith.constant dense<0.000000e+00> : vector<48xf32>
    %181 = vector.multi_reduction <add>, %180, %cst_73 [1] : vector<48x48xf32> to vector<48xf32>
    %182 = vector.shape_cast %181 : vector<48xf32> to vector<48x1xf32>
    %183 = tpu.reciprocal %182 {approx = true} : vector<48x1xf32> -> vector<48x1xf32>
    %184 = vector.broadcast %183 : vector<48x1xf32> to vector<48x48xf32>
    %185 = arith.mulf %180, %184 : vector<48x48xf32>
    %cst_74 = arith.constant dense<0.000000e+00> : vector<48x64xf32>
    %186 = tpu.matmul %185, %172, %cst_74 {dimension_numbers = #tpu.dot_dimension_numbers<[1], [0], [0], [1], [0, 0, 1, 1], [], []>} : vector<48x48xf32>, vector<48x64xf32>, vector<48x64xf32> -> vector<48x64xf32>
    %187 = tpu.concatenate %169, %186 in 1 : vector<48x64xf32>, vector<48x64xf32> -> vector<48x128xf32>
    %c1_75 = arith.constant 1 : index
    %c0_76 = arith.constant 0 : index
    %c0_77 = arith.constant 0 : index
    %188 = vector.load %arg5[%c1_75, %c0_76, %c0_77] : memref<2x128x128xbf16, #tpu.memory_space<vmem>>, vector<1x128x128xbf16>
    %189 = vector.shape_cast %188 : vector<1x128x128xbf16> to vector<128x128xbf16>
    %190 = arith.truncf %187 : vector<48x128xf32> to vector<48x128xbf16>
    %cst_78 = arith.constant dense<0.000000e+00> : vector<48x128xf32>
    %191 = tpu.matmul %190, %189, %cst_78 {dimension_numbers = #tpu.dot_dimension_numbers<[1], [0], [0], [1], [0, 0, 1, 1], [], []>} : vector<48x128xbf16>, vector<128x128xbf16>, vector<48x128xf32> -> vector<48x128xf32>
    %c1_79 = arith.constant 1 : index
    %c0_80 = arith.constant 0 : index
    %c0_81 = arith.constant 0 : index
    %192 = vector.load %arg6[%c1_79, %c0_80, %c0_81] : memref<2x1x128xf32, #tpu.memory_space<vmem>>, vector<1x1x128xf32>
    %193 = vector.shape_cast %192 : vector<1x1x128xf32> to vector<1x128xf32>
    %194 = vector.broadcast %193 : vector<1x128xf32> to vector<48x128xf32>
    %195 = arith.addf %191, %194 : vector<48x128xf32>
    %c1_82 = arith.constant 1 : index
    %c0_83 = arith.constant 0 : index
    %c0_84 = arith.constant 0 : index
    %196 = vector.load %arg11[%c1_82, %c0_83, %c0_84] : memref<2x4x128xf32, #tpu.memory_space<vmem>>, vector<1x4x128xf32>
    %197 = vector.shape_cast %196 : vector<1x4x128xf32> to vector<4x128xf32>
    %198 = arith.addf %141, %195 : vector<48x128xf32>
    %199 = vector.extract_strided_slice %197 {offsets = [0, 0], sizes = [1, 128], strides = [1, 1]} : vector<4x128xf32> to vector<1x128xf32>
    %200 = vector.extract_strided_slice %197 {offsets = [1, 0], sizes = [1, 128], strides = [1, 1]} : vector<4x128xf32> to vector<1x128xf32>
    %cst_85 = arith.constant dense<0.000000e+00> : vector<48xf32>
    %201 = vector.multi_reduction <add>, %198, %cst_85 [1] : vector<48x128xf32> to vector<48xf32>
    %202 = vector.shape_cast %201 : vector<48xf32> to vector<48x1xf32>
    %cst_86 = arith.constant 1.280000e+02 : f32
    %203 = vector.broadcast %cst_86 : f32 to vector<48x1xf32>
    %204 = arith.divf %202, %203 : vector<48x1xf32>
    %205 = vector.broadcast %204 : vector<48x1xf32> to vector<48x128xf32>
    %206 = arith.subf %198, %205 : vector<48x128xf32>
    %207 = arith.mulf %206, %206 : vector<48x128xf32>
    %cst_87 = arith.constant dense<0.000000e+00> : vector<48xf32>
    %208 = vector.multi_reduction <add>, %207, %cst_87 [1] : vector<48x128xf32> to vector<48xf32>
    %209 = vector.shape_cast %208 : vector<48xf32> to vector<48x1xf32>
    %cst_88 = arith.constant 1.280000e+02 : f32
    %210 = vector.broadcast %cst_88 : f32 to vector<48x1xf32>
    %211 = arith.divf %209, %210 : vector<48x1xf32>
    %212 = vector.broadcast %204 : vector<48x1xf32> to vector<48x128xf32>
    %213 = arith.subf %198, %212 : vector<48x128xf32>
    %cst_89 = arith.constant 9.99999996E-13 : f32
    %214 = vector.broadcast %cst_89 : f32 to vector<48x1xf32>
    %215 = arith.addf %211, %214 : vector<48x1xf32>
    %216 = math.rsqrt %215 : vector<48x1xf32>
    %217 = vector.broadcast %216 : vector<48x1xf32> to vector<48x128xf32>
    %218 = arith.mulf %213, %217 : vector<48x128xf32>
    %219 = vector.broadcast %199 : vector<1x128xf32> to vector<48x128xf32>
    %220 = arith.mulf %218, %219 : vector<48x128xf32>
    %221 = vector.broadcast %200 : vector<1x128xf32> to vector<48x128xf32>
    %222 = arith.addf %220, %221 : vector<48x128xf32>
    %c1_90 = arith.constant 1 : index
    %c0_91 = arith.constant 0 : index
    %c0_92 = arith.constant 0 : index
    %223 = vector.load %arg7[%c1_90, %c0_91, %c0_92] : memref<2x128x256xbf16, #tpu.memory_space<vmem>>, vector<1x128x256xbf16>
    %224 = vector.shape_cast %223 : vector<1x128x256xbf16> to vector<128x256xbf16>
    %225 = arith.truncf %222 : vector<48x128xf32> to vector<48x128xbf16>
    %cst_93 = arith.constant dense<0.000000e+00> : vector<48x256xf32>
    %226 = tpu.matmul %225, %224, %cst_93 {dimension_numbers = #tpu.dot_dimension_numbers<[1], [0], [0], [1], [0, 0, 1, 1], [], []>} : vector<48x128xbf16>, vector<128x256xbf16>, vector<48x256xf32> -> vector<48x256xf32>
    %c1_94 = arith.constant 1 : index
    %c0_95 = arith.constant 0 : index
    %c0_96 = arith.constant 0 : index
    %227 = vector.load %arg8[%c1_94, %c0_95, %c0_96] : memref<2x1x256xf32, #tpu.memory_space<vmem>>, vector<1x1x256xf32>
    %228 = vector.shape_cast %227 : vector<1x1x256xf32> to vector<1x256xf32>
    %229 = vector.broadcast %228 : vector<1x256xf32> to vector<48x256xf32>
    %230 = arith.addf %226, %229 : vector<48x256xf32>
    %cst_97 = arith.constant 5.000000e-01 : f32
    %231 = vector.broadcast %cst_97 : f32 to vector<48x256xf32>
    %232 = arith.mulf %231, %230 : vector<48x256xf32>
    %cst_98 = arith.constant 4.471500e-02 : f32
    %233 = vector.broadcast %cst_98 : f32 to vector<48x256xf32>
    %234 = arith.mulf %233, %230 : vector<48x256xf32>
    %235 = arith.mulf %234, %230 : vector<48x256xf32>
    %236 = arith.mulf %235, %230 : vector<48x256xf32>
    %237 = arith.addf %230, %236 : vector<48x256xf32>
    %cst_99 = arith.constant 0.797884583 : f32
    %238 = vector.broadcast %cst_99 : f32 to vector<48x256xf32>
    %239 = arith.mulf %238, %237 : vector<48x256xf32>
    %240 = math.tanh %239 : vector<48x256xf32>
    %cst_100 = arith.constant 1.000000e+00 : f32
    %241 = vector.broadcast %cst_100 : f32 to vector<48x256xf32>
    %242 = arith.addf %241, %240 : vector<48x256xf32>
    %243 = arith.mulf %232, %242 : vector<48x256xf32>
    %c1_101 = arith.constant 1 : index
    %c0_102 = arith.constant 0 : index
    %c0_103 = arith.constant 0 : index
    %244 = vector.load %arg9[%c1_101, %c0_102, %c0_103] : memref<2x256x128xbf16, #tpu.memory_space<vmem>>, vector<1x256x128xbf16>
    %245 = vector.shape_cast %244 : vector<1x256x128xbf16> to vector<256x128xbf16>
    %246 = arith.truncf %243 : vector<48x256xf32> to vector<48x256xbf16>
    %cst_104 = arith.constant dense<0.000000e+00> : vector<48x128xf32>
    %247 = tpu.matmul %246, %245, %cst_104 {dimension_numbers = #tpu.dot_dimension_numbers<[1], [0], [0], [1], [0, 0, 1, 1], [], []>} : vector<48x256xbf16>, vector<256x128xbf16>, vector<48x128xf32> -> vector<48x128xf32>
    %c1_105 = arith.constant 1 : index
    %c0_106 = arith.constant 0 : index
    %c0_107 = arith.constant 0 : index
    %248 = vector.load %arg10[%c1_105, %c0_106, %c0_107] : memref<2x1x128xf32, #tpu.memory_space<vmem>>, vector<1x1x128xf32>
    %249 = vector.shape_cast %248 : vector<1x1x128xf32> to vector<1x128xf32>
    %250 = vector.broadcast %249 : vector<1x128xf32> to vector<48x128xf32>
    %251 = arith.addf %247, %250 : vector<48x128xf32>
    %252 = arith.addf %222, %251 : vector<48x128xf32>
    %253 = vector.extract_strided_slice %197 {offsets = [2, 0], sizes = [1, 128], strides = [1, 1]} : vector<4x128xf32> to vector<1x128xf32>
    %254 = vector.extract_strided_slice %197 {offsets = [3, 0], sizes = [1, 128], strides = [1, 1]} : vector<4x128xf32> to vector<1x128xf32>
    %cst_108 = arith.constant dense<0.000000e+00> : vector<48xf32>
    %255 = vector.multi_reduction <add>, %252, %cst_108 [1] : vector<48x128xf32> to vector<48xf32>
    %256 = vector.shape_cast %255 : vector<48xf32> to vector<48x1xf32>
    %cst_109 = arith.constant 1.280000e+02 : f32
    %257 = vector.broadcast %cst_109 : f32 to vector<48x1xf32>
    %258 = arith.divf %256, %257 : vector<48x1xf32>
    %259 = vector.broadcast %258 : vector<48x1xf32> to vector<48x128xf32>
    %260 = arith.subf %252, %259 : vector<48x128xf32>
    %261 = arith.mulf %260, %260 : vector<48x128xf32>
    %cst_110 = arith.constant dense<0.000000e+00> : vector<48xf32>
    %262 = vector.multi_reduction <add>, %261, %cst_110 [1] : vector<48x128xf32> to vector<48xf32>
    %263 = vector.shape_cast %262 : vector<48xf32> to vector<48x1xf32>
    %cst_111 = arith.constant 1.280000e+02 : f32
    %264 = vector.broadcast %cst_111 : f32 to vector<48x1xf32>
    %265 = arith.divf %263, %264 : vector<48x1xf32>
    %266 = vector.broadcast %258 : vector<48x1xf32> to vector<48x128xf32>
    %267 = arith.subf %252, %266 : vector<48x128xf32>
    %cst_112 = arith.constant 9.99999996E-13 : f32
    %268 = vector.broadcast %cst_112 : f32 to vector<48x1xf32>
    %269 = arith.addf %265, %268 : vector<48x1xf32>
    %270 = math.rsqrt %269 : vector<48x1xf32>
    %271 = vector.broadcast %270 : vector<48x1xf32> to vector<48x128xf32>
    %272 = arith.mulf %267, %271 : vector<48x128xf32>
    %273 = vector.broadcast %253 : vector<1x128xf32> to vector<48x128xf32>
    %274 = arith.mulf %272, %273 : vector<48x128xf32>
    %275 = vector.broadcast %254 : vector<1x128xf32> to vector<48x128xf32>
    %276 = arith.addf %274, %275 : vector<48x128xf32>
    %277 = vector.extract_strided_slice %276 {offsets = [0, 0], sizes = [1, 128], strides = [1, 1]} : vector<48x128xf32> to vector<1x128xf32>
    %c0_113 = arith.constant 0 : index
    %c0_114 = arith.constant 0 : index
    %c0_115 = arith.constant 0 : index
    %278 = vector.load %arg12[%c0_113, %c0_114, %c0_115] : memref<1x1x128xf32, #tpu.memory_space<vmem>>, vector<1x1x128xf32>
    %279 = vector.shape_cast %278 : vector<1x1x128xf32> to vector<1x128xf32>
    %280 = vector.shape_cast %277 : vector<1x128xf32> to vector<1x1x128xf32>
    tpu.vector_store %arg12[%c0_113, %c0_114, %c0_115], %280 {strides = array<i32>} : memref<1x1x128xf32, #tpu.memory_space<vmem>>, vector<1x1x128xf32>,
    return
  }
  func.func @transform_0(%arg0: i32) -> (i32, i32, i32) {
    %c0_i32 = arith.constant 0 : i32
    %c0_i32_0 = arith.constant 0 : i32
    %c0_i32_1 = arith.constant 0 : i32
    return %arg0, %c0_i32, %c0_i32_0 : i32, i32, i32
  }
  func.func @transform_1(%arg0: i32) -> (i32, i32, i32) {
    %c0_i32 = arith.constant 0 : i32
    %c0_i32_0 = arith.constant 0 : i32
    %c0_i32_1 = arith.constant 0 : i32
    return %arg0, %c0_i32, %c0_i32_0 : i32, i32, i32
  }
  func.func @transform_2(%arg0: i32) -> (i32, i32, i32) {
    %c0_i32 = arith.constant 0 : i32
    %c0_i32_0 = arith.constant 0 : i32
    %c0_i32_1 = arith.constant 0 : i32
    %c0_i32_2 = arith.constant 0 : i32
    return %c0_i32, %c0_i32_0, %c0_i32_1 : i32, i32, i32
  }
  func.func @transform_3(%arg0: i32) -> (i32, i32, i32) {
    %c0_i32 = arith.constant 0 : i32
    %c0_i32_0 = arith.constant 0 : i32
    %c0_i32_1 = arith.constant 0 : i32
    %c0_i32_2 = arith.constant 0 : i32
    return %c0_i32, %c0_i32_0, %c0_i32_1 : i32, i32, i32
  }
  func.func @transform_4(%arg0: i32) -> (i32, i32, i32) {
    %c0_i32 = arith.constant 0 : i32
    %c0_i32_0 = arith.constant 0 : i32
    %c0_i32_1 = arith.constant 0 : i32
    %c0_i32_2 = arith.constant 0 : i32
    return %c0_i32, %c0_i32_0, %c0_i32_1 : i32, i32, i32
  }
  func.func @transform_5(%arg0: i32) -> (i32, i32, i32) {
    %c0_i32 = arith.constant 0 : i32
    %c0_i32_0 = arith.constant 0 : i32
    %c0_i32_1 = arith.constant 0 : i32
    %c0_i32_2 = arith.constant 0 : i32
    return %c0_i32, %c0_i32_0, %c0_i32_1 : i32, i32, i32
  }
  func.func @transform_6(%arg0: i32) -> (i32, i32, i32) {
    %c0_i32 = arith.constant 0 : i32
    %c0_i32_0 = arith.constant 0 : i32
    %c0_i32_1 = arith.constant 0 : i32
    %c0_i32_2 = arith.constant 0 : i32
    return %c0_i32, %c0_i32_0, %c0_i32_1 : i32, i32, i32
  }
  func.func @transform_7(%arg0: i32) -> (i32, i32, i32) {
    %c0_i32 = arith.constant 0 : i32
    %c0_i32_0 = arith.constant 0 : i32
    %c0_i32_1 = arith.constant 0 : i32
    %c0_i32_2 = arith.constant 0 : i32
    return %c0_i32, %c0_i32_0, %c0_i32_1 : i32, i32, i32
  }
  func.func @transform_8(%arg0: i32) -> (i32, i32, i32) {
    %c0_i32 = arith.constant 0 : i32
    %c0_i32_0 = arith.constant 0 : i32
    %c0_i32_1 = arith.constant 0 : i32
    %c0_i32_2 = arith.constant 0 : i32
    return %c0_i32, %c0_i32_0, %c0_i32_1 : i32, i32, i32
  }
  func.func @transform_9(%arg0: i32) -> (i32, i32, i32) {
    %c0_i32 = arith.constant 0 : i32
    %c0_i32_0 = arith.constant 0 : i32
    %c0_i32_1 = arith.constant 0 : i32
    %c0_i32_2 = arith.constant 0 : i32
    return %c0_i32, %c0_i32_0, %c0_i32_1 : i32, i32, i32
  }
  func.func @transform_10(%arg0: i32) -> (i32, i32, i32) {
    %c0_i32 = arith.constant 0 : i32
    %c0_i32_0 = arith.constant 0 : i32
    %c0_i32_1 = arith.constant 0 : i32
    %c0_i32_2 = arith.constant 0 : i32
    return %c0_i32, %c0_i32_0, %c0_i32_1 : i32, i32, i32
  }
  func.func @transform_11(%arg0: i32) -> (i32, i32, i32) {
    %c0_i32 = arith.constant 0 : i32
    %c0_i32_0 = arith.constant 0 : i32
    %c0_i32_1 = arith.constant 0 : i32
    return %arg0, %c0_i32, %c0_i32_0 : i32, i32, i32
  }
}

</mosaic_0001>

<llo_original>
// kernel: tpu_custom_call.1
$region0: #{tpu_custom_call.1}
  #allocation0 [shape = 'u32[]', space=smem, size = 0x4, offset = 0x4, fixed_abs, tag = 'smem constant byte address 0x4 - core index']
  #allocation1 [shape = 'u32[144,128]{1,0:T(1,128)}', space=vmem, size = 0x12000, scoped, tag = 'internal scratch']
  %s0 = inlined_call_operand.hbm [shape: bf16[5,16,128], index: 0, kind: input, shape index: {}]
  %s1 = inlined_call_operand.hbm [shape: bf16[5,32,128], index: 1, kind: input, shape index: {}]
  %s2 = inlined_call_operand.hbm [shape: bf16[2,128,384], index: 2, kind: input, shape index: {}]
  %s3 = inlined_call_operand.hbm [shape: f32[2,1,384], index: 3, kind: input, shape index: {}]
  %s4 = inlined_call_operand.hbm [shape: bf16[2,128,128], index: 4, kind: input, shape index: {}]
  %s5 = inlined_call_operand.hbm [shape: f32[2,1,128], index: 5, kind: input, shape index: {}]
  %s6 = inlined_call_operand.hbm [shape: bf16[2,128,256], index: 6, kind: input, shape index: {}]
  %s7 = inlined_call_operand.hbm [shape: f32[2,1,256], index: 7, kind: input, shape index: {}]
  %s8 = inlined_call_operand.hbm [shape: bf16[2,256,128], index: 8, kind: input, shape index: {}]
  %s9 = inlined_call_operand.hbm [shape: f32[2,1,128], index: 9, kind: input, shape index: {}]
  %s10 = inlined_call_operand.hbm [shape: f32[2,4,128], index: 10, kind: input, shape index: {}]
  %s11 = inlined_call_operand.hbm [shape: f32[5,1,128], index: 11, kind: output, shape index: {}]
  %s12 = sld [smem:[#allocation0]]
  $region121: #{tpu_custom_call.1} parent=0
    _
  %s14 = ssub.s32 1, %s12
  %s15 = scalar_select 0, %s14, %s12
  $region1: #{tpu_custom_call.1} parent=0
    #allocation2 [shape = 'u8[8192]{0}', space=vmem, size = 0x2000, scoped, tag = 'input window, operand 0']
    #allocation3 [shape = 's32[2]{0}', space=sflag, size = 0x8, scoped, tag = 'scoped memory for tpu_custom_call.1']
    #allocation4 [shape = 's32[2]{0}', space=sflag, size = 0x8, scoped, tag = 'scoped memory for tpu_custom_call.1']
    #allocation5 [shape = 'u8[16384]{0}', space=vmem, size = 0x4000, scoped, tag = 'input window, operand 1']
    #allocation6 [shape = 's32[2]{0}', space=sflag, size = 0x8, scoped, tag = 'scoped memory for tpu_custom_call.1']
    #allocation7 [shape = 'u8[196608]{0}', space=vmem, size = 0x30000, scoped, tag = 'input window, operand 2, single buffered']
    #allocation8 [shape = 'u8[3072]{0}', space=vmem, size = 0xc00, scoped, tag = 'input window, operand 3, single buffered']
    #allocation9 [shape = 's32[1]{0}', space=sflag, size = 0x4, scoped, tag = 'scoped memory for tpu_custom_call.1']
    #allocation10 [shape = 'u8[65536]{0}', space=vmem, size = 0x10000, scoped, tag = 'input window, operand 4, single buffered']
    #allocation11 [shape = 'u8[1024]{0}', space=vmem, size = 0x400, scoped, tag = 'input window, operand 5, single buffered']
    #allocation12 [shape = 's32[1]{0}', space=sflag, size = 0x4, scoped, tag = 'scoped memory for tpu_custom_call.1']
    #allocation13 [shape = 'u8[131072]{0}', space=vmem, size = 0x20000, scoped, tag = 'input window, operand 6, single buffered']
    #allocation14 [shape = 'u8[2048]{0}', space=vmem, size = 0x800, scoped, tag = 'input window, operand 7, single buffered']
    #allocation15 [shape = 's32[1]{0}', space=sflag, size = 0x4, scoped, tag = 'scoped memory for tpu_custom_call.1']
    #allocation16 [shape = 'u8[131072]{0}', space=vmem, size = 0x20000, scoped, tag = 'input window, operand 8, single buffered']
    #allocation17 [shape = 'u8[1024]{0}', space=vmem, size = 0x400, scoped, tag = 'input window, operand 9, single buffered']
    #allocation18 [shape = 's32[1]{0}', space=sflag, size = 0x4, scoped, tag = 'scoped memory for tpu_custom_call.1']
    #allocation19 [shape = 'u8[4096]{0}', space=vmem, size = 0x1000, scoped, tag = 'input window, operand 10, single buffered']
    #allocation20 [shape = 'u8[1024]{0}', space=vmem, size = 0x400, scoped, tag = 'output window, operand 0']
    %16 = vsyncpa [#allocation3], 0
    %s17 = scalar_lea.sflag [#allocation3], 1
    %18 = vsyncpa %s17, 0
    %19 = vsyncpa [#allocation6], 0
    %s20 = scalar_lea.sflag [#allocation6], 1
    %21 = vsyncpa %s20, 0
    %22 = vsyncpa [#allocation9], 0
    %23 = vsyncpa [#allocation12], 0
    %24 = vsyncpa [#allocation15], 0
    %25 = vsyncpa [#allocation18], 0
    %26 = vsyncpa [#allocation4], 0
    %s27 = scalar_lea.sflag [#allocation4], 1
    %28 = vsyncpa %s27, 0
    loop: start=0, step=1, limit=7
    $region2: #{tpu_custom_call.1} parent=1 // loop_pre_header
      _
    $region3: #{tpu_custom_call.1} parent=1 // loop_header
      %s30 = sphi 0, %s34
      %p31 = scmp.ge.s32.totalorder %s30, 7
      %s40 = sphi 0, %s42
      %s43 = sphi 0, %s40
      %s44 = sphi 0, %s43
      %s60 = sphi 0, %s44
      %s66 = sphi 0, %s68
      %s69 = sphi 0, %s66
      %s70 = sphi 0, %s69
      %s86 = sphi 0, %s70
      %s90 = sphi 0, %s90
      %s92 = sphi 0, %s90
      %s93 = sphi 0, %s92
      %s107 = sphi 0, %s93
      %s111 = sphi 0, %s111
      %s113 = sphi 0, %s111
      %s114 = sphi 0, %s113
      %s128 = sphi 0, %s114
      %s132 = sphi 0, %s132
      %s134 = sphi 0, %s132
      %s135 = sphi 0, %s134
      %s149 = sphi 0, %s135
      %s153 = sphi 0, %s153
      %s155 = sphi 0, %s153
      %s156 = sphi 0, %s155
      %s170 = sphi 0, %s156
      %s174 = sphi 0, %s174
      %s176 = sphi 0, %s174
      %s177 = sphi 0, %s176
      %s191 = sphi 0, %s177
      %s195 = sphi 0, %s195
      %s197 = sphi 0, %s195
      %s198 = sphi 0, %s197
      %s212 = sphi 0, %s198
      %s216 = sphi 0, %s216
      %s218 = sphi 0, %s216
      %s219 = sphi 0, %s218
      %s233 = sphi 0, %s219
      %s237 = sphi 0, %s237
      %s239 = sphi 0, %s237
      %s240 = sphi 0, %s239
      %s254 = sphi 0, %s240
      %s258 = sphi 0, %s258
      %s260 = sphi 0, %s258
      %s261 = sphi 0, %s260
      %s275 = sphi 0, %s261
      %s281 = sphi 0, %s283
      %s284 = sphi 0, %s281
      %s285 = sphi 0, %s284
      %s301 = sphi 0, %s285
    $region4: #{tpu_custom_call.1} parent=1 // loop_header_branch
      %33 = sbr.rel (%p31) target = $region8
    $region5: #{tpu_custom_call.1} parent=1 // loop_body
      %s35 = ssub.s32 %s30, 1
      %s36 = ssub.s32 %s30, 2
      %s37 = sadd.s32 %s30, 1
      %s38 = ssub.s32 %s30, %s37
      %p39 = scmp.eq.s32.totalorder %s38, 0
      %s41 = sadd.s32 %s40, 1
      %s42 = scalar_select %p39, %s40, %s41
      %p45 = pneg %p39
      %p46 = scmp.eq.s32.totalorder %s30, 4
      %p47 = por %p45, %p46
      %p48 = scmp.ne.s32.totalorder %s40, %s43
      %p49 = scmp.eq.s32.totalorder %s30, 0
      %p50 = por %p48, %p49
      %p51 = scmp.ne.s32.totalorder %s40, %s43
      %p52 = scmp.eq.s32.totalorder %s35, 4
      %p53 = por %p51, %p52
      %p54 = scmp.ne.s32.totalorder %s43, %s44
      %p55 = scmp.eq.s32.totalorder %s35, 0
      %p56 = por %p54, %p55
      %p57 = scmp.ne.s32.totalorder %s43, %s44
      %p58 = scmp.eq.s32.totalorder %s36, 4
      %p59 = por %p57, %p58
      %p61 = scmp.ne.s32.totalorder %s44, %s60
      %p62 = scmp.eq.s32.totalorder %s36, 0
      %p63 = por %p61, %p62
      %s64 = ssub.s32 %s30, %s37
      %p65 = scmp.eq.s32.totalorder %s64, 0
      %s67 = sadd.s32 %s66, 1
      %s68 = scalar_select %p65, %s66, %s67
      %p71 = pneg %p65
      %p72 = scmp.eq.s32.totalorder %s30, 4
      %p73 = por %p71, %p72
      %p74 = scmp.ne.s32.totalorder %s66, %s69
      %p75 = scmp.eq.s32.totalorder %s30, 0
      %p76 = por %p74, %p75
      %p77 = scmp.ne.s32.totalorder %s66, %s69
      %p78 = scmp.eq.s32.totalorder %s35, 4
      %p79 = por %p77, %p78
      %p80 = scmp.ne.s32.totalorder %s69, %s70
      %p81 = scmp.eq.s32.totalorder %s35, 0
      %p82 = por %p80, %p81
      %p83 = scmp.ne.s32.totalorder %s69, %s70
      %p84 = scmp.eq.s32.totalorder %s36, 4
      %p85 = por %p83, %p84
      %p87 = scmp.ne.s32.totalorder %s70, %s86
      %p88 = scmp.eq.s32.totalorder %s36, 0
      %p89 = por %p87, %p88
      %s91 = sadd.s32 %s90, 1
      %p94 = scmp.eq.s32.totalorder %s30, 4
      %p95 = scmp.ne.s32.totalorder %s90, %s92
      %p96 = scmp.eq.s32.totalorder %s30, 0
      %p97 = por %p95, %p96
      %p98 = scmp.ne.s32.totalorder %s90, %s92
      %p99 = scmp.eq.s32.totalorder %s35, 4
      %p100 = por %p98, %p99
      %p101 = scmp.ne.s32.totalorder %s92, %s93
      %p102 = scmp.eq.s32.totalorder %s35, 0
      %p103 = por %p101, %p102
      %p104 = scmp.ne.s32.totalorder %s92, %s93
      %p105 = scmp.eq.s32.totalorder %s36, 4
      %p106 = por %p104, %p105
      %p108 = scmp.ne.s32.totalorder %s93, %s107
      %p109 = scmp.eq.s32.totalorder %s36, 0
      %p110 = por %p108, %p109
      %s112 = sadd.s32 %s111, 1
      %p115 = scmp.eq.s32.totalorder %s30, 4
      %p116 = scmp.ne.s32.totalorder %s111, %s113
      %p117 = scmp.eq.s32.totalorder %s30, 0
      %p118 = por %p116, %p117
      %p119 = scmp.ne.s32.totalorder %s111, %s113
      %p120 = scmp.eq.s32.totalorder %s35, 4
      %p121 = por %p119, %p120
      %p122 = scmp.ne.s32.totalorder %s113, %s114
      %p123 = scmp.eq.s32.totalorder %s35, 0
      %p124 = por %p122, %p123
      %p125 = scmp.ne.s32.totalorder %s113, %s114
      %p126 = scmp.eq.s32.totalorder %s36, 4
      %p127 = por %p125, %p126
      %p129 = scmp.ne.s32.totalorder %s114, %s128
      %p130 = scmp.eq.s32.totalorder %s36, 0
      %p131 = por %p129, %p130
      %s133 = sadd.s32 %s132, 1
      %p136 = scmp.eq.s32.totalorder %s30, 4
      %p137 = scmp.ne.s32.totalorder %s132, %s134
      %p138 = scmp.eq.s32.totalorder %s30, 0
      %p139 = por %p137, %p138
      %p140 = scmp.ne.s32.totalorder %s132, %s134
      %p141 = scmp.eq.s32.totalorder %s35, 4
      %p142 = por %p140, %p141
      %p143 = scmp.ne.s32.totalorder %s134, %s135
      %p144 = scmp.eq.s32.totalorder %s35, 0
      %p145 = por %p143, %p144
      %p146 = scmp.ne.s32.totalorder %s134, %s135
      %p147 = scmp.eq.s32.totalorder %s36, 4
      %p148 = por %p146, %p147
      %p150 = scmp.ne.s32.totalorder %s135, %s149
      %p151 = scmp.eq.s32.totalorder %s36, 0
      %p152 = por %p150, %p151
      %s154 = sadd.s32 %s153, 1
      %p157 = scmp.eq.s32.totalorder %s30, 4
      %p158 = scmp.ne.s32.totalorder %s153, %s155
      %p159 = scmp.eq.s32.totalorder %s30, 0
      %p160 = por %p158, %p159
      %p161 = scmp.ne.s32.totalorder %s153, %s155
      %p162 = scmp.eq.s32.totalorder %s35, 4
      %p163 = por %p161, %p162
      %p164 = scmp.ne.s32.totalorder %s155, %s156
      %p165 = scmp.eq.s32.totalorder %s35, 0
      %p166 = por %p164, %p165
      %p167 = scmp.ne.s32.totalorder %s155, %s156
      %p168 = scmp.eq.s32.totalorder %s36, 4
      %p169 = por %p167, %p168
      %p171 = scmp.ne.s32.totalorder %s156, %s170
      %p172 = scmp.eq.s32.totalorder %s36, 0
      %p173 = por %p171, %p172
      %s175 = sadd.s32 %s174, 1
      %p178 = scmp.eq.s32.totalorder %s30, 4
      %p179 = scmp.ne.s32.totalorder %s174, %s176
      %p180 = scmp.eq.s32.totalorder %s30, 0
      %p181 = por %p179, %p180
      %p182 = scmp.ne.s32.totalorder %s174, %s176
      %p183 = scmp.eq.s32.totalorder %s35, 4
      %p184 = por %p182, %p183
      %p185 = scmp.ne.s32.totalorder %s176, %s177
      %p186 = scmp.eq.s32.totalorder %s35, 0
      %p187 = por %p185, %p186
      %p188 = scmp.ne.s32.totalorder %s176, %s177
      %p189 = scmp.eq.s32.totalorder %s36, 4
      %p190 = por %p188, %p189
      %p192 = scmp.ne.s32.totalorder %s177, %s191
      %p193 = scmp.eq.s32.totalorder %s36, 0
      %p194 = por %p192, %p193
      %s196 = sadd.s32 %s195, 1
      %p199 = scmp.eq.s32.totalorder %s30, 4
      %p200 = scmp.ne.s32.totalorder %s195, %s197
      %p201 = scmp.eq.s32.totalorder %s30, 0
      %p202 = por %p200, %p201
      %p203 = scmp.ne.s32.totalorder %s195, %s197
      %p204 = scmp.eq.s32.totalorder %s35, 4
      %p205 = por %p203, %p204
      %p206 = scmp.ne.s32.totalorder %s197, %s198
      %p207 = scmp.eq.s32.totalorder %s35, 0
      %p208 = por %p206, %p207
      %p209 = scmp.ne.s32.totalorder %s197, %s198
      %p210 = scmp.eq.s32.totalorder %s36, 4
      %p211 = por %p209, %p210
      %p213 = scmp.ne.s32.totalorder %s198, %s212
      %p214 = scmp.eq.s32.totalorder %s36, 0
      %p215 = por %p213, %p214
      %s217 = sadd.s32 %s216, 1
      %p220 = scmp.eq.s32.totalorder %s30, 4
      %p221 = scmp.ne.s32.totalorder %s216, %s218
      %p222 = scmp.eq.s32.totalorder %s30, 0
      %p223 = por %p221, %p222
      %p224 = scmp.ne.s32.totalorder %s216, %s218
      %p225 = scmp.eq.s32.totalorder %s35, 4
      %p226 = por %p224, %p225
      %p227 = scmp.ne.s32.totalorder %s218, %s219
      %p228 = scmp.eq.s32.totalorder %s35, 0
      %p229 = por %p227, %p228
      %p230 = scmp.ne.s32.totalorder %s218, %s219
      %p231 = scmp.eq.s32.totalorder %s36, 4
      %p232 = por %p230, %p231
      %p234 = scmp.ne.s32.totalorder %s219, %s233
      %p235 = scmp.eq.s32.totalorder %s36, 0
      %p236 = por %p234, %p235
      %s238 = sadd.s32 %s237, 1
      %p241 = scmp.eq.s32.totalorder %s30, 4
      %p242 = scmp.ne.s32.totalorder %s237, %s239
      %p243 = scmp.eq.s32.totalorder %s30, 0
      %p244 = por %p242, %p243
      %p245 = scmp.ne.s32.totalorder %s237, %s239
      %p246 = scmp.eq.s32.totalorder %s35, 4
      %p247 = por %p245, %p246
      %p248 = scmp.ne.s32.totalorder %s239, %s240
      %p249 = scmp.eq.s32.totalorder %s35, 0
      %p250 = por %p248, %p249
      %p251 = scmp.ne.s32.totalorder %s239, %s240
      %p252 = scmp.eq.s32.totalorder %s36, 4
      %p253 = por %p251, %p252
      %p255 = scmp.ne.s32.totalorder %s240, %s254
      %p256 = scmp.eq.s32.totalorder %s36, 0
      %p257 = por %p255, %p256
      %s259 = sadd.s32 %s258, 1
      %p262 = scmp.eq.s32.totalorder %s30, 4
      %p263 = scmp.ne.s32.totalorder %s258, %s260
      %p264 = scmp.eq.s32.totalorder %s30, 0
      %p265 = por %p263, %p264
      %p266 = scmp.ne.s32.totalorder %s258, %s260
      %p267 = scmp.eq.s32.totalorder %s35, 4
      %p268 = por %p266, %p267
      %p269 = scmp.ne.s32.totalorder %s260, %s261
      %p270 = scmp.eq.s32.totalorder %s35, 0
      %p271 = por %p269, %p270
      %p272 = scmp.ne.s32.totalorder %s260, %s261
      %p273 = scmp.eq.s32.totalorder %s36, 4
      %p274 = por %p272, %p273
      %p276 = scmp.ne.s32.totalorder %s261, %s275
      %p277 = scmp.eq.s32.totalorder %s36, 0
      %p278 = por %p276, %p277
      %s279 = ssub.s32 %s30, %s37
      %p280 = scmp.eq.s32.totalorder %s279, 0
      %s282 = sadd.s32 %s281, 1
      %s283 = scalar_select %p280, %s281, %s282
      %p286 = pneg %p280
      %p287 = scmp.eq.s32.totalorder %s30, 4
      %p288 = por %p286, %p287
      %p289 = scmp.ne.s32.totalorder %s281, %s284
      %p290 = scmp.eq.s32.totalorder %s30, 0
      %p291 = por %p289, %p290
      %p292 = scmp.ne.s32.totalorder %s281, %s284
      %p293 = scmp.eq.s32.totalorder %s35, 4
      %p294 = por %p292, %p293
      %p295 = scmp.ne.s32.totalorder %s284, %s285
      %p296 = scmp.eq.s32.totalorder %s35, 0
      %p297 = por %p295, %p296
      %p298 = scmp.ne.s32.totalorder %s284, %s285
      %p299 = scmp.eq.s32.totalorder %s36, 4
      %p300 = por %p298, %p299
      %p302 = scmp.ne.s32.totalorder %s285, %s301
      %p303 = scmp.eq.s32.totalorder %s36, 0
      %p304 = por %p302, %p303
      %p305 = scmp.le.s32.totalorder 1, %s30
      %p306 = scmp.lt.s32.totalorder %s30, 6
      %p307 = pnand %p305, %p306
      %p308 = pneg %p307
      // Predicated region
      $region9: #{tpu_custom_call.1} parent=5 // pred_check
        _
      $region10: #{tpu_custom_call.1} parent=5 // pred_check_branch
        %310 = sbr.rel (%p307) target = $region12
      $region11: #{tpu_custom_call.1} parent=5 // pred_region
        %s311 = ssub.s32 %s30, 1
        // Predicated region
        $region13: #{tpu_custom_call.1} parent=11 // pred_check
          %p312 = pneg %p103
        $region14: #{tpu_custom_call.1} parent=11 // pred_check_branch
          %314 = sbr.rel (%p312) target = $region16
        $region15: #{tpu_custom_call.1} parent=11 // pred_region
          %s316 = ssub.s32 6144, 6144
          %317 = vsyncadd [#allocation6], %s316
          %s318 = sshll.u32 [#allocation7], 4
          %s319 = int_to_ptr.vmem [resolvable:$true] %s318
          %324 = dma.hbm_to_vmem [thread:$0]  %s2, 6144, %s319, [#allocation6], 192, 192, 12
        $region16: #{tpu_custom_call.1} parent=11 // pred_fallthru
          _
        // Predicated region
        $region17: #{tpu_custom_call.1} parent=11 // pred_check
          %p325 = pneg %p124
        $region18: #{tpu_custom_call.1} parent=11 // pred_check_branch
          %327 = sbr.rel (%p325) target = $region20
        $region19: #{tpu_custom_call.1} parent=11 // pred_region
          %s329 = ssub.s32 96, 96
          %330 = vsyncadd [#allocation9], %s329
          %s331 = sshll.u32 [#allocation8], 4
          %s332 = int_to_ptr.vmem [resolvable:$true] %s331
          %337 = dma.hbm_to_vmem [thread:$0]  %s3, 96, %s332, [#allocation9], 48, 48, 3
        $region20: #{tpu_custom_call.1} parent=11 // pred_fallthru
          _
        // Predicated region
        $region21: #{tpu_custom_call.1} parent=11 // pred_check
          %p338 = pneg %p145
        $region22: #{tpu_custom_call.1} parent=11 // pred_check_branch
          %340 = sbr.rel (%p338) target = $region24
        $region23: #{tpu_custom_call.1} parent=11 // pred_region
          %s342 = ssub.s32 2048, 2048
          %343 = vsyncadd [#allocation9], %s342
          %s344 = sshll.u32 [#allocation10], 4
          %s345 = int_to_ptr.vmem [resolvable:$true] %s344
          %350 = dma.hbm_to_vmem [thread:$0]  %s4, 2048, %s345, [#allocation9], 64, 64, 4
        $region24: #{tpu_custom_call.1} parent=11 // pred_fallthru
          _
        // Predicated region
        $region25: #{tpu_custom_call.1} parent=11 // pred_check
          %p351 = pneg %p166
        $region26: #{tpu_custom_call.1} parent=11 // pred_check_branch
          %353 = sbr.rel (%p351) target = $region28
        $region27: #{tpu_custom_call.1} parent=11 // pred_region
          %s355 = ssub.s32 32, 32
          %356 = vsyncadd [#allocation12], %s355
          %s357 = sshll.u32 [#allocation11], 4
          %s358 = int_to_ptr.vmem [resolvable:$true] %s357
          %363 = dma.hbm_to_vmem [thread:$0]  %s5, 32, %s358, [#allocation12], 16, 16, 1
        $region28: #{tpu_custom_call.1} parent=11 // pred_fallthru
          _
        // Predicated region
        $region29: #{tpu_custom_call.1} parent=11 // pred_check
          %p364 = pneg %p187
        $region30: #{tpu_custom_call.1} parent=11 // pred_check_branch
          %366 = sbr.rel (%p364) target = $region32
        $region31: #{tpu_custom_call.1} parent=11 // pred_region
          %s368 = ssub.s32 4096, 4096
          %369 = vsyncadd [#allocation12], %s368
          %s370 = sshll.u32 [#allocation13], 4
          %s371 = int_to_ptr.vmem [resolvable:$true] %s370
          %376 = dma.hbm_to_vmem [thread:$0]  %s6, 4096, %s371, [#allocation12], 128, 128, 8
        $region32: #{tpu_custom_call.1} parent=11 // pred_fallthru
          _
        // Predicated region
        $region33: #{tpu_custom_call.1} parent=11 // pred_check
          %p377 = pneg %p208
        $region34: #{tpu_custom_call.1} parent=11 // pred_check_branch
          %379 = sbr.rel (%p377) target = $region36
        $region35: #{tpu_custom_call.1} parent=11 // pred_region
          %s381 = ssub.s32 64, 64
          %382 = vsyncadd [#allocation15], %s381
          %s383 = sshll.u32 [#allocation14], 4
          %s384 = int_to_ptr.vmem [resolvable:$true] %s383
          %389 = dma.hbm_to_vmem [thread:$0]  %s7, 64, %s384, [#allocation15], 32, 32, 2
        $region36: #{tpu_custom_call.1} parent=11 // pred_fallthru
          _
        // Predicated region
        $region37: #{tpu_custom_call.1} parent=11 // pred_check
          %p390 = pneg %p229
        $region38: #{tpu_custom_call.1} parent=11 // pred_check_branch
          %392 = sbr.rel (%p390) target = $region40
        $region39: #{tpu_custom_call.1} parent=11 // pred_region
          %s394 = ssub.s32 4096, 4096
          %395 = vsyncadd [#allocation15], %s394
          %s396 = sshll.u32 [#allocation16], 4
          %s397 = int_to_ptr.vmem [resolvable:$true] %s396
          %402 = dma.hbm_to_vmem [thread:$0]  %s8, 4096, %s397, [#allocation15], 64, 64, 4
        $region40: #{tpu_custom_call.1} parent=11 // pred_fallthru
          _
        // Predicated region
        $region41: #{tpu_custom_call.1} parent=11 // pred_check
          %p403 = pneg %p250
        $region42: #{tpu_custom_call.1} parent=11 // pred_check_branch
          %405 = sbr.rel (%p403) target = $region44
        $region43: #{tpu_custom_call.1} parent=11 // pred_region
          %s407 = ssub.s32 32, 32
          %408 = vsyncadd [#allocation18], %s407
          %s409 = sshll.u32 [#allocation17], 4
          %s410 = int_to_ptr.vmem [resolvable:$true] %s409
          %415 = dma.hbm_to_vmem [thread:$0]  %s9, 32, %s410, [#allocation18], 16, 16, 1
        $region44: #{tpu_custom_call.1} parent=11 // pred_fallthru
          _
        // Predicated region
        $region45: #{tpu_custom_call.1} parent=11 // pred_check
          %p416 = pneg %p271
        $region46: #{tpu_custom_call.1} parent=11 // pred_check_branch
          %418 = sbr.rel (%p416) target = $region48
        $region47: #{tpu_custom_call.1} parent=11 // pred_region
          %s420 = ssub.s32 128, 128
          %421 = vsyncadd [#allocation18], %s420
          %s422 = sshll.u32 [#allocation19], 4
          %s423 = int_to_ptr.vmem [resolvable:$true] %s422
          %428 = dma.hbm_to_vmem [thread:$0]  %s10, 128, %s423, [#allocation18], 64, 64, 4
        $region48: #{tpu_custom_call.1} parent=11 // pred_fallthru
          _
      $region12: #{tpu_custom_call.1} parent=5 // pred_fallthru
        _
      %p429 = scmp.lt.s32.totalorder %s30, 5
      // Predicated region
      $region49: #{tpu_custom_call.1} parent=5 // pred_check
        %p430 = pneg %p429
      $region50: #{tpu_custom_call.1} parent=5 // pred_check_branch
        %432 = sbr.rel (%p430) target = $region52
      $region51: #{tpu_custom_call.1} parent=5 // pred_region
        // Predicated region
        $region53: #{tpu_custom_call.1} parent=51 // pred_check
          %p433 = pneg %p50
        $region54: #{tpu_custom_call.1} parent=51 // pred_check_branch
          %435 = sbr.rel (%p433) target = $region56
        $region55: #{tpu_custom_call.1} parent=51 // pred_region
          %s436 = sand.u32 %s40, 1
          %s437 = scalar_lea.sflag [#allocation3], %s436
          %s438 = sand.u32 %s40, 1
          %s439 = smul.addr %s438, 8
          %s440 = scalar_lea.vmem [#allocation2], %s439
          %s442 = ssub.s32 128, 128
          %443 = vsyncadd %s437, %s442
          %s444 = smul.addr %s30, 2
          %s445 = smul.addr %s444, 64
          %s446 = scalar_lea.hbm %s0, %s445
          %s447 = sshll.u32 %s440, 4
          %s448 = int_to_ptr.vmem [resolvable:$true] %s447
          %453 = dma.hbm_to_vmem [thread:$0]  %s446, 128, %s448, %s437, 64, 64, 4
        $region56: #{tpu_custom_call.1} parent=51 // pred_fallthru
          _
        // Predicated region
        $region57: #{tpu_custom_call.1} parent=51 // pred_check
          %p454 = pneg %p76
        $region58: #{tpu_custom_call.1} parent=51 // pred_check_branch
          %456 = sbr.rel (%p454) target = $region60
        $region59: #{tpu_custom_call.1} parent=51 // pred_region
          %s457 = sand.u32 %s30, 1
          %s458 = scalar_lea.sflag [#allocation6], %s457
          %s459 = sand.u32 %s66, 1
          %s460 = smul.addr %s459, 16
          %s461 = scalar_lea.vmem [#allocation5], %s460
          %s463 = ssub.s32 256, 256
          %464 = vsyncadd %s458, %s463
          %s465 = smul.addr %s30, 4
          %s466 = smul.addr %s465, 64
          %s467 = scalar_lea.hbm %s1, %s466
          %s468 = sshll.u32 %s461, 4
          %s469 = int_to_ptr.vmem [resolvable:$true] %s468
          %474 = dma.hbm_to_vmem [thread:$0]  %s467, 256, %s469, %s458, 64, 64, 4
        $region60: #{tpu_custom_call.1} parent=51 // pred_fallthru
          _
      $region52: #{tpu_custom_call.1} parent=5 // pred_fallthru
        _
      %p475 = scmp.le.s32.totalorder 1, %s30
      %p476 = scmp.lt.s32.totalorder %s30, 6
      %p477 = pnand %p475, %p476
      %p478 = pneg %p477
      // Predicated region
      $region61: #{tpu_custom_call.1} parent=5 // pred_check
        _
      $region62: #{tpu_custom_call.1} parent=5 // pred_check_branch
        %480 = sbr.rel (%p477) target = $region64
      $region63: #{tpu_custom_call.1} parent=5 // pred_region
        %s481 = ssub.s32 %s30, 1
        %s482 = sand.u32 %s43, 1
        %s483 = scalar_lea.sflag [#allocation3], %s482
        %s484 = sand.u32 %s43, 1
        %s485 = smul.addr %s484, 8
        %s486 = scalar_lea.vmem [#allocation2], %s485
        // Predicated region
        $region65: #{tpu_custom_call.1} parent=63 // pred_check
          %p487 = pneg %p56
        $region66: #{tpu_custom_call.1} parent=63 // pred_check_branch
          %489 = sbr.rel (%p487) target = $region68
        $region67: #{tpu_custom_call.1} parent=63 // pred_region
          %490 = dma.done %s483, 128
        $region68: #{tpu_custom_call.1} parent=63 // pred_fallthru
          _
        %s491 = sand.u32 %s35, 1
        %s492 = scalar_lea.sflag [#allocation6], %s491
        %s493 = sand.u32 %s69, 1
        %s494 = smul.addr %s493, 16
        %s495 = scalar_lea.vmem [#allocation5], %s494
        // Predicated region
        $region69: #{tpu_custom_call.1} parent=63 // pred_check
          %p496 = pneg %p82
        $region70: #{tpu_custom_call.1} parent=63 // pred_check_branch
          %498 = sbr.rel (%p496) target = $region72
        $region71: #{tpu_custom_call.1} parent=63 // pred_region
          %499 = dma.done %s492, 256
        $region72: #{tpu_custom_call.1} parent=63 // pred_fallthru
          _
        // Predicated region
        $region73: #{tpu_custom_call.1} parent=63 // pred_check
          %p500 = pneg %p103
        $region74: #{tpu_custom_call.1} parent=63 // pred_check_branch
          %502 = sbr.rel (%p500) target = $region76
        $region75: #{tpu_custom_call.1} parent=63 // pred_region
          %503 = dma.done [#allocation6], 6144
        $region76: #{tpu_custom_call.1} parent=63 // pred_fallthru
          _
        // Predicated region
        $region77: #{tpu_custom_call.1} parent=63 // pred_check
          %p504 = pneg %p124
        $region78: #{tpu_custom_call.1} parent=63 // pred_check_branch
          %506 = sbr.rel (%p504) target = $region80
        $region79: #{tpu_custom_call.1} parent=63 // pred_region
          %507 = dma.done [#allocation9], 96
        $region80: #{tpu_custom_call.1} parent=63 // pred_fallthru
          _
        // Predicated region
        $region81: #{tpu_custom_call.1} parent=63 // pred_check
          %p508 = pneg %p145
        $region82: #{tpu_custom_call.1} parent=63 // pred_check_branch
          %510 = sbr.rel (%p508) target = $region84
        $region83: #{tpu_custom_call.1} parent=63 // pred_region
          %511 = dma.done [#allocation9], 2048
        $region84: #{tpu_custom_call.1} parent=63 // pred_fallthru
          _
        // Predicated region
        $region85: #{tpu_custom_call.1} parent=63 // pred_check
          %p512 = pneg %p166
        $region86: #{tpu_custom_call.1} parent=63 // pred_check_branch
          %514 = sbr.rel (%p512) target = $region88
        $region87: #{tpu_custom_call.1} parent=63 // pred_region
          %515 = dma.done [#allocation12], 32
        $region88: #{tpu_custom_call.1} parent=63 // pred_fallthru
          _
        // Predicated region
        $region89: #{tpu_custom_call.1} parent=63 // pred_check
          %p516 = pneg %p187
        $region90: #{tpu_custom_call.1} parent=63 // pred_check_branch
          %518 = sbr.rel (%p516) target = $region92
        $region91: #{tpu_custom_call.1} parent=63 // pred_region
          %519 = dma.done [#allocation12], 4096
        $region92: #{tpu_custom_call.1} parent=63 // pred_fallthru
          _
        // Predicated region
        $region93: #{tpu_custom_call.1} parent=63 // pred_check
          %p520 = pneg %p208
        $region94: #{tpu_custom_call.1} parent=63 // pred_check_branch
          %522 = sbr.rel (%p520) target = $region96
        $region95: #{tpu_custom_call.1} parent=63 // pred_region
          %523 = dma.done [#allocation15], 64
        $region96: #{tpu_custom_call.1} parent=63 // pred_fallthru
          _
        // Predicated region
        $region97: #{tpu_custom_call.1} parent=63 // pred_check
          %p524 = pneg %p229
        $region98: #{tpu_custom_call.1} parent=63 // pred_check_branch
          %526 = sbr.rel (%p524) target = $region100
        $region99: #{tpu_custom_call.1} parent=63 // pred_region
          %527 = dma.done [#allocation15], 4096
        $region100: #{tpu_custom_call.1} parent=63 // pred_fallthru
          _
        // Predicated region
        $region101: #{tpu_custom_call.1} parent=63 // pred_check
          %p528 = pneg %p250
        $region102: #{tpu_custom_call.1} parent=63 // pred_check_branch
          %530 = sbr.rel (%p528) target = $region104
        $region103: #{tpu_custom_call.1} parent=63 // pred_region
          %531 = dma.done [#allocation18], 32
        $region104: #{tpu_custom_call.1} parent=63 // pred_fallthru
          _
        // Predicated region
        $region105: #{tpu_custom_call.1} parent=63 // pred_check
          %p532 = pneg %p271
        $region106: #{tpu_custom_call.1} parent=63 // pred_check_branch
          %534 = sbr.rel (%p532) target = $region108
        $region107: #{tpu_custom_call.1} parent=63 // pred_region
          %535 = dma.done [#allocation18], 128
        $region108: #{tpu_custom_call.1} parent=63 // pred_fallthru
          _
        %s536 = sand.u32 %s43, 1
        %s537 = scalar_lea.sflag [#allocation3], %s536
        %s538 = sand.u32 %s43, 1
        %s539 = smul.addr %s538, 8
        %s540 = scalar_lea.vmem [#allocation2], %s539
        %p541 = pneg %p56
        %p542 = pneg %p53
        %s543 = sand.u32 %s35, 1
        %s544 = scalar_lea.sflag [#allocation6], %s543
        %s545 = sand.u32 %s69, 1
        %s546 = smul.addr %s545, 16
        %s547 = scalar_lea.vmem [#allocation5], %s546
        %p548 = pneg %p82
        %p549 = pneg %p79
        %p550 = pneg %p103
        %p551 = pneg %p100
        %p552 = pneg %p124
        %p553 = pneg %p121
        %p554 = pneg %p145
        %p555 = pneg %p142
        %p556 = pneg %p166
        %p557 = pneg %p163
        %p558 = pneg %p187
        %p559 = pneg %p184
        %p560 = pneg %p208
        %p561 = pneg %p205
        %p562 = pneg %p229
        %p563 = pneg %p226
        %p564 = pneg %p250
        %p565 = pneg %p247
        %p566 = pneg %p271
        %p567 = pneg %p268
        %p568 = pneg %p297
        %p569 = pneg %p294
        %s570 = sand.u32 %s284, 1
        %s571 = scalar_lea.sflag [#allocation4], %s570
        %s572 = sand.u32 %s284, 1
        %s573 = scalar_lea.vmem [#allocation20], %s572
        %v575 = vld [vmem:[%s486] sm:$0xf]
        %v576 = vld [vmem:[%s486 + $0x4] sm:$0xf]
        %v577 = vunpack.c.l.bf16 %v575
        %v578 = vunpack.c.l.bf16 %v576
        %v579 = vld [vmem:[%s495] sm:$0xf]
        %v580 = vld [vmem:[%s495 + $0x4] sm:$0xf]
        %v581 = vld [vmem:[%s495 + $0x8] sm:$0xf]
        %v582 = vld [vmem:[%s495 + $0xc] sm:$0xf]
        %v583 = vunpack.c.l.bf16 %v579
        %v584 = vunpack.c.l.bf16 %v580
        %v585 = vunpack.c.l.bf16 %v581
        %v586 = vunpack.c.l.bf16 %v582
        %v587 = vld [vmem:[#allocation7] sm:$0xff]
        %v588 = vld [vmem:[#allocation7 + $0x8] sm:$0xf]
        %v589 = vld [vmem:[#allocation7 + $0xc] sm:$0xff]
        %v590 = vld [vmem:[#allocation7 + $0x14] sm:$0xf]
        %v591 = vld [vmem:[#allocation7 + $0x18] sm:$0xff]
        %v592 = vld [vmem:[#allocation7 + $0x20] sm:$0xf]
        %v593 = vld [vmem:[#allocation7 + $0x24] sm:$0xff]
        %v594 = vld [vmem:[#allocation7 + $0x2c] sm:$0xf]
        %v595 = vld [vmem:[#allocation7 + $0x30] sm:$0xff]
        %v596 = vld [vmem:[#allocation7 + $0x38] sm:$0xf]
        %v597 = vld [vmem:[#allocation7 + $0x3c] sm:$0xff]
        %v598 = vld [vmem:[#allocation7 + $0x44] sm:$0xf]
        %v599 = vld [vmem:[#allocation7 + $0x48] sm:$0xff]
        %v600 = vld [vmem:[#allocation7 + $0x50] sm:$0xf]
        %v601 = vld [vmem:[#allocation7 + $0x54] sm:$0xff]
        %v602 = vld [vmem:[#allocation7 + $0x5c] sm:$0xf]
        %v603 = vld [vmem:[#allocation7 + $0x60] sm:$0xff]
        %v604 = vld [vmem:[#allocation7 + $0x68] sm:$0xf]
        %v605 = vld [vmem:[#allocation7 + $0x6c] sm:$0xff]
        %v606 = vld [vmem:[#allocation7 + $0x74] sm:$0xf]
        %v607 = vld [vmem:[#allocation7 + $0x78] sm:$0xff]
        %v608 = vld [vmem:[#allocation7 + $0x80] sm:$0xf]
        %v609 = vld [vmem:[#allocation7 + $0x84] sm:$0xff]
        %v610 = vld [vmem:[#allocation7 + $0x8c] sm:$0xf]
        %v611 = vld [vmem:[#allocation7 + $0x90] sm:$0xff]
        %v612 = vld [vmem:[#allocation7 + $0x98] sm:$0xf]
        %v613 = vld [vmem:[#allocation7 + $0x9c] sm:$0xff]
        %v614 = vld [vmem:[#allocation7 + $0xa4] sm:$0xf]
        %v615 = vld [vmem:[#allocation7 + $0xa8] sm:$0xff]
        %v616 = vld [vmem:[#allocation7 + $0xb0] sm:$0xf]
        %v617 = vld [vmem:[#allocation7 + $0xb4] sm:$0xff]
        %v618 = vld [vmem:[#allocation7 + $0xbc] sm:$0xf]
        %v619 = vpack.c.bf16 %v578, %v577
        %v620 = vpack.c.bf16 %v584, %v583
        %v621 = vpack.c.bf16 %v586, %v585
        %v622 = vld [vmem:[#allocation8] sm:$0x7]
        %v624 = vlaneseq
        %v625 = vshrl.u32 %v624, 7
        %v626 = vsub.s32 0, %v625
        %v627 = vrot.slane %v622, %v626
        %v628 = vlaneseq
        %v629 = vshrl.u32 %v628, 7
        %v630 = vsub.s32 1, %v629
        %v631 = vrot.slane %v622, %v630
        %v632 = vlaneseq
        %v633 = vshrl.u32 %v632, 7
        %v634 = vsub.s32 2, %v633
        %v635 = vrot.slane %v622, %v634
        %v671 = vunpack.c.l.b16 %v587
        %v672 = vunpack.c.h.b16 %v587
        %v673 = vunpack.c.l.b16 %v588
        %v674 = vunpack.c.l.b16 %v589
        %v675 = vunpack.c.h.b16 %v589
        %v676 = vunpack.c.l.b16 %v590
        %v677 = vunpack.c.l.b16 %v591
        %v678 = vunpack.c.h.b16 %v591
        %v679 = vunpack.c.l.b16 %v592
        %v680 = vunpack.c.l.b16 %v593
        %v681 = vunpack.c.h.b16 %v593
        %v682 = vunpack.c.l.b16 %v594
        %v683 = vunpack.c.l.b16 %v595
        %v684 = vunpack.c.h.b16 %v595
        %v685 = vunpack.c.l.b16 %v596
        %v686 = vunpack.c.l.b16 %v597
        %v687 = vunpack.c.h.b16 %v597
        %v688 = vunpack.c.l.b16 %v598
        %v689 = vunpack.c.l.b16 %v599
        %v690 = vunpack.c.h.b16 %v599
        %v691 = vunpack.c.l.b16 %v600
        %v692 = vunpack.c.l.b16 %v601
        %v693 = vunpack.c.h.b16 %v601
        %v694 = vunpack.c.l.b16 %v602
        %v695 = vunpack.c.l.b16 %v603
        %v696 = vunpack.c.h.b16 %v603
        %v697 = vunpack.c.l.b16 %v604
        %v698 = vunpack.c.l.b16 %v605
        %v699 = vunpack.c.h.b16 %v605
        %v700 = vunpack.c.l.b16 %v606
        %v701 = vunpack.c.l.b16 %v607
        %v702 = vunpack.c.h.b16 %v607
        %v703 = vunpack.c.l.b16 %v608
        %v704 = vunpack.c.l.b16 %v609
        %v705 = vunpack.c.h.b16 %v609
        %v706 = vunpack.c.l.b16 %v610
        %v707 = vunpack.c.l.b16 %v611
        %v708 = vunpack.c.h.b16 %v611
        %v709 = vunpack.c.l.b16 %v612
        %v710 = vunpack.c.l.b16 %v613
        %v711 = vunpack.c.h.b16 %v613
        %v712 = vunpack.c.l.b16 %v614
        %v713 = vunpack.c.l.b16 %v615
        %v714 = vunpack.c.h.b16 %v615
        %v715 = vunpack.c.l.b16 %v616
        %v716 = vunpack.c.l.b16 %v617
        %v717 = vunpack.c.h.b16 %v617
        %v718 = vunpack.c.l.b16 %v618
        %v719 = vpack.c.b16 %v674, %v671
        %v720 = vpack.c.b16 %v675, %v672
        %v721 = vpack.c.b16 %v676, %v673
        %v722 = vpack.c.b16 %v680, %v677
        %v723 = vpack.c.b16 %v681, %v678
        %v724 = vpack.c.b16 %v682, %v679
        %v725 = vpack.c.b16 %v686, %v683
        %v726 = vpack.c.b16 %v687, %v684
        %v727 = vpack.c.b16 %v688, %v685
        %v728 = vpack.c.b16 %v692, %v689
        %v729 = vpack.c.b16 %v693, %v690
        %v730 = vpack.c.b16 %v694, %v691
        %v731 = vpack.c.b16 %v698, %v695
        %v732 = vpack.c.b16 %v699, %v696
        %v733 = vpack.c.b16 %v700, %v697
        %v734 = vpack.c.b16 %v704, %v701
        %v735 = vpack.c.b16 %v705, %v702
        %v736 = vpack.c.b16 %v706, %v703
        %v737 = vpack.c.b16 %v710, %v707
        %v738 = vpack.c.b16 %v711, %v708
        %v739 = vpack.c.b16 %v712, %v709
        %v740 = vpack.c.b16 %v716, %v713
        %v741 = vpack.c.b16 %v717, %v714
        %v742 = vpack.c.b16 %v718, %v715
        %767 = vmatprep.subr.bf16.mxu0 %v720
        %768 = vmatpush1.bf16.msra.mxu0 %v719
        %769 = vmatprep.subr.bf16.mxu0 %v723
        %770 = vmatpush1.bf16.msra.mxu0 %v722
        %771 = vmatprep.subr.bf16.mxu0 %v726
        %772 = vmatpush1.bf16.msra.mxu0 %v725
        %773 = vmatprep.subr.bf16.mxu0 %v729
        %774 = vmatpush1.bf16.msra.mxu0 %v728
        %775 = vmatprep.subr.bf16.mxu0 %v732
        %776 = vmatpush1.bf16.msra.mxu0 %v731
        %777 = vmatprep.subr.bf16.mxu0 %v735
        %778 = vmatpush1.bf16.msra.mxu0 %v734
        %779 = vmatprep.subr.bf16.mxu0 %v738
        %780 = vmatpush1.bf16.msra.mxu0 %v737
        %781 = vmatprep.subr.bf16.mxu0 %v741
        %782 = vmatpush1.bf16.msra.mxu0 %v740
        %783 = vmatprep.subr.bf16.mxu0 0
        %784 = vmatpush1.bf16.msra.mxu0 0
        %785 = vmatprep.subr.bf16.mxu0 0
        %786 = vmatpush1.bf16.msra.mxu0 0
        %787 = vmatprep.subr.bf16.mxu0 0
        %788 = vmatpush1.bf16.msra.mxu0 0
        %789 = vmatprep.subr.bf16.mxu0 0
        %790 = vmatpush1.bf16.msra.mxu0 0
        %791 = vmatprep.subr.bf16.mxu0 0
        %792 = vmatpush1.bf16.msra.mxu0 0
        %793 = vmatprep.subr.bf16.mxu0 0
        %794 = vmatpush1.bf16.msra.mxu0 0
        %795 = vmatprep.subr.bf16.mxu0 0
        %796 = vmatpush1.bf16.msra.mxu0 0
        %797 = vmatprep.subr.bf16.mxu0 0
        %798 = vmatpush1.bf16.msra.mxu0 0
        %799 = vmatprep.mubr.bf16.mxu0 0
        %800 = vmatmul.mubr.bf16.gmra.mrb[0].mxu0 %v619
        %v801 = vpop.f32.mrb[0].mxu0
        %v802 = vadd.f32 %v627, %v801
        %v803 = vpop.f32.mrb[0].mxu0
        %v804 = vadd.f32 %v631, %v803
        %v805 = vpop.f32.mrb[0].mxu0
        %v806 = vadd.f32 %v627, %v805
        %v807 = vpop.f32.mrb[0].mxu0
        %v808 = vadd.f32 %v631, %v807
        %809 = vmatprep.mubr.bf16.mxu0 0
        %810 = vmatmul.mubr.bf16.gmra.mrb[0].mxu0 %v620
        %v811 = vpop.f32.mrb[0].mxu0
        %v812 = vadd.f32 %v627, %v811
        %v813 = vpop.f32.mrb[0].mxu0
        %v814 = vadd.f32 %v631, %v813
        %v815 = vpop.f32.mrb[0].mxu0
        %v816 = vadd.f32 %v627, %v815
        %v817 = vpop.f32.mrb[0].mxu0
        %v818 = vadd.f32 %v631, %v817
        %819 = vmatprep.mubr.bf16.mxu0 0
        %820 = vmatmul.mubr.bf16.gmra.mrb[0].mxu0 %v621
        %v821 = vpop.f32.mrb[0].mxu0
        %v822 = vadd.f32 %v627, %v821
        %v823 = vpop.f32.mrb[0].mxu0
        %v824 = vadd.f32 %v631, %v823
        %v825 = vpop.f32.mrb[0].mxu0
        %v826 = vadd.f32 %v627, %v825
        %v827 = vpop.f32.mrb[0].mxu0
        %v828 = vadd.f32 %v631, %v827
        %829 = vdwg.mxu0
        %830 = vmatprep.subr.bf16.mxu0 0
        %831 = vmatpush1.bf16.msra.mxu0 %v721
        %832 = vmatprep.subr.bf16.mxu0 0
        %833 = vmatpush1.bf16.msra.mxu0 %v724
        %834 = vmatprep.subr.bf16.mxu0 0
        %835 = vmatpush1.bf16.msra.mxu0 %v727
        %836 = vmatprep.subr.bf16.mxu0 0
        %837 = vmatpush1.bf16.msra.mxu0 %v730
        %838 = vmatprep.subr.bf16.mxu0 0
        %839 = vmatpush1.bf16.msra.mxu0 %v733
        %840 = vmatprep.subr.bf16.mxu0 0
        %841 = vmatpush1.bf16.msra.mxu0 %v736
        %842 = vmatprep.subr.bf16.mxu0 0
        %843 = vmatpush1.bf16.msra.mxu0 %v739
        %844 = vmatprep.subr.bf16.mxu0 0
        %845 = vmatpush1.bf16.msra.mxu0 %v742
        %846 = vmatprep.subr.bf16.mxu0 0
        %847 = vmatpush1.bf16.msra.mxu0 0
        %848 = vmatprep.subr.bf16.mxu0 0
        %849 = vmatpush1.bf16.msra.mxu0 0
        %850 = vmatprep.subr.bf16.mxu0 0
        %851 = vmatpush1.bf16.msra.mxu0 0
        %852 = vmatprep.subr.bf16.mxu0 0
        %853 = vmatpush1.bf16.msra.mxu0 0
        %854 = vmatprep.subr.bf16.mxu0 0
        %855 = vmatpush1.bf16.msra.mxu0 0
        %856 = vmatprep.subr.bf16.mxu0 0
        %857 = vmatpush1.bf16.msra.mxu0 0
        %858 = vmatprep.subr.bf16.mxu0 0
        %859 = vmatpush1.bf16.msra.mxu0 0
        %860 = vmatprep.subr.bf16.mxu0 0
        %861 = vmatpush1.bf16.msra.mxu0 0
        %862 = vmatprep.mubr.bf16.mxu0 0
        %863 = vmatmul.mubr.bf16.gmra.mrb[0].mxu0 %v619
        %v864 = vpop.f32.mrb[0].mxu0
        %v865 = vadd.f32 %v635, %v864
        %v866 = vpop.f32.mrb[0].mxu0
        %v867 = vpop.f32.mrb[0].mxu0
        %v868 = vadd.f32 %v635, %v867
        %v869 = vpop.f32.mrb[0].mxu0
        %870 = vmatprep.mubr.bf16.mxu0 0
        %871 = vmatmul.mubr.bf16.gmra.mrb[0].mxu0 %v620
        %v872 = vpop.f32.mrb[0].mxu0
        %v873 = vadd.f32 %v635, %v872
        %v874 = vpop.f32.mrb[0].mxu0
        %v875 = vpop.f32.mrb[0].mxu0
        %v876 = vadd.f32 %v635, %v875
        %v877 = vpop.f32.mrb[0].mxu0
        %878 = vmatprep.mubr.bf16.mxu0 0
        %879 = vmatmul.mubr.bf16.gmra.mrb[0].mxu0 %v621
        %v880 = vpop.f32.mrb[0].mxu0
        %v881 = vadd.f32 %v635, %v880
        %v882 = vpop.f32.mrb[0].mxu0
        %v883 = vpop.f32.mrb[0].mxu0
        %v884 = vadd.f32 %v635, %v883
        %v885 = vpop.f32.mrb[0].mxu0
        %886 = vdwg.mxu0
        %vm887 = vcmask 523264
        %v889 = vsel %vm887, %v802, 0
        %v892 = vsel %vm887, %v806, 0
        %v895 = vsel %vm887, %v812, 0
        %v898 = vsel %vm887, %v816, 0
        %v901 = vsel %vm887, %v822, 0
        %v904 = vsel %vm887, %v826, 0
        %v907 = vsel %vm887, %v804, 0
        %v910 = vsel %vm887, %v808, 0
        %v913 = vsel %vm887, %v814, 0
        %v916 = vsel %vm887, %v818, 0
        %v919 = vsel %vm887, %v824, 0
        %v922 = vsel %vm887, %v828, 0
        %924 = vmatprep.subr.mxu0 0.0
        %925 = vmatpush1.xpose.msra.mxu0 %v907
        %926 = vmatprep.subr.mxu0 0.0
        %927 = vmatpush1.xpose.msra.mxu0 %v910
        %928 = vmatprep.subr.mxu0 0.0
        %929 = vmatpush1.xpose.msra.mxu0 %v913
        %930 = vmatprep.subr.mxu0 0.0
        %931 = vmatpush1.xpose.msra.mxu0 %v916
        %932 = vmatprep.subr.mxu0 0.0
        %933 = vmatpush1.xpose.msra.mxu0 %v919
        %934 = vmatprep.subr.mxu0 0.0
        %935 = vmatpush1.xpose.msra.mxu0 %v922
        %936 = vmatprep.subr.mxu0 0.0
        %937 = vmatpush1.xpose.msra.mxu0 0.0
        %938 = vmatprep.subr.mxu0 0.0
        %939 = vmatpush1.xpose.msra.mxu0 0.0
        %940 = vmatprep.subr.mxu0 0.0
        %941 = vmatpush1.xpose.msra.mxu0 0.0
        %942 = vmatprep.subr.mxu0 0.0
        %943 = vmatpush1.xpose.msra.mxu0 0.0
        %944 = vmatprep.subr.mxu0 0.0
        %945 = vmatpush1.xpose.msra.mxu0 0.0
        %946 = vmatprep.subr.mxu0 0.0
        %947 = vmatpush1.xpose.msra.mxu0 0.0
        %948 = vmatprep.subr.mxu0 0.0
        %949 = vmatpush1.xpose.msra.mxu0 0.0
        %950 = vmatprep.subr.mxu0 0.0
        %951 = vmatpush1.xpose.msra.mxu0 0.0
        %952 = vmatprep.subr.mxu0 0.0
        %953 = vmatpush1.xpose.msra.mxu0 0.0
        %954 = vmatprep.subr.mxu0 0.0
        %955 = vmatpush1.xpose.msra.mxu0 0.0
        %956 = vmatprep.subr.mxu0 0.0
        %957 = vmatpush1.xpose.msra.mxu0 0.0
        %958 = vmatprep.subr.mxu0 0.0
        %959 = vmatpush1.xpose.msra.mxu0 0.0
        %960 = vmatprep.subr.mxu0 0.0
        %961 = vmatpush1.xpose.msra.mxu0 0.0
        %962 = vmatprep.subr.mxu0 0.0
        %963 = vmatpush1.xpose.msra.mxu0 0.0
        %964 = vmatprep.subr.mxu0 0.0
        %965 = vmatpush1.xpose.msra.mxu0 0.0
        %966 = vmatprep.subr.mxu0 0.0
        %967 = vmatpush1.xpose.msra.mxu0 0.0
        %968 = vmatprep.subr.mxu0 0.0
        %969 = vmatpush1.xpose.msra.mxu0 0.0
        %970 = vmatprep.subr.mxu0 0.0
        %971 = vmatpush1.xpose.msra.mxu0 0.0
        %972 = vmatprep.subr.mxu0 0.0
        %973 = vmatpush1.xpose.msra.mxu0 0.0
        %974 = vmatprep.subr.mxu0 0.0
        %975 = vmatpush1.xpose.msra.mxu0 0.0
        %976 = vmatprep.subr.mxu0 0.0
        %977 = vmatpush1.xpose.msra.mxu0 0.0
        %978 = vmatprep.subr.mxu0 0.0
        %979 = vmatpush1.xpose.msra.mxu0 0.0
        %980 = vmatprep.subr.mxu0 0.0
        %981 = vmatpush1.xpose.msra.mxu0 0.0
        %982 = vmatprep.subr.mxu0 0.0
        %983 = vmatpush1.xpose.msra.mxu0 0.0
        %984 = vmatprep.subr.mxu0 0.0
        %985 = vmatpush1.xpose.msra.mxu0 0.0
        %986 = vmatprep.subr.mxu0 0.0
        %987 = vmatpush1.xpose.msra.mxu0 0.0
        %988 = vmatprep.mubr.f32.mxu0 0.0
        %989 = vmatmul.mubr.f32.gmra.mrb[0].mxu0 %v889
        %v990 = vpop.f32.mrb[0].mxu0
        %v991 = vadd.f32 0.0, %v990
        %v992 = vpop.f32.mrb[0].mxu0
        %993 = vmatprep.mubr.f32.mxu0 0.0
        %994 = vmatmul.mubr.f32.gmra.mrb[0].mxu0 %v892
        %v995 = vpop.f32.mrb[0].mxu0
        %v996 = vadd.f32 0.0, %v995
        %v997 = vpop.f32.mrb[0].mxu0
        %998 = vmatprep.mubr.f32.mxu0 0.0
        %999 = vmatmul.mubr.f32.gmra.mrb[0].mxu0 %v895
        %v1000 = vpop.f32.mrb[0].mxu0
        %v1001 = vadd.f32 0.0, %v1000
        %v1002 = vpop.f32.mrb[0].mxu0
        %1003 = vmatprep.mubr.f32.mxu0 0.0
        %1004 = vmatmul.mubr.f32.gmra.mrb[0].mxu0 %v898
        %v1005 = vpop.f32.mrb[0].mxu0
        %v1006 = vadd.f32 0.0, %v1005
        %v1007 = vpop.f32.mrb[0].mxu0
        %1008 = vmatprep.mubr.f32.mxu0 0.0
        %1009 = vmatmul.mubr.f32.gmra.mrb[0].mxu0 %v901
        %v1010 = vpop.f32.mrb[0].mxu0
        %v1011 = vadd.f32 0.0, %v1010
        %v1012 = vpop.f32.mrb[0].mxu0
        %1013 = vmatprep.mubr.f32.mxu0 0.0
        %1014 = vmatmul.mubr.f32.gmra.mrb[0].mxu0 %v904
        %v1015 = vpop.f32.mrb[0].mxu0
        %v1016 = vadd.f32 0.0, %v1015
        %v1017 = vpop.f32.mrb[0].mxu0
        %1018 = vdwg.mxu0
        %v1019 = vmul.f32 %v991, 0.125
        %v1020 = vmul.f32 %v996, 0.125
        %v1021 = vmul.f32 %v1001, 0.125
        %v1022 = vmul.f32 %v1006, 0.125
        %v1023 = vmul.f32 %v1011, 0.125
        %v1024 = vmul.f32 %v1016, 0.125
        %vm1025 = vcmask 392192
        %v1026 = vsel %vm1025, %v1019, -inf
        %1027 = vmax.xlane.f32.xlu0 %v1026
        %v1028 = vpop.xlane.xlu0 %1027
        %v1029 = vsel %vm1025, %v1020, -inf
        %1030 = vmax.xlane.f32.xlu0 %v1029
        %v1031 = vpop.xlane.xlu0 %1030
        %v1032 = vsel %vm1025, %v1021, -inf
        %1033 = vmax.xlane.f32.xlu0 %v1032
        %v1034 = vpop.xlane.xlu0 %1033
        %v1035 = vsel %vm1025, %v1022, -inf
        %1036 = vmax.xlane.f32.xlu0 %v1035
        %v1037 = vpop.xlane.xlu0 %1036
        %v1038 = vsel %vm1025, %v1023, -inf
        %1039 = vmax.xlane.f32.xlu0 %v1038
        %v1040 = vpop.xlane.xlu0 %1039
        %v1041 = vsel %vm1025, %v1024, -inf
        %1042 = vmax.xlane.f32.xlu0 %v1041
        %v1043 = vpop.xlane.xlu0 %1042
        %v1044 = vsub.f32 %v1019, %v1028
        %v1045 = vsub.f32 %v1020, %v1031
        %v1046 = vsub.f32 %v1021, %v1034
        %v1047 = vsub.f32 %v1022, %v1037
        %v1048 = vsub.f32 %v1023, %v1040
        %v1049 = vsub.f32 %v1024, %v1043
        %v1050 = vmul.f32 %v1044, 1.442695
        %v1051 = vpow.pop %v1050
        %v1052 = vmul.f32 %v1045, 1.442695
        %v1053 = vpow.pop %v1052
        %v1054 = vmul.f32 %v1046, 1.442695
        %v1055 = vpow.pop %v1054
        %v1056 = vmul.f32 %v1047, 1.442695
        %v1057 = vpow.pop %v1056
        %v1058 = vmul.f32 %v1048, 1.442695
        %v1059 = vpow.pop %v1058
        %v1060 = vmul.f32 %v1049, 1.442695
        %v1061 = vpow.pop %v1060
        %v1062 = vsel %vm1025, %v1051, 0.0
        %1063 = vadd.xlane.f32.xlu0 %v1062
        %v1064 = vpop.xlane.xlu0 %1063
        %v1065 = vsel %vm1025, %v1053, 0.0
        %1066 = vadd.xlane.f32.xlu0 %v1065
        %v1067 = vpop.xlane.xlu0 %1066
        %v1068 = vsel %vm1025, %v1055, 0.0
        %1069 = vadd.xlane.f32.xlu0 %v1068
        %v1070 = vpop.xlane.xlu0 %1069
        %v1071 = vsel %vm1025, %v1057, 0.0
        %1072 = vadd.xlane.f32.xlu0 %v1071
        %v1073 = vpop.xlane.xlu0 %1072
        %v1074 = vsel %vm1025, %v1059, 0.0
        %1075 = vadd.xlane.f32.xlu0 %v1074
        %v1076 = vpop.xlane.xlu0 %1075
        %v1077 = vsel %vm1025, %v1061, 0.0
        %1078 = vadd.xlane.f32.xlu0 %v1077
        %v1079 = vpop.xlane.xlu0 %1078
        %v1080 = vrcp.pop %v1064
        %v1081 = vrcp.pop %v1067
        %v1082 = vrcp.pop %v1070
        %v1083 = vrcp.pop %v1073
        %v1084 = vrcp.pop %v1076
        %v1085 = vrcp.pop %v1079
        %v1086 = vmul.f32 %v1051, %v1080
        %v1087 = vmul.f32 %v1053, %v1081
        %v1088 = vmul.f32 %v1055, %v1082
        %v1089 = vmul.f32 %v1057, %v1083
        %v1090 = vmul.f32 %v1059, %v1084
        %v1091 = vmul.f32 %v1061, %v1085
        %v1093 = vsel %vm1025, %v1086, 0
        %v1096 = vsel %vm1025, %v1087, 0
        %v1099 = vsel %vm1025, %v1088, 0
        %v1102 = vsel %vm1025, %v1089, 0
        %v1105 = vsel %vm1025, %v1090, 0
        %v1108 = vsel %vm1025, %v1091, 0
        %1110 = vmatprep.subr.mxu0 0.0
        %1111 = vmatpush1.msra.mxu0 %v865
        %1112 = vmatprep.subr.mxu0 0.0
        %1113 = vmatpush1.msra.mxu0 %v868
        %1114 = vmatprep.subr.mxu0 0.0
        %1115 = vmatpush1.msra.mxu0 %v873
        %1116 = vmatprep.subr.mxu0 0.0
        %1117 = vmatpush1.msra.mxu0 %v876
        %1118 = vmatprep.subr.mxu0 0.0
        %1119 = vmatpush1.msra.mxu0 %v881
        %1120 = vmatprep.subr.mxu0 0.0
        %1121 = vmatpush1.msra.mxu0 %v884
        %1122 = vmatprep.subr.mxu0 0.0
        %1123 = vmatpush1.msra.mxu0 0.0
        %1124 = vmatprep.subr.mxu0 0.0
        %1125 = vmatpush1.msra.mxu0 0.0
        %1126 = vmatprep.subr.mxu0 0.0
        %1127 = vmatpush1.msra.mxu0 0.0
        %1128 = vmatprep.subr.mxu0 0.0
        %1129 = vmatpush1.msra.mxu0 0.0
        %1130 = vmatprep.subr.mxu0 0.0
        %1131 = vmatpush1.msra.mxu0 0.0
        %1132 = vmatprep.subr.mxu0 0.0
        %1133 = vmatpush1.msra.mxu0 0.0
        %1134 = vmatprep.subr.mxu0 0.0
        %1135 = vmatpush1.msra.mxu0 0.0
        %1136 = vmatprep.subr.mxu0 0.0
        %1137 = vmatpush1.msra.mxu0 0.0
        %1138 = vmatprep.subr.mxu0 0.0
        %1139 = vmatpush1.msra.mxu0 0.0
        %1140 = vmatprep.subr.mxu0 0.0
        %1141 = vmatpush1.msra.mxu0 0.0
        %1142 = vmatprep.subr.mxu0 0.0
        %1143 = vmatpush1.msra.mxu0 0.0
        %1144 = vmatprep.subr.mxu0 0.0
        %1145 = vmatpush1.msra.mxu0 0.0
        %1146 = vmatprep.subr.mxu0 0.0
        %1147 = vmatpush1.msra.mxu0 0.0
        %1148 = vmatprep.subr.mxu0 0.0
        %1149 = vmatpush1.msra.mxu0 0.0
        %1150 = vmatprep.subr.mxu0 0.0
        %1151 = vmatpush1.msra.mxu0 0.0
        %1152 = vmatprep.subr.mxu0 0.0
        %1153 = vmatpush1.msra.mxu0 0.0
        %1154 = vmatprep.subr.mxu0 0.0
        %1155 = vmatpush1.msra.mxu0 0.0
        %1156 = vmatprep.subr.mxu0 0.0
        %1157 = vmatpush1.msra.mxu0 0.0
        %1158 = vmatprep.subr.mxu0 0.0
        %1159 = vmatpush1.msra.mxu0 0.0
        %1160 = vmatprep.subr.mxu0 0.0
        %1161 = vmatpush1.msra.mxu0 0.0
        %1162 = vmatprep.subr.mxu0 0.0
        %1163 = vmatpush1.msra.mxu0 0.0
        %1164 = vmatprep.subr.mxu0 0.0
        %1165 = vmatpush1.msra.mxu0 0.0
        %1166 = vmatprep.subr.mxu0 0.0
        %1167 = vmatpush1.msra.mxu0 0.0
        %1168 = vmatprep.subr.mxu0 0.0
        %1169 = vmatpush1.msra.mxu0 0.0
        %1170 = vmatprep.subr.mxu0 0.0
        %1171 = vmatpush1.msra.mxu0 0.0
        %1172 = vmatprep.subr.mxu0 0.0
        %1173 = vmatpush1.msra.mxu0 0.0
        %1174 = vmatprep.mubr.f32.mxu0 0.0
        %1175 = vmatmul.mubr.f32.gmra.mrb[0].mxu0 %v1093
        %v1176 = vpop.f32.mrb[0].mxu0
        %v1177 = vadd.f32 0.0, %v1176
        %v1178 = vpop.f32.mrb[0].mxu0
        %1179 = vmatprep.mubr.f32.mxu0 0.0
        %1180 = vmatmul.mubr.f32.gmra.mrb[0].mxu0 %v1096
        %v1181 = vpop.f32.mrb[0].mxu0
        %v1182 = vadd.f32 0.0, %v1181
        %v1183 = vpop.f32.mrb[0].mxu0
        %1184 = vmatprep.mubr.f32.mxu0 0.0
        %1185 = vmatmul.mubr.f32.gmra.mrb[0].mxu0 %v1099
        %v1186 = vpop.f32.mrb[0].mxu0
        %v1187 = vadd.f32 0.0, %v1186
        %v1188 = vpop.f32.mrb[0].mxu0
        %1189 = vmatprep.mubr.f32.mxu0 0.0
        %1190 = vmatmul.mubr.f32.gmra.mrb[0].mxu0 %v1102
        %v1191 = vpop.f32.mrb[0].mxu0
        %v1192 = vadd.f32 0.0, %v1191
        %v1193 = vpop.f32.mrb[0].mxu0
        %1194 = vmatprep.mubr.f32.mxu0 0.0
        %1195 = vmatmul.mubr.f32.gmra.mrb[0].mxu0 %v1105
        %v1196 = vpop.f32.mrb[0].mxu0
        %v1197 = vadd.f32 0.0, %v1196
        %v1198 = vpop.f32.mrb[0].mxu0
        %1199 = vmatprep.mubr.f32.mxu0 0.0
        %1200 = vmatmul.mubr.f32.gmra.mrb[0].mxu0 %v1108
        %v1201 = vpop.f32.mrb[0].mxu0
        %v1202 = vadd.f32 0.0, %v1201
        %v1203 = vpop.f32.mrb[0].mxu0
        %1204 = vdwg.mxu0
        %1205 = vrot.lane.b32.xlu0 %v802, 64
        %v1206 = vpop.permute.xlu0 %1205
        %1207 = vrot.lane.b32.xlu0 %v806, 64
        %v1208 = vpop.permute.xlu0 %1207
        %1209 = vrot.lane.b32.xlu0 %v812, 64
        %v1210 = vpop.permute.xlu0 %1209
        %1211 = vrot.lane.b32.xlu0 %v816, 64
        %v1212 = vpop.permute.xlu0 %1211
        %1213 = vrot.lane.b32.xlu0 %v822, 64
        %v1214 = vpop.permute.xlu0 %1213
        %1215 = vrot.lane.b32.xlu0 %v826, 64
        %v1216 = vpop.permute.xlu0 %1215
        %1217 = vrot.lane.b32.xlu0 %v804, 64
        %v1218 = vpop.permute.xlu0 %1217
        %1219 = vrot.lane.b32.xlu0 %v808, 64
        %v1220 = vpop.permute.xlu0 %1219
        %1221 = vrot.lane.b32.xlu0 %v814, 64
        %v1222 = vpop.permute.xlu0 %1221
        %1223 = vrot.lane.b32.xlu0 %v818, 64
        %v1224 = vpop.permute.xlu0 %1223
        %1225 = vrot.lane.b32.xlu0 %v824, 64
        %v1226 = vpop.permute.xlu0 %1225
        %1227 = vrot.lane.b32.xlu0 %v828, 64
        %v1228 = vpop.permute.xlu0 %1227
        %v1229 = vsel %vm887, %v1206, 0
        %v1231 = vsel %vm887, %v1208, 0
        %v1233 = vsel %vm887, %v1210, 0
        %v1235 = vsel %vm887, %v1212, 0
        %v1237 = vsel %vm887, %v1214, 0
        %v1239 = vsel %vm887, %v1216, 0
        %v1241 = vsel %vm887, %v1218, 0
        %v1243 = vsel %vm887, %v1220, 0
        %v1245 = vsel %vm887, %v1222, 0
        %v1247 = vsel %vm887, %v1224, 0
        %v1249 = vsel %vm887, %v1226, 0
        %v1251 = vsel %vm887, %v1228, 0
        %1253 = vmatprep.subr.mxu0 0.0
        %1254 = vmatpush1.xpose.msra.mxu0 %v1241
        %1255 = vmatprep.subr.mxu0 0.0
        %1256 = vmatpush1.xpose.msra.mxu0 %v1243
        %1257 = vmatprep.subr.mxu0 0.0
        %1258 = vmatpush1.xpose.msra.mxu0 %v1245
        %1259 = vmatprep.subr.mxu0 0.0
        %1260 = vmatpush1.xpose.msra.mxu0 %v1247
        %1261 = vmatprep.subr.mxu0 0.0
        %1262 = vmatpush1.xpose.msra.mxu0 %v1249
        %1263 = vmatprep.subr.mxu0 0.0
        %1264 = vmatpush1.xpose.msra.mxu0 %v1251
        %1265 = vmatprep.subr.mxu0 0.0
        %1266 = vmatpush1.xpose.msra.mxu0 0.0
        %1267 = vmatprep.subr.mxu0 0.0
        %1268 = vmatpush1.xpose.msra.mxu0 0.0
        %1269 = vmatprep.subr.mxu0 0.0
        %1270 = vmatpush1.xpose.msra.mxu0 0.0
        %1271 = vmatprep.subr.mxu0 0.0
        %1272 = vmatpush1.xpose.msra.mxu0 0.0
        %1273 = vmatprep.subr.mxu0 0.0
        %1274 = vmatpush1.xpose.msra.mxu0 0.0
        %1275 = vmatprep.subr.mxu0 0.0
        %1276 = vmatpush1.xpose.msra.mxu0 0.0
        %1277 = vmatprep.subr.mxu0 0.0
        %1278 = vmatpush1.xpose.msra.mxu0 0.0
        %1279 = vmatprep.subr.mxu0 0.0
        %1280 = vmatpush1.xpose.msra.mxu0 0.0
        %1281 = vmatprep.subr.mxu0 0.0
        %1282 = vmatpush1.xpose.msra.mxu0 0.0
        %1283 = vmatprep.subr.mxu0 0.0
        %1284 = vmatpush1.xpose.msra.mxu0 0.0
        %1285 = vmatprep.subr.mxu0 0.0
        %1286 = vmatpush1.xpose.msra.mxu0 0.0
        %1287 = vmatprep.subr.mxu0 0.0
        %1288 = vmatpush1.xpose.msra.mxu0 0.0
        %1289 = vmatprep.subr.mxu0 0.0
        %1290 = vmatpush1.xpose.msra.mxu0 0.0
        %1291 = vmatprep.subr.mxu0 0.0
        %1292 = vmatpush1.xpose.msra.mxu0 0.0
        %1293 = vmatprep.subr.mxu0 0.0
        %1294 = vmatpush1.xpose.msra.mxu0 0.0
        %1295 = vmatprep.subr.mxu0 0.0
        %1296 = vmatpush1.xpose.msra.mxu0 0.0
        %1297 = vmatprep.subr.mxu0 0.0
        %1298 = vmatpush1.xpose.msra.mxu0 0.0
        %1299 = vmatprep.subr.mxu0 0.0
        %1300 = vmatpush1.xpose.msra.mxu0 0.0
        %1301 = vmatprep.subr.mxu0 0.0
        %1302 = vmatpush1.xpose.msra.mxu0 0.0
        %1303 = vmatprep.subr.mxu0 0.0
        %1304 = vmatpush1.xpose.msra.mxu0 0.0
        %1305 = vmatprep.subr.mxu0 0.0
        %1306 = vmatpush1.xpose.msra.mxu0 0.0
        %1307 = vmatprep.subr.mxu0 0.0
        %1308 = vmatpush1.xpose.msra.mxu0 0.0
        %1309 = vmatprep.subr.mxu0 0.0
        %1310 = vmatpush1.xpose.msra.mxu0 0.0
        %1311 = vmatprep.subr.mxu0 0.0
        %1312 = vmatpush1.xpose.msra.mxu0 0.0
        %1313 = vmatprep.subr.mxu0 0.0
        %1314 = vmatpush1.xpose.msra.mxu0 0.0
        %1315 = vmatprep.subr.mxu0 0.0
        %1316 = vmatpush1.xpose.msra.mxu0 0.0
        %1317 = vmatprep.mubr.f32.mxu0 0.0
        %1318 = vmatmul.mubr.f32.gmra.mrb[0].mxu0 %v1229
        %v1319 = vpop.f32.mrb[0].mxu0
        %v1320 = vadd.f32 0.0, %v1319
        %v1321 = vpop.f32.mrb[0].mxu0
        %1322 = vmatprep.mubr.f32.mxu0 0.0
        %1323 = vmatmul.mubr.f32.gmra.mrb[0].mxu0 %v1231
        %v1324 = vpop.f32.mrb[0].mxu0
        %v1325 = vadd.f32 0.0, %v1324
        %v1326 = vpop.f32.mrb[0].mxu0
        %1327 = vmatprep.mubr.f32.mxu0 0.0
        %1328 = vmatmul.mubr.f32.gmra.mrb[0].mxu0 %v1233
        %v1329 = vpop.f32.mrb[0].mxu0
        %v1330 = vadd.f32 0.0, %v1329
        %v1331 = vpop.f32.mrb[0].mxu0
        %1332 = vmatprep.mubr.f32.mxu0 0.0
        %1333 = vmatmul.mubr.f32.gmra.mrb[0].mxu0 %v1235
        %v1334 = vpop.f32.mrb[0].mxu0
        %v1335 = vadd.f32 0.0, %v1334
        %v1336 = vpop.f32.mrb[0].mxu0
        %1337 = vmatprep.mubr.f32.mxu0 0.0
        %1338 = vmatmul.mubr.f32.gmra.mrb[0].mxu0 %v1237
        %v1339 = vpop.f32.mrb[0].mxu0
        %v1340 = vadd.f32 0.0, %v1339
        %v1341 = vpop.f32.mrb[0].mxu0
        %1342 = vmatprep.mubr.f32.mxu0 0.0
        %1343 = vmatmul.mubr.f32.gmra.mrb[0].mxu0 %v1239
        %v1344 = vpop.f32.mrb[0].mxu0
        %v1345 = vadd.f32 0.0, %v1344
        %v1346 = vpop.f32.mrb[0].mxu0
        %1347 = vdwg.mxu0
        %v1348 = vmul.f32 %v1320, 0.125
        %v1349 = vmul.f32 %v1325, 0.125
        %v1350 = vmul.f32 %v1330, 0.125
        %v1351 = vmul.f32 %v1335, 0.125
        %v1352 = vmul.f32 %v1340, 0.125
        %v1353 = vmul.f32 %v1345, 0.125
        %v1354 = vsel %vm1025, %v1348, -inf
        %1355 = vmax.xlane.f32.xlu0 %v1354
        %v1356 = vpop.xlane.xlu0 %1355
        %v1357 = vsel %vm1025, %v1349, -inf
        %1358 = vmax.xlane.f32.xlu0 %v1357
        %v1359 = vpop.xlane.xlu0 %1358
        %v1360 = vsel %vm1025, %v1350, -inf
        %1361 = vmax.xlane.f32.xlu0 %v1360
        %v1362 = vpop.xlane.xlu0 %1361
        %v1363 = vsel %vm1025, %v1351, -inf
        %1364 = vmax.xlane.f32.xlu0 %v1363
        %v1365 = vpop.xlane.xlu0 %1364
        %v1366 = vsel %vm1025, %v1352, -inf
        %1367 = vmax.xlane.f32.xlu0 %v1366
        %v1368 = vpop.xlane.xlu0 %1367
        %v1369 = vsel %vm1025, %v1353, -inf
        %1370 = vmax.xlane.f32.xlu0 %v1369
        %v1371 = vpop.xlane.xlu0 %1370
        %v1372 = vsub.f32 %v1348, %v1356
        %v1373 = vsub.f32 %v1349, %v1359
        %v1374 = vsub.f32 %v1350, %v1362
        %v1375 = vsub.f32 %v1351, %v1365
        %v1376 = vsub.f32 %v1352, %v1368
        %v1377 = vsub.f32 %v1353, %v1371
        %v1378 = vmul.f32 %v1372, 1.442695
        %v1379 = vpow.pop %v1378
        %v1380 = vmul.f32 %v1373, 1.442695
        %v1381 = vpow.pop %v1380
        %v1382 = vmul.f32 %v1374, 1.442695
        %v1383 = vpow.pop %v1382
        %v1384 = vmul.f32 %v1375, 1.442695
        %v1385 = vpow.pop %v1384
        %v1386 = vmul.f32 %v1376, 1.442695
        %v1387 = vpow.pop %v1386
        %v1388 = vmul.f32 %v1377, 1.442695
        %v1389 = vpow.pop %v1388
        %v1390 = vsel %vm1025, %v1379, 0.0
        %1391 = vadd.xlane.f32.xlu0 %v1390
        %v1392 = vpop.xlane.xlu0 %1391
        %v1393 = vsel %vm1025, %v1381, 0.0
        %1394 = vadd.xlane.f32.xlu0 %v1393
        %v1395 = vpop.xlane.xlu0 %1394
        %v1396 = vsel %vm1025, %v1383, 0.0
        %1397 = vadd.xlane.f32.xlu0 %v1396
        %v1398 = vpop.xlane.xlu0 %1397
        %v1399 = vsel %vm1025, %v1385, 0.0
        %1400 = vadd.xlane.f32.xlu0 %v1399
        %v1401 = vpop.xlane.xlu0 %1400
        %v1402 = vsel %vm1025, %v1387, 0.0
        %1403 = vadd.xlane.f32.xlu0 %v1402
        %v1404 = vpop.xlane.xlu0 %1403
        %v1405 = vsel %vm1025, %v1389, 0.0
        %1406 = vadd.xlane.f32.xlu0 %v1405
        %v1407 = vpop.xlane.xlu0 %1406
        %v1408 = vrcp.pop %v1392
        %v1409 = vrcp.pop %v1395
        %v1410 = vrcp.pop %v1398
        %v1411 = vrcp.pop %v1401
        %v1412 = vrcp.pop %v1404
        %v1413 = vrcp.pop %v1407
        %v1414 = vmul.f32 %v1379, %v1408
        %v1415 = vmul.f32 %v1381, %v1409
        %v1416 = vmul.f32 %v1383, %v1410
        %v1417 = vmul.f32 %v1385, %v1411
        %v1418 = vmul.f32 %v1387, %v1412
        %v1419 = vmul.f32 %v1389, %v1413
        %1426 = vrot.lane.b32.xlu0 %v865, 64
        %v1427 = vpop.permute.xlu0 %1426
        %1428 = vrot.lane.b32.xlu0 %v868, 64
        %v1429 = vpop.permute.xlu0 %1428
        %1430 = vrot.lane.b32.xlu0 %v873, 64
        %v1431 = vpop.permute.xlu0 %1430
        %1432 = vrot.lane.b32.xlu0 %v876, 64
        %v1433 = vpop.permute.xlu0 %1432
        %1434 = vrot.lane.b32.xlu0 %v881, 64
        %v1435 = vpop.permute.xlu0 %1434
        %1436 = vrot.lane.b32.xlu0 %v884, 64
        %v1437 = vpop.permute.xlu0 %1436
        %v1445 = vsel %vm1025, %v1414, 0
        %v1448 = vsel %vm1025, %v1415, 0
        %v1451 = vsel %vm1025, %v1416, 0
        %v1454 = vsel %vm1025, %v1417, 0
        %v1457 = vsel %vm1025, %v1418, 0
        %v1460 = vsel %vm1025, %v1419, 0
        %1462 = vmatprep.subr.mxu0 0.0
        %1463 = vmatpush1.msra.mxu0 %v1427
        %1464 = vmatprep.subr.mxu0 0.0
        %1465 = vmatpush1.msra.mxu0 %v1429
        %1466 = vmatprep.subr.mxu0 0.0
        %1467 = vmatpush1.msra.mxu0 %v1431
        %1468 = vmatprep.subr.mxu0 0.0
        %1469 = vmatpush1.msra.mxu0 %v1433
        %1470 = vmatprep.subr.mxu0 0.0
        %1471 = vmatpush1.msra.mxu0 %v1435
        %1472 = vmatprep.subr.mxu0 0.0
        %1473 = vmatpush1.msra.mxu0 %v1437
        %1474 = vmatprep.subr.mxu0 0.0
        %1475 = vmatpush1.msra.mxu0 0.0
        %1476 = vmatprep.subr.mxu0 0.0
        %1477 = vmatpush1.msra.mxu0 0.0
        %1478 = vmatprep.subr.mxu0 0.0
        %1479 = vmatpush1.msra.mxu0 0.0
        %1480 = vmatprep.subr.mxu0 0.0
        %1481 = vmatpush1.msra.mxu0 0.0
        %1482 = vmatprep.subr.mxu0 0.0
        %1483 = vmatpush1.msra.mxu0 0.0
        %1484 = vmatprep.subr.mxu0 0.0
        %1485 = vmatpush1.msra.mxu0 0.0
        %1486 = vmatprep.subr.mxu0 0.0
        %1487 = vmatpush1.msra.mxu0 0.0
        %1488 = vmatprep.subr.mxu0 0.0
        %1489 = vmatpush1.msra.mxu0 0.0
        %1490 = vmatprep.subr.mxu0 0.0
        %1491 = vmatpush1.msra.mxu0 0.0
        %1492 = vmatprep.subr.mxu0 0.0
        %1493 = vmatpush1.msra.mxu0 0.0
        %1494 = vmatprep.subr.mxu0 0.0
        %1495 = vmatpush1.msra.mxu0 0.0
        %1496 = vmatprep.subr.mxu0 0.0
        %1497 = vmatpush1.msra.mxu0 0.0
        %1498 = vmatprep.subr.mxu0 0.0
        %1499 = vmatpush1.msra.mxu0 0.0
        %1500 = vmatprep.subr.mxu0 0.0
        %1501 = vmatpush1.msra.mxu0 0.0
        %1502 = vmatprep.subr.mxu0 0.0
        %1503 = vmatpush1.msra.mxu0 0.0
        %1504 = vmatprep.subr.mxu0 0.0
        %1505 = vmatpush1.msra.mxu0 0.0
        %1506 = vmatprep.subr.mxu0 0.0
        %1507 = vmatpush1.msra.mxu0 0.0
        %1508 = vmatprep.subr.mxu0 0.0
        %1509 = vmatpush1.msra.mxu0 0.0
        %1510 = vmatprep.subr.mxu0 0.0
        %1511 = vmatpush1.msra.mxu0 0.0
        %1512 = vmatprep.subr.mxu0 0.0
        %1513 = vmatpush1.msra.mxu0 0.0
        %1514 = vmatprep.subr.mxu0 0.0
        %1515 = vmatpush1.msra.mxu0 0.0
        %1516 = vmatprep.subr.mxu0 0.0
        %1517 = vmatpush1.msra.mxu0 0.0
        %1518 = vmatprep.subr.mxu0 0.0
        %1519 = vmatpush1.msra.mxu0 0.0
        %1520 = vmatprep.subr.mxu0 0.0
        %1521 = vmatpush1.msra.mxu0 0.0
        %1522 = vmatprep.subr.mxu0 0.0
        %1523 = vmatpush1.msra.mxu0 0.0
        %1524 = vmatprep.subr.mxu0 0.0
        %1525 = vmatpush1.msra.mxu0 0.0
        %1526 = vmatprep.mubr.f32.mxu0 0.0
        %1527 = vmatmul.mubr.f32.gmra.mrb[0].mxu0 %v1445
        %v1528 = vpop.f32.mrb[0].mxu0
        %v1529 = vadd.f32 0.0, %v1528
        %v1530 = vpop.f32.mrb[0].mxu0
        %1531 = vmatprep.mubr.f32.mxu0 0.0
        %1532 = vmatmul.mubr.f32.gmra.mrb[0].mxu0 %v1448
        %v1533 = vpop.f32.mrb[0].mxu0
        %v1534 = vadd.f32 0.0, %v1533
        %v1535 = vpop.f32.mrb[0].mxu0
        %1536 = vmatprep.mubr.f32.mxu0 0.0
        %1537 = vmatmul.mubr.f32.gmra.mrb[0].mxu0 %v1451
        %v1538 = vpop.f32.mrb[0].mxu0
        %v1539 = vadd.f32 0.0, %v1538
        %v1540 = vpop.f32.mrb[0].mxu0
        %1541 = vmatprep.mubr.f32.mxu0 0.0
        %1542 = vmatmul.mubr.f32.gmra.mrb[0].mxu0 %v1454
        %v1543 = vpop.f32.mrb[0].mxu0
        %v1544 = vadd.f32 0.0, %v1543
        %v1545 = vpop.f32.mrb[0].mxu0
        %1546 = vmatprep.mubr.f32.mxu0 0.0
        %1547 = vmatmul.mubr.f32.gmra.mrb[0].mxu0 %v1457
        %v1548 = vpop.f32.mrb[0].mxu0
        %v1549 = vadd.f32 0.0, %v1548
        %v1550 = vpop.f32.mrb[0].mxu0
        %1551 = vmatprep.mubr.f32.mxu0 0.0
        %1552 = vmatmul.mubr.f32.gmra.mrb[0].mxu0 %v1460
        %v1553 = vpop.f32.mrb[0].mxu0
        %v1554 = vadd.f32 0.0, %v1553
        %v1555 = vpop.f32.mrb[0].mxu0
        %1556 = vdwg.mxu0
        %1563 = vrot.lane.b32.xlu0 %v1529, 64
        %v1564 = vpop.permute.xlu0 %1563
        %1565 = vrot.lane.b32.xlu0 %v1534, 64
        %v1566 = vpop.permute.xlu0 %1565
        %1567 = vrot.lane.b32.xlu0 %v1539, 64
        %v1568 = vpop.permute.xlu0 %1567
        %1569 = vrot.lane.b32.xlu0 %v1544, 64
        %v1570 = vpop.permute.xlu0 %1569
        %1571 = vrot.lane.b32.xlu0 %v1549, 64
        %v1572 = vpop.permute.xlu0 %1571
        %1573 = vrot.lane.b32.xlu0 %v1554, 64
        %v1574 = vpop.permute.xlu0 %1573
        %v1581 = vsel %vm887, %v1177, %v1564
        %v1582 = vsel %vm887, %v1182, %v1566
        %v1583 = vsel %vm887, %v1187, %v1568
        %v1584 = vsel %vm887, %v1192, %v1570
        %v1585 = vsel %vm887, %v1197, %v1572
        %v1586 = vsel %vm887, %v1202, %v1574
        %v1587 = vld [vmem:[#allocation10] sm:$0xf]
        %v1588 = vld [vmem:[#allocation10 + $0x4] sm:$0xf]
        %v1589 = vld [vmem:[#allocation10 + $0x8] sm:$0xf]
        %v1590 = vld [vmem:[#allocation10 + $0xc] sm:$0xf]
        %v1591 = vld [vmem:[#allocation10 + $0x10] sm:$0xf]
        %v1592 = vld [vmem:[#allocation10 + $0x14] sm:$0xf]
        %v1593 = vld [vmem:[#allocation10 + $0x18] sm:$0xf]
        %v1594 = vld [vmem:[#allocation10 + $0x1c] sm:$0xf]
        %v1595 = vld [vmem:[#allocation10 + $0x20] sm:$0xf]
        %v1596 = vld [vmem:[#allocation10 + $0x24] sm:$0xf]
        %v1597 = vld [vmem:[#allocation10 + $0x28] sm:$0xf]
        %v1598 = vld [vmem:[#allocation10 + $0x2c] sm:$0xf]
        %v1599 = vld [vmem:[#allocation10 + $0x30] sm:$0xf]
        %v1600 = vld [vmem:[#allocation10 + $0x34] sm:$0xf]
        %v1601 = vld [vmem:[#allocation10 + $0x38] sm:$0xf]
        %v1602 = vld [vmem:[#allocation10 + $0x3c] sm:$0xf]
        %v1603 = vpack.c.bf16 %v1582, %v1581
        %v1604 = vpack.c.bf16 %v1584, %v1583
        %v1605 = vpack.c.bf16 %v1586, %v1585
        %v1606 = vld [vmem:[#allocation11] sm:$0x1]
        %v1608 = vlaneseq
        %v1609 = vshrl.u32 %v1608, 7
        %v1610 = vsub.s32 0, %v1609
        %v1611 = vrot.slane %v1606, %v1610
        %v1629 = vunpack.c.l.b16 %v1587
        %v1630 = vunpack.c.l.b16 %v1588
        %v1631 = vunpack.c.l.b16 %v1589
        %v1632 = vunpack.c.l.b16 %v1590
        %v1633 = vunpack.c.l.b16 %v1591
        %v1634 = vunpack.c.l.b16 %v1592
        %v1635 = vunpack.c.l.b16 %v1593
        %v1636 = vunpack.c.l.b16 %v1594
        %v1637 = vunpack.c.l.b16 %v1595
        %v1638 = vunpack.c.l.b16 %v1596
        %v1639 = vunpack.c.l.b16 %v1597
        %v1640 = vunpack.c.l.b16 %v1598
        %v1641 = vunpack.c.l.b16 %v1599
        %v1642 = vunpack.c.l.b16 %v1600
        %v1643 = vunpack.c.l.b16 %v1601
        %v1644 = vunpack.c.l.b16 %v1602
        %v1645 = vpack.c.b16 %v1630, %v1629
        %v1646 = vpack.c.b16 %v1632, %v1631
        %v1647 = vpack.c.b16 %v1634, %v1633
        %v1648 = vpack.c.b16 %v1636, %v1635
        %v1649 = vpack.c.b16 %v1638, %v1637
        %v1650 = vpack.c.b16 %v1640, %v1639
        %v1651 = vpack.c.b16 %v1642, %v1641
        %v1652 = vpack.c.b16 %v1644, %v1643
        %1661 = vmatprep.subr.bf16.mxu0 0
        %1662 = vmatpush1.bf16.msra.mxu0 %v1645
        %1663 = vmatprep.subr.bf16.mxu0 0
        %1664 = vmatpush1.bf16.msra.mxu0 %v1646
        %1665 = vmatprep.subr.bf16.mxu0 0
        %1666 = vmatpush1.bf16.msra.mxu0 %v1647
        %1667 = vmatprep.subr.bf16.mxu0 0
        %1668 = vmatpush1.bf16.msra.mxu0 %v1648
        %1669 = vmatprep.subr.bf16.mxu0 0
        %1670 = vmatpush1.bf16.msra.mxu0 %v1649
        %1671 = vmatprep.subr.bf16.mxu0 0
        %1672 = vmatpush1.bf16.msra.mxu0 %v1650
        %1673 = vmatprep.subr.bf16.mxu0 0
        %1674 = vmatpush1.bf16.msra.mxu0 %v1651
        %1675 = vmatprep.subr.bf16.mxu0 0
        %1676 = vmatpush1.bf16.msra.mxu0 %v1652
        %1677 = vmatprep.subr.bf16.mxu0 0
        %1678 = vmatpush1.bf16.msra.mxu0 0
        %1679 = vmatprep.subr.bf16.mxu0 0
        %1680 = vmatpush1.bf16.msra.mxu0 0
        %1681 = vmatprep.subr.bf16.mxu0 0
        %1682 = vmatpush1.bf16.msra.mxu0 0
        %1683 = vmatprep.subr.bf16.mxu0 0
        %1684 = vmatpush1.bf16.msra.mxu0 0
        %1685 = vmatprep.subr.bf16.mxu0 0
        %1686 = vmatpush1.bf16.msra.mxu0 0
        %1687 = vmatprep.subr.bf16.mxu0 0
        %1688 = vmatpush1.bf16.msra.mxu0 0
        %1689 = vmatprep.subr.bf16.mxu0 0
        %1690 = vmatpush1.bf16.msra.mxu0 0
        %1691 = vmatprep.subr.bf16.mxu0 0
        %1692 = vmatpush1.bf16.msra.mxu0 0
        %1693 = vmatprep.mubr.bf16.mxu0 0
        %1694 = vmatmul.mubr.bf16.gmra.mrb[0].mxu0 %v1603
        %v1695 = vpop.f32.mrb[0].mxu0
        %v1696 = vadd.f32 %v1611, %v1695
        %v1697 = vpop.f32.mrb[0].mxu0
        %v1698 = vpop.f32.mrb[0].mxu0
        %v1699 = vadd.f32 %v1611, %v1698
        %v1700 = vpop.f32.mrb[0].mxu0
        %1701 = vmatprep.mubr.bf16.mxu0 0
        %1702 = vmatmul.mubr.bf16.gmra.mrb[0].mxu0 %v1604
        %v1703 = vpop.f32.mrb[0].mxu0
        %v1704 = vadd.f32 %v1611, %v1703
        %v1705 = vpop.f32.mrb[0].mxu0
        %v1706 = vpop.f32.mrb[0].mxu0
        %v1707 = vadd.f32 %v1611, %v1706
        %v1708 = vpop.f32.mrb[0].mxu0
        %1709 = vmatprep.mubr.bf16.mxu0 0
        %1710 = vmatmul.mubr.bf16.gmra.mrb[0].mxu0 %v1605
        %v1711 = vpop.f32.mrb[0].mxu0
        %v1712 = vadd.f32 %v1611, %v1711
        %v1713 = vpop.f32.mrb[0].mxu0
        %v1714 = vpop.f32.mrb[0].mxu0
        %v1715 = vadd.f32 %v1611, %v1714
        %v1716 = vpop.f32.mrb[0].mxu0
        %1717 = vdwg.mxu0
        %v1718 = vld [vmem:[#allocation19] sm:$0xf]
        %v1719 = vadd.f32 %v577, %v1696
        %v1720 = vadd.f32 %v578, %v1699
        %v1721 = vadd.f32 %v583, %v1704
        %v1722 = vadd.f32 %v584, %v1707
        %v1723 = vadd.f32 %v585, %v1712
        %v1724 = vadd.f32 %v586, %v1715
        %1725 = vadd.xlane.f32.xlu0 %v1719
        %v1726 = vpop.xlane.xlu0 %1725
        %1727 = vadd.xlane.f32.xlu0 %v1720
        %v1728 = vpop.xlane.xlu0 %1727
        %1729 = vadd.xlane.f32.xlu0 %v1721
        %v1730 = vpop.xlane.xlu0 %1729
        %1731 = vadd.xlane.f32.xlu0 %v1722
        %v1732 = vpop.xlane.xlu0 %1731
        %1733 = vadd.xlane.f32.xlu0 %v1723
        %v1734 = vpop.xlane.xlu0 %1733
        %1735 = vadd.xlane.f32.xlu0 %v1724
        %v1736 = vpop.xlane.xlu0 %1735
        %v1737 = vrcp.pop 128.0
        %v1738 = vmul.f32 %v1726, %v1737
        %v1739 = vmul.f32 %v1728, %v1737
        %v1740 = vmul.f32 %v1730, %v1737
        %v1741 = vmul.f32 %v1732, %v1737
        %v1742 = vmul.f32 %v1734, %v1737
        %v1743 = vmul.f32 %v1736, %v1737
        %v1744 = vsub.f32 %v1719, %v1738
        %v1745 = vsub.f32 %v1720, %v1739
        %v1746 = vsub.f32 %v1721, %v1740
        %v1747 = vsub.f32 %v1722, %v1741
        %v1748 = vsub.f32 %v1723, %v1742
        %v1749 = vsub.f32 %v1724, %v1743
        %v1750 = vmul.f32 %v1744, %v1744
        %v1751 = vmul.f32 %v1745, %v1745
        %v1752 = vmul.f32 %v1746, %v1746
        %v1753 = vmul.f32 %v1747, %v1747
        %v1754 = vmul.f32 %v1748, %v1748
        %v1755 = vmul.f32 %v1749, %v1749
        %1756 = vadd.xlane.f32.xlu0 %v1750
        %v1757 = vpop.xlane.xlu0 %1756
        %1758 = vadd.xlane.f32.xlu0 %v1751
        %v1759 = vpop.xlane.xlu0 %1758
        %1760 = vadd.xlane.f32.xlu0 %v1752
        %v1761 = vpop.xlane.xlu0 %1760
        %1762 = vadd.xlane.f32.xlu0 %v1753
        %v1763 = vpop.xlane.xlu0 %1762
        %1764 = vadd.xlane.f32.xlu0 %v1754
        %v1765 = vpop.xlane.xlu0 %1764
        %1766 = vadd.xlane.f32.xlu0 %v1755
        %v1767 = vpop.xlane.xlu0 %1766
        %v1768 = vmul.f32 %v1757, %v1737
        %v1769 = vmul.f32 %v1759, %v1737
        %v1770 = vmul.f32 %v1761, %v1737
        %v1771 = vmul.f32 %v1763, %v1737
        %v1772 = vmul.f32 %v1765, %v1737
        %v1773 = vmul.f32 %v1767, %v1737
        %v1774 = vadd.f32 %v1768, 1e-12
        %v1775 = vadd.f32 %v1769, 1e-12
        %v1776 = vadd.f32 %v1770, 1e-12
        %v1777 = vadd.f32 %v1771, 1e-12
        %v1778 = vadd.f32 %v1772, 1e-12
        %v1779 = vadd.f32 %v1773, 1e-12
        %v1780 = vrsqrt.pop %v1774
        %v1781 = vrsqrt.pop %v1775
        %v1782 = vrsqrt.pop %v1776
        %v1783 = vrsqrt.pop %v1777
        %v1784 = vrsqrt.pop %v1778
        %v1785 = vrsqrt.pop %v1779
        %v1786 = vmul.f32 %v1744, %v1780
        %v1787 = vmul.f32 %v1745, %v1781
        %v1788 = vmul.f32 %v1746, %v1782
        %v1789 = vmul.f32 %v1747, %v1783
        %v1790 = vmul.f32 %v1748, %v1784
        %v1791 = vmul.f32 %v1749, %v1785
        %v1792 = vlaneseq
        %v1793 = vshrl.u32 %v1792, 7
        %v1794 = vsub.s32 0, %v1793
        %v1795 = vrot.slane %v1718, %v1794
        %v1796 = vmul.f32 %v1786, %v1795
        %v1797 = vmul.f32 %v1787, %v1795
        %v1798 = vmul.f32 %v1788, %v1795
        %v1799 = vmul.f32 %v1789, %v1795
        %v1800 = vmul.f32 %v1790, %v1795
        %v1801 = vmul.f32 %v1791, %v1795
        %v1802 = vlaneseq
        %v1803 = vshrl.u32 %v1802, 7
        %v1804 = vsub.s32 1, %v1803
        %v1805 = vrot.slane %v1718, %v1804
        %v1806 = vadd.f32 %v1796, %v1805
        %v1807 = vadd.f32 %v1797, %v1805
        %v1808 = vadd.f32 %v1798, %v1805
        %v1809 = vadd.f32 %v1799, %v1805
        %v1810 = vadd.f32 %v1800, %v1805
        %v1811 = vadd.f32 %v1801, %v1805
        %v1812 = vld [vmem:[#allocation13] sm:$0xff]
        %v1813 = vld [vmem:[#allocation13 + $0x8] sm:$0xff]
        %v1814 = vld [vmem:[#allocation13 + $0x10] sm:$0xff]
        %v1815 = vld [vmem:[#allocation13 + $0x18] sm:$0xff]
        %v1816 = vld [vmem:[#allocation13 + $0x20] sm:$0xff]
        %v1817 = vld [vmem:[#allocation13 + $0x28] sm:$0xff]
        %v1818 = vld [vmem:[#allocation13 + $0x30] sm:$0xff]
        %v1819 = vld [vmem:[#allocation13 + $0x38] sm:$0xff]
        %v1820 = vld [vmem:[#allocation13 + $0x40] sm:$0xff]
        %v1821 = vld [vmem:[#allocation13 + $0x48] sm:$0xff]
        %v1822 = vld [vmem:[#allocation13 + $0x50] sm:$0xff]
        %v1823 = vld [vmem:[#allocation13 + $0x58] sm:$0xff]
        %v1824 = vld [vmem:[#allocation13 + $0x60] sm:$0xff]
        %v1825 = vld [vmem:[#allocation13 + $0x68] sm:$0xff]
        %v1826 = vld [vmem:[#allocation13 + $0x70] sm:$0xff]
        %v1827 = vld [vmem:[#allocation13 + $0x78] sm:$0xff]
        %v1828 = vpack.c.bf16 %v1807, %v1806
        %v1829 = vpack.c.bf16 %v1809, %v1808
        %v1830 = vpack.c.bf16 %v1811, %v1810
        %v1831 = vld [vmem:[#allocation14] sm:$0x3]
        %v1833 = vlaneseq
        %v1834 = vshrl.u32 %v1833, 7
        %v1835 = vsub.s32 0, %v1834
        %v1836 = vrot.slane %v1831, %v1835
        %v1837 = vlaneseq
        %v1838 = vshrl.u32 %v1837, 7
        %v1839 = vsub.s32 1, %v1838
        %v1840 = vrot.slane %v1831, %v1839
        %v1859 = vunpack.c.l.b16 %v1812
        %v1860 = vunpack.c.h.b16 %v1812
        %v1861 = vunpack.c.l.b16 %v1813
        %v1862 = vunpack.c.h.b16 %v1813
        %v1863 = vunpack.c.l.b16 %v1814
        %v1864 = vunpack.c.h.b16 %v1814
        %v1865 = vunpack.c.l.b16 %v1815
        %v1866 = vunpack.c.h.b16 %v1815
        %v1867 = vunpack.c.l.b16 %v1816
        %v1868 = vunpack.c.h.b16 %v1816
        %v1869 = vunpack.c.l.b16 %v1817
        %v1870 = vunpack.c.h.b16 %v1817
        %v1871 = vunpack.c.l.b16 %v1818
        %v1872 = vunpack.c.h.b16 %v1818
        %v1873 = vunpack.c.l.b16 %v1819
        %v1874 = vunpack.c.h.b16 %v1819
        %v1875 = vunpack.c.l.b16 %v1820
        %v1876 = vunpack.c.h.b16 %v1820
        %v1877 = vunpack.c.l.b16 %v1821
        %v1878 = vunpack.c.h.b16 %v1821
        %v1879 = vunpack.c.l.b16 %v1822
        %v1880 = vunpack.c.h.b16 %v1822
        %v1881 = vunpack.c.l.b16 %v1823
        %v1882 = vunpack.c.h.b16 %v1823
        %v1883 = vunpack.c.l.b16 %v1824
        %v1884 = vunpack.c.h.b16 %v1824
        %v1885 = vunpack.c.l.b16 %v1825
        %v1886 = vunpack.c.h.b16 %v1825
        %v1887 = vunpack.c.l.b16 %v1826
        %v1888 = vunpack.c.h.b16 %v1826
        %v1889 = vunpack.c.l.b16 %v1827
        %v1890 = vunpack.c.h.b16 %v1827
        %v1891 = vpack.c.b16 %v1861, %v1859
        %v1892 = vpack.c.b16 %v1862, %v1860
        %v1893 = vpack.c.b16 %v1865, %v1863
        %v1894 = vpack.c.b16 %v1866, %v1864
        %v1895 = vpack.c.b16 %v1869, %v1867
        %v1896 = vpack.c.b16 %v1870, %v1868
        %v1897 = vpack.c.b16 %v1873, %v1871
        %v1898 = vpack.c.b16 %v1874, %v1872
        %v1899 = vpack.c.b16 %v1877, %v1875
        %v1900 = vpack.c.b16 %v1878, %v1876
        %v1901 = vpack.c.b16 %v1881, %v1879
        %v1902 = vpack.c.b16 %v1882, %v1880
        %v1903 = vpack.c.b16 %v1885, %v1883
        %v1904 = vpack.c.b16 %v1886, %v1884
        %v1905 = vpack.c.b16 %v1889, %v1887
        %v1906 = vpack.c.b16 %v1890, %v1888
        %1923 = vmatprep.subr.bf16.mxu0 %v1892
        %1924 = vmatpush1.bf16.msra.mxu0 %v1891
        %1925 = vmatprep.subr.bf16.mxu0 %v1894
        %1926 = vmatpush1.bf16.msra.mxu0 %v1893
        %1927 = vmatprep.subr.bf16.mxu0 %v1896
        %1928 = vmatpush1.bf16.msra.mxu0 %v1895
        %1929 = vmatprep.subr.bf16.mxu0 %v1898
        %1930 = vmatpush1.bf16.msra.mxu0 %v1897
        %1931 = vmatprep.subr.bf16.mxu0 %v1900
        %1932 = vmatpush1.bf16.msra.mxu0 %v1899
        %1933 = vmatprep.subr.bf16.mxu0 %v1902
        %1934 = vmatpush1.bf16.msra.mxu0 %v1901
        %1935 = vmatprep.subr.bf16.mxu0 %v1904
        %1936 = vmatpush1.bf16.msra.mxu0 %v1903
        %1937 = vmatprep.subr.bf16.mxu0 %v1906
        %1938 = vmatpush1.bf16.msra.mxu0 %v1905
        %1939 = vmatprep.subr.bf16.mxu0 0
        %1940 = vmatpush1.bf16.msra.mxu0 0
        %1941 = vmatprep.subr.bf16.mxu0 0
        %1942 = vmatpush1.bf16.msra.mxu0 0
        %1943 = vmatprep.subr.bf16.mxu0 0
        %1944 = vmatpush1.bf16.msra.mxu0 0
        %1945 = vmatprep.subr.bf16.mxu0 0
        %1946 = vmatpush1.bf16.msra.mxu0 0
        %1947 = vmatprep.subr.bf16.mxu0 0
        %1948 = vmatpush1.bf16.msra.mxu0 0
        %1949 = vmatprep.subr.bf16.mxu0 0
        %1950 = vmatpush1.bf16.msra.mxu0 0
        %1951 = vmatprep.subr.bf16.mxu0 0
        %1952 = vmatpush1.bf16.msra.mxu0 0
        %1953 = vmatprep.subr.bf16.mxu0 0
        %1954 = vmatpush1.bf16.msra.mxu0 0
        %1955 = vmatprep.mubr.bf16.mxu0 0
        %1956 = vmatmul.mubr.bf16.gmra.mrb[0].mxu0 %v1828
        %v1957 = vpop.f32.mrb[0].mxu0
        %v1958 = vadd.f32 %v1836, %v1957
        %v1959 = vpop.f32.mrb[0].mxu0
        %v1960 = vadd.f32 %v1840, %v1959
        %v1961 = vpop.f32.mrb[0].mxu0
        %v1962 = vadd.f32 %v1836, %v1961
        %v1963 = vpop.f32.mrb[0].mxu0
        %v1964 = vadd.f32 %v1840, %v1963
        %1965 = vmatprep.mubr.bf16.mxu0 0
        %1966 = vmatmul.mubr.bf16.gmra.mrb[0].mxu0 %v1829
        %v1967 = vpop.f32.mrb[0].mxu0
        %v1968 = vadd.f32 %v1836, %v1967
        %v1969 = vpop.f32.mrb[0].mxu0
        %v1970 = vadd.f32 %v1840, %v1969
        %v1971 = vpop.f32.mrb[0].mxu0
        %v1972 = vadd.f32 %v1836, %v1971
        %v1973 = vpop.f32.mrb[0].mxu0
        %v1974 = vadd.f32 %v1840, %v1973
        %1975 = vmatprep.mubr.bf16.mxu0 0
        %1976 = vmatmul.mubr.bf16.gmra.mrb[0].mxu0 %v1830
        %v1977 = vpop.f32.mrb[0].mxu0
        %v1978 = vadd.f32 %v1836, %v1977
        %v1979 = vpop.f32.mrb[0].mxu0
        %v1980 = vadd.f32 %v1840, %v1979
        %v1981 = vpop.f32.mrb[0].mxu0
        %v1982 = vadd.f32 %v1836, %v1981
        %v1983 = vpop.f32.mrb[0].mxu0
        %v1984 = vadd.f32 %v1840, %v1983
        %1985 = vdwg.mxu0
        %v1986 = vmul.f32 %v1958, 0.5
        %v1987 = vmul.f32 %v1960, 0.5
        %v1988 = vmul.f32 %v1962, 0.5
        %v1989 = vmul.f32 %v1964, 0.5
        %v1990 = vmul.f32 %v1968, 0.5
        %v1991 = vmul.f32 %v1970, 0.5
        %v1992 = vmul.f32 %v1972, 0.5
        %v1993 = vmul.f32 %v1974, 0.5
        %v1994 = vmul.f32 %v1978, 0.5
        %v1995 = vmul.f32 %v1980, 0.5
        %v1996 = vmul.f32 %v1982, 0.5
        %v1997 = vmul.f32 %v1984, 0.5
        %v1998 = vmul.f32 %v1958, 0.044715
        %v1999 = vmul.f32 %v1960, 0.044715
        %v2000 = vmul.f32 %v1962, 0.044715
        %v2001 = vmul.f32 %v1964, 0.044715
        %v2002 = vmul.f32 %v1968, 0.044715
        %v2003 = vmul.f32 %v1970, 0.044715
        %v2004 = vmul.f32 %v1972, 0.044715
        %v2005 = vmul.f32 %v1974, 0.044715
        %v2006 = vmul.f32 %v1978, 0.044715
        %v2007 = vmul.f32 %v1980, 0.044715
        %v2008 = vmul.f32 %v1982, 0.044715
        %v2009 = vmul.f32 %v1984, 0.044715
        %v2010 = vmul.f32 %v1998, %v1958
        %v2011 = vmul.f32 %v1999, %v1960
        %v2012 = vmul.f32 %v2000, %v1962
        %v2013 = vmul.f32 %v2001, %v1964
        %v2014 = vmul.f32 %v2002, %v1968
        %v2015 = vmul.f32 %v2003, %v1970
        %v2016 = vmul.f32 %v2004, %v1972
        %v2017 = vmul.f32 %v2005, %v1974
        %v2018 = vmul.f32 %v2006, %v1978
        %v2019 = vmul.f32 %v2007, %v1980
        %v2020 = vmul.f32 %v2008, %v1982
        %v2021 = vmul.f32 %v2009, %v1984
        %v2022 = vmul.f32 %v2010, %v1958
        %v2023 = vmul.f32 %v2011, %v1960
        %v2024 = vmul.f32 %v2012, %v1962
        %v2025 = vmul.f32 %v2013, %v1964
        %v2026 = vmul.f32 %v2014, %v1968
        %v2027 = vmul.f32 %v2015, %v1970
        %v2028 = vmul.f32 %v2016, %v1972
        %v2029 = vmul.f32 %v2017, %v1974
        %v2030 = vmul.f32 %v2018, %v1978
        %v2031 = vmul.f32 %v2019, %v1980
        %v2032 = vmul.f32 %v2020, %v1982
        %v2033 = vmul.f32 %v2021, %v1984
        %v2034 = vadd.f32 %v1958, %v2022
        %v2035 = vadd.f32 %v1960, %v2023
        %v2036 = vadd.f32 %v1962, %v2024
        %v2037 = vadd.f32 %v1964, %v2025
        %v2038 = vadd.f32 %v1968, %v2026
        %v2039 = vadd.f32 %v1970, %v2027
        %v2040 = vadd.f32 %v1972, %v2028
        %v2041 = vadd.f32 %v1974, %v2029
        %v2042 = vadd.f32 %v1978, %v2030
        %v2043 = vadd.f32 %v1980, %v2031
        %v2044 = vadd.f32 %v1982, %v2032
        %v2045 = vadd.f32 %v1984, %v2033
        %v2046 = vmul.f32 %v2034, 0.7978846
        %v2047 = vmul.f32 %v2035, 0.7978846
        %v2048 = vmul.f32 %v2036, 0.7978846
        %v2049 = vmul.f32 %v2037, 0.7978846
        %v2050 = vmul.f32 %v2038, 0.7978846
        %v2051 = vmul.f32 %v2039, 0.7978846
        %v2052 = vmul.f32 %v2040, 0.7978846
        %v2053 = vmul.f32 %v2041, 0.7978846
        %v2054 = vmul.f32 %v2042, 0.7978846
        %v2055 = vmul.f32 %v2043, 0.7978846
        %v2056 = vmul.f32 %v2044, 0.7978846
        %v2057 = vmul.f32 %v2045, 0.7978846
        %v2058 = vtanh.pop %v2046
        %v2059 = vtanh.pop %v2047
        %v2060 = vtanh.pop %v2048
        %v2061 = vtanh.pop %v2049
        %v2062 = vtanh.pop %v2050
        %v2063 = vtanh.pop %v2051
        %v2064 = vtanh.pop %v2052
        %v2065 = vtanh.pop %v2053
        %v2066 = vtanh.pop %v2054
        %v2067 = vtanh.pop %v2055
        %v2068 = vtanh.pop %v2056
        %v2069 = vtanh.pop %v2057
        %v2070 = vadd.f32 %v2058, 1.0
        %v2071 = vadd.f32 %v2059, 1.0
        %v2072 = vadd.f32 %v2060, 1.0
        %v2073 = vadd.f32 %v2061, 1.0
        %v2074 = vadd.f32 %v2062, 1.0
        %v2075 = vadd.f32 %v2063, 1.0
        %v2076 = vadd.f32 %v2064, 1.0
        %v2077 = vadd.f32 %v2065, 1.0
        %v2078 = vadd.f32 %v2066, 1.0
        %v2079 = vadd.f32 %v2067, 1.0
        %v2080 = vadd.f32 %v2068, 1.0
        %v2081 = vadd.f32 %v2069, 1.0
        %v2082 = vmul.f32 %v1986, %v2070
        %v2083 = vmul.f32 %v1987, %v2071
        %v2084 = vmul.f32 %v1988, %v2072
        %v2085 = vmul.f32 %v1989, %v2073
        %v2086 = vmul.f32 %v1990, %v2074
        %v2087 = vmul.f32 %v1991, %v2075
        %v2088 = vmul.f32 %v1992, %v2076
        %v2089 = vmul.f32 %v1993, %v2077
        %v2090 = vmul.f32 %v1994, %v2078
        %v2091 = vmul.f32 %v1995, %v2079
        %v2092 = vmul.f32 %v1996, %v2080
        %v2093 = vmul.f32 %v1997, %v2081
        %v2094 = vld [vmem:[#allocation16] sm:$0xf]
        %v2095 = vld [vmem:[#allocation16 + $0x4] sm:$0xf]
        %v2096 = vld [vmem:[#allocation16 + $0x8] sm:$0xf]
        %v2097 = vld [vmem:[#allocation16 + $0xc] sm:$0xf]
        %v2098 = vld [vmem:[#allocation16 + $0x10] sm:$0xf]
        %v2099 = vld [vmem:[#allocation16 + $0x14] sm:$0xf]
        %v2100 = vld [vmem:[#allocation16 + $0x18] sm:$0xf]
        %v2101 = vld [vmem:[#allocation16 + $0x1c] sm:$0xf]
        %v2102 = vld [vmem:[#allocation16 + $0x20] sm:$0xf]
        %v2103 = vld [vmem:[#allocation16 + $0x24] sm:$0xf]
        %v2104 = vld [vmem:[#allocation16 + $0x28] sm:$0xf]
        %v2105 = vld [vmem:[#allocation16 + $0x2c] sm:$0xf]
        %v2106 = vld [vmem:[#allocation16 + $0x30] sm:$0xf]
        %v2107 = vld [vmem:[#allocation16 + $0x34] sm:$0xf]
        %v2108 = vld [vmem:[#allocation16 + $0x38] sm:$0xf]
        %v2109 = vld [vmem:[#allocation16 + $0x3c] sm:$0xf]
        %v2110 = vld [vmem:[#allocation16 + $0x40] sm:$0xf]
        %v2111 = vld [vmem:[#allocation16 + $0x44] sm:$0xf]
        %v2112 = vld [vmem:[#allocation16 + $0x48] sm:$0xf]
        %v2113 = vld [vmem:[#allocation16 + $0x4c] sm:$0xf]
        %v2114 = vld [vmem:[#allocation16 + $0x50] sm:$0xf]
        %v2115 = vld [vmem:[#allocation16 + $0x54] sm:$0xf]
        %v2116 = vld [vmem:[#allocation16 + $0x58] sm:$0xf]
        %v2117 = vld [vmem:[#allocation16 + $0x5c] sm:$0xf]
        %v2118 = vld [vmem:[#allocation16 + $0x60] sm:$0xf]
        %v2119 = vld [vmem:[#allocation16 + $0x64] sm:$0xf]
        %v2120 = vld [vmem:[#allocation16 + $0x68] sm:$0xf]
        %v2121 = vld [vmem:[#allocation16 + $0x6c] sm:$0xf]
        %v2122 = vld [vmem:[#allocation16 + $0x70] sm:$0xf]
        %v2123 = vld [vmem:[#allocation16 + $0x74] sm:$0xf]
        %v2124 = vld [vmem:[#allocation16 + $0x78] sm:$0xf]
        %v2125 = vld [vmem:[#allocation16 + $0x7c] sm:$0xf]
        %v2126 = vpack.c.bf16 %v2084, %v2082
        %v2127 = vpack.c.bf16 %v2085, %v2083
        %v2128 = vpack.c.bf16 %v2088, %v2086
        %v2129 = vpack.c.bf16 %v2089, %v2087
        %v2130 = vpack.c.bf16 %v2092, %v2090
        %v2131 = vpack.c.bf16 %v2093, %v2091
        %v2132 = vld [vmem:[#allocation17] sm:$0x1]
        %v2134 = vlaneseq
        %v2135 = vshrl.u32 %v2134, 7
        %v2136 = vsub.s32 0, %v2135
        %v2137 = vrot.slane %v2132, %v2136
        %v2171 = vunpack.c.l.b16 %v2094
        %v2172 = vunpack.c.l.b16 %v2095
        %v2173 = vunpack.c.l.b16 %v2096
        %v2174 = vunpack.c.l.b16 %v2097
        %v2175 = vunpack.c.l.b16 %v2098
        %v2176 = vunpack.c.l.b16 %v2099
        %v2177 = vunpack.c.l.b16 %v2100
        %v2178 = vunpack.c.l.b16 %v2101
        %v2179 = vunpack.c.l.b16 %v2102
        %v2180 = vunpack.c.l.b16 %v2103
        %v2181 = vunpack.c.l.b16 %v2104
        %v2182 = vunpack.c.l.b16 %v2105
        %v2183 = vunpack.c.l.b16 %v2106
        %v2184 = vunpack.c.l.b16 %v2107
        %v2185 = vunpack.c.l.b16 %v2108
        %v2186 = vunpack.c.l.b16 %v2109
        %v2187 = vunpack.c.l.b16 %v2110
        %v2188 = vunpack.c.l.b16 %v2111
        %v2189 = vunpack.c.l.b16 %v2112
        %v2190 = vunpack.c.l.b16 %v2113
        %v2191 = vunpack.c.l.b16 %v2114
        %v2192 = vunpack.c.l.b16 %v2115
        %v2193 = vunpack.c.l.b16 %v2116
        %v2194 = vunpack.c.l.b16 %v2117
        %v2195 = vunpack.c.l.b16 %v2118
        %v2196 = vunpack.c.l.b16 %v2119
        %v2197 = vunpack.c.l.b16 %v2120
        %v2198 = vunpack.c.l.b16 %v2121
        %v2199 = vunpack.c.l.b16 %v2122
        %v2200 = vunpack.c.l.b16 %v2123
        %v2201 = vunpack.c.l.b16 %v2124
        %v2202 = vunpack.c.l.b16 %v2125
        %v2203 = vpack.c.b16 %v2172, %v2171
        %v2204 = vpack.c.b16 %v2174, %v2173
        %v2205 = vpack.c.b16 %v2176, %v2175
        %v2206 = vpack.c.b16 %v2178, %v2177
        %v2207 = vpack.c.b16 %v2180, %v2179
        %v2208 = vpack.c.b16 %v2182, %v2181
        %v2209 = vpack.c.b16 %v2184, %v2183
        %v2210 = vpack.c.b16 %v2186, %v2185
        %v2211 = vpack.c.b16 %v2188, %v2187
        %v2212 = vpack.c.b16 %v2190, %v2189
        %v2213 = vpack.c.b16 %v2192, %v2191
        %v2214 = vpack.c.b16 %v2194, %v2193
        %v2215 = vpack.c.b16 %v2196, %v2195
        %v2216 = vpack.c.b16 %v2198, %v2197
        %v2217 = vpack.c.b16 %v2200, %v2199
        %v2218 = vpack.c.b16 %v2202, %v2201
        %2235 = vmatprep.subr.bf16.mxu0 0
        %2236 = vmatpush1.bf16.msra.mxu0 %v2203
        %2237 = vmatprep.subr.bf16.mxu0 0
        %2238 = vmatpush1.bf16.msra.mxu0 %v2204
        %2239 = vmatprep.subr.bf16.mxu0 0
        %2240 = vmatpush1.bf16.msra.mxu0 %v2205
        %2241 = vmatprep.subr.bf16.mxu0 0
        %2242 = vmatpush1.bf16.msra.mxu0 %v2206
        %2243 = vmatprep.subr.bf16.mxu0 0
        %2244 = vmatpush1.bf16.msra.mxu0 %v2207
        %2245 = vmatprep.subr.bf16.mxu0 0
        %2246 = vmatpush1.bf16.msra.mxu0 %v2208
        %2247 = vmatprep.subr.bf16.mxu0 0
        %2248 = vmatpush1.bf16.msra.mxu0 %v2209
        %2249 = vmatprep.subr.bf16.mxu0 0
        %2250 = vmatpush1.bf16.msra.mxu0 %v2210
        %2251 = vmatprep.subr.bf16.mxu0 0
        %2252 = vmatpush1.bf16.msra.mxu0 %v2211
        %2253 = vmatprep.subr.bf16.mxu0 0
        %2254 = vmatpush1.bf16.msra.mxu0 %v2212
        %2255 = vmatprep.subr.bf16.mxu0 0
        %2256 = vmatpush1.bf16.msra.mxu0 %v2213
        %2257 = vmatprep.subr.bf16.mxu0 0
        %2258 = vmatpush1.bf16.msra.mxu0 %v2214
        %2259 = vmatprep.subr.bf16.mxu0 0
        %2260 = vmatpush1.bf16.msra.mxu0 %v2215
        %2261 = vmatprep.subr.bf16.mxu0 0
        %2262 = vmatpush1.bf16.msra.mxu0 %v2216
        %2263 = vmatprep.subr.bf16.mxu0 0
        %2264 = vmatpush1.bf16.msra.mxu0 %v2217
        %2265 = vmatprep.subr.bf16.mxu0 0
        %2266 = vmatpush1.bf16.msra.mxu0 %v2218
        %2267 = vmatprep.mubr.bf16.mxu0 %v2127
        %2268 = vmatmul.mubr.bf16.gmra.mrb[0].mxu0 %v2126
        %v2269 = vpop.f32.mrb[0].mxu0
        %v2270 = vadd.f32 %v2137, %v2269
        %v2271 = vpop.f32.mrb[0].mxu0
        %v2272 = vpop.f32.mrb[0].mxu0
        %v2273 = vadd.f32 %v2137, %v2272
        %v2274 = vpop.f32.mrb[0].mxu0
        %2275 = vmatprep.mubr.bf16.mxu0 %v2129
        %2276 = vmatmul.mubr.bf16.gmra.mrb[0].mxu0 %v2128
        %v2277 = vpop.f32.mrb[0].mxu0
        %v2278 = vadd.f32 %v2137, %v2277
        %v2279 = vpop.f32.mrb[0].mxu0
        %v2280 = vpop.f32.mrb[0].mxu0
        %v2281 = vadd.f32 %v2137, %v2280
        %v2282 = vpop.f32.mrb[0].mxu0
        %2283 = vmatprep.mubr.bf16.mxu0 %v2131
        %2284 = vmatmul.mubr.bf16.gmra.mrb[0].mxu0 %v2130
        %v2285 = vpop.f32.mrb[0].mxu0
        %v2286 = vadd.f32 %v2137, %v2285
        %v2287 = vpop.f32.mrb[0].mxu0
        %v2288 = vpop.f32.mrb[0].mxu0
        %v2289 = vadd.f32 %v2137, %v2288
        %v2290 = vpop.f32.mrb[0].mxu0
        %2291 = vdwg.mxu0
        %v2292 = vadd.f32 %v1806, %v2270
        %v2293 = vadd.f32 %v1807, %v2273
        %v2294 = vadd.f32 %v1808, %v2278
        %v2295 = vadd.f32 %v1809, %v2281
        %v2296 = vadd.f32 %v1810, %v2286
        %v2297 = vadd.f32 %v1811, %v2289
        %2298 = vadd.xlane.f32.xlu0 %v2292
        %v2299 = vpop.xlane.xlu0 %2298
        %2300 = vadd.xlane.f32.xlu0 %v2293
        %v2301 = vpop.xlane.xlu0 %2300
        %2302 = vadd.xlane.f32.xlu0 %v2294
        %v2303 = vpop.xlane.xlu0 %2302
        %2304 = vadd.xlane.f32.xlu0 %v2295
        %v2305 = vpop.xlane.xlu0 %2304
        %2306 = vadd.xlane.f32.xlu0 %v2296
        %v2307 = vpop.xlane.xlu0 %2306
        %2308 = vadd.xlane.f32.xlu0 %v2297
        %v2309 = vpop.xlane.xlu0 %2308
        %v2310 = vmul.f32 %v2299, %v1737
        %v2311 = vmul.f32 %v2301, %v1737
        %v2312 = vmul.f32 %v2303, %v1737
        %v2313 = vmul.f32 %v2305, %v1737
        %v2314 = vmul.f32 %v2307, %v1737
        %v2315 = vmul.f32 %v2309, %v1737
        %v2316 = vsub.f32 %v2292, %v2310
        %v2317 = vsub.f32 %v2293, %v2311
        %v2318 = vsub.f32 %v2294, %v2312
        %v2319 = vsub.f32 %v2295, %v2313
        %v2320 = vsub.f32 %v2296, %v2314
        %v2321 = vsub.f32 %v2297, %v2315
        %v2322 = vmul.f32 %v2316, %v2316
        %v2323 = vmul.f32 %v2317, %v2317
        %v2324 = vmul.f32 %v2318, %v2318
        %v2325 = vmul.f32 %v2319, %v2319
        %v2326 = vmul.f32 %v2320, %v2320
        %v2327 = vmul.f32 %v2321, %v2321
        %2328 = vadd.xlane.f32.xlu0 %v2322
        %v2329 = vpop.xlane.xlu0 %2328
        %2330 = vadd.xlane.f32.xlu0 %v2323
        %v2331 = vpop.xlane.xlu0 %2330
        %2332 = vadd.xlane.f32.xlu0 %v2324
        %v2333 = vpop.xlane.xlu0 %2332
        %2334 = vadd.xlane.f32.xlu0 %v2325
        %v2335 = vpop.xlane.xlu0 %2334
        %2336 = vadd.xlane.f32.xlu0 %v2326
        %v2337 = vpop.xlane.xlu0 %2336
        %2338 = vadd.xlane.f32.xlu0 %v2327
        %v2339 = vpop.xlane.xlu0 %2338
        %v2340 = vmul.f32 %v2329, %v1737
        %v2341 = vmul.f32 %v2331, %v1737
        %v2342 = vmul.f32 %v2333, %v1737
        %v2343 = vmul.f32 %v2335, %v1737
        %v2344 = vmul.f32 %v2337, %v1737
        %v2345 = vmul.f32 %v2339, %v1737
        %v2346 = vadd.f32 %v2340, 1e-12
        %v2347 = vadd.f32 %v2341, 1e-12
        %v2348 = vadd.f32 %v2342, 1e-12
        %v2349 = vadd.f32 %v2343, 1e-12
        %v2350 = vadd.f32 %v2344, 1e-12
        %v2351 = vadd.f32 %v2345, 1e-12
        %v2352 = vrsqrt.pop %v2346
        %v2353 = vrsqrt.pop %v2347
        %v2354 = vrsqrt.pop %v2348
        %v2355 = vrsqrt.pop %v2349
        %v2356 = vrsqrt.pop %v2350
        %v2357 = vrsqrt.pop %v2351
        %v2358 = vmul.f32 %v2316, %v2352
        %v2359 = vmul.f32 %v2317, %v2353
        %v2360 = vmul.f32 %v2318, %v2354
        %v2361 = vmul.f32 %v2319, %v2355
        %v2362 = vmul.f32 %v2320, %v2356
        %v2363 = vmul.f32 %v2321, %v2357
        %v2364 = vlaneseq
        %v2365 = vshrl.u32 %v2364, 7
        %v2366 = vsub.s32 2, %v2365
        %v2367 = vrot.slane %v1718, %v2366
        %v2368 = vmul.f32 %v2358, %v2367
        %v2369 = vmul.f32 %v2359, %v2367
        %v2370 = vmul.f32 %v2360, %v2367
        %v2371 = vmul.f32 %v2361, %v2367
        %v2372 = vmul.f32 %v2362, %v2367
        %v2373 = vmul.f32 %v2363, %v2367
        %v2374 = vlaneseq
        %v2375 = vshrl.u32 %v2374, 7
        %v2376 = vsub.s32 3, %v2375
        %v2377 = vrot.slane %v1718, %v2376
        %v2378 = vadd.f32 %v2368, %v2377
        %v2379 = vadd.f32 %v2369, %v2377
        %v2380 = vadd.f32 %v2370, %v2377
        %v2381 = vadd.f32 %v2371, %v2377
        %v2382 = vadd.f32 %v2372, %v2377
        %v2383 = vadd.f32 %v2373, %v2377
        %s2384 = scalar_lea.vmem [#allocation7], 192
        %v2385 = vld [vmem:[%s2384] sm:$0xff]
        %v2386 = vld [vmem:[%s2384 + $0x8] sm:$0xf]
        %v2387 = vld [vmem:[%s2384 + $0xc] sm:$0xff]
        %v2388 = vld [vmem:[%s2384 + $0x14] sm:$0xf]
        %v2389 = vld [vmem:[%s2384 + $0x18] sm:$0xff]
        %v2390 = vld [vmem:[%s2384 + $0x20] sm:$0xf]
        %v2391 = vld [vmem:[%s2384 + $0x24] sm:$0xff]
        %v2392 = vld [vmem:[%s2384 + $0x2c] sm:$0xf]
        %v2393 = vld [vmem:[%s2384 + $0x30] sm:$0xff]
        %v2394 = vld [vmem:[%s2384 + $0x38] sm:$0xf]
        %v2395 = vld [vmem:[%s2384 + $0x3c] sm:$0xff]
        %v2396 = vld [vmem:[%s2384 + $0x44] sm:$0xf]
        %v2397 = vld [vmem:[%s2384 + $0x48] sm:$0xff]
        %v2398 = vld [vmem:[%s2384 + $0x50] sm:$0xf]
        %v2399 = vld [vmem:[%s2384 + $0x54] sm:$0xff]
        %v2400 = vld [vmem:[%s2384 + $0x5c] sm:$0xf]
        %v2401 = vld [vmem:[%s2384 + $0x60] sm:$0xff]
        %v2402 = vld [vmem:[%s2384 + $0x68] sm:$0xf]
        %v2403 = vld [vmem:[%s2384 + $0x6c] sm:$0xff]
        %v2404 = vld [vmem:[%s2384 + $0x74] sm:$0xf]
        %v2405 = vld [vmem:[%s2384 + $0x78] sm:$0xff]
        %v2406 = vld [vmem:[%s2384 + $0x80] sm:$0xf]
        %v2407 = vld [vmem:[%s2384 + $0x84] sm:$0xff]
        %v2408 = vld [vmem:[%s2384 + $0x8c] sm:$0xf]
        %v2409 = vld [vmem:[%s2384 + $0x90] sm:$0xff]
        %v2410 = vld [vmem:[%s2384 + $0x98] sm:$0xf]
        %v2411 = vld [vmem:[%s2384 + $0x9c] sm:$0xff]
        %v2412 = vld [vmem:[%s2384 + $0xa4] sm:$0xf]
        %v2413 = vld [vmem:[%s2384 + $0xa8] sm:$0xff]
        %v2414 = vld [vmem:[%s2384 + $0xb0] sm:$0xf]
        %v2415 = vld [vmem:[%s2384 + $0xb4] sm:$0xff]
        %v2416 = vld [vmem:[%s2384 + $0xbc] sm:$0xf]
        %v2417 = vpack.c.bf16 %v2379, %v2378
        %v2418 = vpack.c.bf16 %v2381, %v2380
        %v2419 = vpack.c.bf16 %v2383, %v2382
        %s2420 = scalar_lea.vmem [#allocation8], 3
        %v2421 = vld [vmem:[%s2420] sm:$0x7]
        %v2423 = vlaneseq
        %v2424 = vshrl.u32 %v2423, 7
        %v2425 = vsub.s32 0, %v2424
        %v2426 = vrot.slane %v2421, %v2425
        %v2427 = vlaneseq
        %v2428 = vshrl.u32 %v2427, 7
        %v2429 = vsub.s32 1, %v2428
        %v2430 = vrot.slane %v2421, %v2429
        %v2431 = vlaneseq
        %v2432 = vshrl.u32 %v2431, 7
        %v2433 = vsub.s32 2, %v2432
        %v2434 = vrot.slane %v2421, %v2433
        %v2470 = vunpack.c.l.b16 %v2385
        %v2471 = vunpack.c.h.b16 %v2385
        %v2472 = vunpack.c.l.b16 %v2386
        %v2473 = vunpack.c.l.b16 %v2387
        %v2474 = vunpack.c.h.b16 %v2387
        %v2475 = vunpack.c.l.b16 %v2388
        %v2476 = vunpack.c.l.b16 %v2389
        %v2477 = vunpack.c.h.b16 %v2389
        %v2478 = vunpack.c.l.b16 %v2390
        %v2479 = vunpack.c.l.b16 %v2391
        %v2480 = vunpack.c.h.b16 %v2391
        %v2481 = vunpack.c.l.b16 %v2392
        %v2482 = vunpack.c.l.b16 %v2393
        %v2483 = vunpack.c.h.b16 %v2393
        %v2484 = vunpack.c.l.b16 %v2394
        %v2485 = vunpack.c.l.b16 %v2395
        %v2486 = vunpack.c.h.b16 %v2395
        %v2487 = vunpack.c.l.b16 %v2396
        %v2488 = vunpack.c.l.b16 %v2397
        %v2489 = vunpack.c.h.b16 %v2397
        %v2490 = vunpack.c.l.b16 %v2398
        %v2491 = vunpack.c.l.b16 %v2399
        %v2492 = vunpack.c.h.b16 %v2399
        %v2493 = vunpack.c.l.b16 %v2400
        %v2494 = vunpack.c.l.b16 %v2401
        %v2495 = vunpack.c.h.b16 %v2401
        %v2496 = vunpack.c.l.b16 %v2402
        %v2497 = vunpack.c.l.b16 %v2403
        %v2498 = vunpack.c.h.b16 %v2403
        %v2499 = vunpack.c.l.b16 %v2404
        %v2500 = vunpack.c.l.b16 %v2405
        %v2501 = vunpack.c.h.b16 %v2405
        %v2502 = vunpack.c.l.b16 %v2406
        %v2503 = vunpack.c.l.b16 %v2407
        %v2504 = vunpack.c.h.b16 %v2407
        %v2505 = vunpack.c.l.b16 %v2408
        %v2506 = vunpack.c.l.b16 %v2409
        %v2507 = vunpack.c.h.b16 %v2409
        %v2508 = vunpack.c.l.b16 %v2410
        %v2509 = vunpack.c.l.b16 %v2411
        %v2510 = vunpack.c.h.b16 %v2411
        %v2511 = vunpack.c.l.b16 %v2412
        %v2512 = vunpack.c.l.b16 %v2413
        %v2513 = vunpack.c.h.b16 %v2413
        %v2514 = vunpack.c.l.b16 %v2414
        %v2515 = vunpack.c.l.b16 %v2415
        %v2516 = vunpack.c.h.b16 %v2415
        %v2517 = vunpack.c.l.b16 %v2416
        %v2518 = vpack.c.b16 %v2473, %v2470
        %v2519 = vpack.c.b16 %v2474, %v2471
        %v2520 = vpack.c.b16 %v2475, %v2472
        %v2521 = vpack.c.b16 %v2479, %v2476
        %v2522 = vpack.c.b16 %v2480, %v2477
        %v2523 = vpack.c.b16 %v2481, %v2478
        %v2524 = vpack.c.b16 %v2485, %v2482
        %v2525 = vpack.c.b16 %v2486, %v2483
        %v2526 = vpack.c.b16 %v2487, %v2484
        %v2527 = vpack.c.b16 %v2491, %v2488
        %v2528 = vpack.c.b16 %v2492, %v2489
        %v2529 = vpack.c.b16 %v2493, %v2490
        %v2530 = vpack.c.b16 %v2497, %v2494
        %v2531 = vpack.c.b16 %v2498, %v2495
        %v2532 = vpack.c.b16 %v2499, %v2496
        %v2533 = vpack.c.b16 %v2503, %v2500
        %v2534 = vpack.c.b16 %v2504, %v2501
        %v2535 = vpack.c.b16 %v2505, %v2502
        %v2536 = vpack.c.b16 %v2509, %v2506
        %v2537 = vpack.c.b16 %v2510, %v2507
        %v2538 = vpack.c.b16 %v2511, %v2508
        %v2539 = vpack.c.b16 %v2515, %v2512
        %v2540 = vpack.c.b16 %v2516, %v2513
        %v2541 = vpack.c.b16 %v2517, %v2514
        %2566 = vmatprep.subr.bf16.mxu0 %v2519
        %2567 = vmatpush1.bf16.msra.mxu0 %v2518
        %2568 = vmatprep.subr.bf16.mxu0 %v2522
        %2569 = vmatpush1.bf16.msra.mxu0 %v2521
        %2570 = vmatprep.subr.bf16.mxu0 %v2525
        %2571 = vmatpush1.bf16.msra.mxu0 %v2524
        %2572 = vmatprep.subr.bf16.mxu0 %v2528
        %2573 = vmatpush1.bf16.msra.mxu0 %v2527
        %2574 = vmatprep.subr.bf16.mxu0 %v2531
        %2575 = vmatpush1.bf16.msra.mxu0 %v2530
        %2576 = vmatprep.subr.bf16.mxu0 %v2534
        %2577 = vmatpush1.bf16.msra.mxu0 %v2533
        %2578 = vmatprep.subr.bf16.mxu0 %v2537
        %2579 = vmatpush1.bf16.msra.mxu0 %v2536
        %2580 = vmatprep.subr.bf16.mxu0 %v2540
        %2581 = vmatpush1.bf16.msra.mxu0 %v2539
        %2582 = vmatprep.subr.bf16.mxu0 0
        %2583 = vmatpush1.bf16.msra.mxu0 0
        %2584 = vmatprep.subr.bf16.mxu0 0
        %2585 = vmatpush1.bf16.msra.mxu0 0
        %2586 = vmatprep.subr.bf16.mxu0 0
        %2587 = vmatpush1.bf16.msra.mxu0 0
        %2588 = vmatprep.subr.bf16.mxu0 0
        %2589 = vmatpush1.bf16.msra.mxu0 0
        %2590 = vmatprep.subr.bf16.mxu0 0
        %2591 = vmatpush1.bf16.msra.mxu0 0
        %2592 = vmatprep.subr.bf16.mxu0 0
        %2593 = vmatpush1.bf16.msra.mxu0 0
        %2594 = vmatprep.subr.bf16.mxu0 0
        %2595 = vmatpush1.bf16.msra.mxu0 0
        %2596 = vmatprep.subr.bf16.mxu0 0
        %2597 = vmatpush1.bf16.msra.mxu0 0
        %2598 = vmatprep.mubr.bf16.mxu0 0
        %2599 = vmatmul.mubr.bf16.gmra.mrb[0].mxu0 %v2417
        %v2600 = vpop.f32.mrb[0].mxu0
        %v2601 = vadd.f32 %v2426, %v2600
        %v2602 = vpop.f32.mrb[0].mxu0
        %v2603 = vadd.f32 %v2430, %v2602
        %v2604 = vpop.f32.mrb[0].mxu0
        %v2605 = vadd.f32 %v2426, %v2604
        %v2606 = vpop.f32.mrb[0].mxu0
        %v2607 = vadd.f32 %v2430, %v2606
        %2608 = vmatprep.mubr.bf16.mxu0 0
        %2609 = vmatmul.mubr.bf16.gmra.mrb[0].mxu0 %v2418
        %v2610 = vpop.f32.mrb[0].mxu0
        %v2611 = vadd.f32 %v2426, %v2610
        %v2612 = vpop.f32.mrb[0].mxu0
        %v2613 = vadd.f32 %v2430, %v2612
        %v2614 = vpop.f32.mrb[0].mxu0
        %v2615 = vadd.f32 %v2426, %v2614
        %v2616 = vpop.f32.mrb[0].mxu0
        %v2617 = vadd.f32 %v2430, %v2616
        %2618 = vmatprep.mubr.bf16.mxu0 0
        %2619 = vmatmul.mubr.bf16.gmra.mrb[0].mxu0 %v2419
        %v2620 = vpop.f32.mrb[0].mxu0
        %v2621 = vadd.f32 %v2426, %v2620
        %v2622 = vpop.f32.mrb[0].mxu0
        %v2623 = vadd.f32 %v2430, %v2622
        %v2624 = vpop.f32.mrb[0].mxu0
        %v2625 = vadd.f32 %v2426, %v2624
        %v2626 = vpop.f32.mrb[0].mxu0
        %v2627 = vadd.f32 %v2430, %v2626
        %2628 = vdwg.mxu0
        %2629 = vmatprep.subr.bf16.mxu0 0
        %2630 = vmatpush1.bf16.msra.mxu0 %v2520
        %2631 = vmatprep.subr.bf16.mxu0 0
        %2632 = vmatpush1.bf16.msra.mxu0 %v2523
        %2633 = vmatprep.subr.bf16.mxu0 0
        %2634 = vmatpush1.bf16.msra.mxu0 %v2526
        %2635 = vmatprep.subr.bf16.mxu0 0
        %2636 = vmatpush1.bf16.msra.mxu0 %v2529
        %2637 = vmatprep.subr.bf16.mxu0 0
        %2638 = vmatpush1.bf16.msra.mxu0 %v2532
        %2639 = vmatprep.subr.bf16.mxu0 0
        %2640 = vmatpush1.bf16.msra.mxu0 %v2535
        %2641 = vmatprep.subr.bf16.mxu0 0
        %2642 = vmatpush1.bf16.msra.mxu0 %v2538
        %2643 = vmatprep.subr.bf16.mxu0 0
        %2644 = vmatpush1.bf16.msra.mxu0 %v2541
        %2645 = vmatprep.subr.bf16.mxu0 0
        %2646 = vmatpush1.bf16.msra.mxu0 0
        %2647 = vmatprep.subr.bf16.mxu0 0
        %2648 = vmatpush1.bf16.msra.mxu0 0
        %2649 = vmatprep.subr.bf16.mxu0 0
        %2650 = vmatpush1.bf16.msra.mxu0 0
        %2651 = vmatprep.subr.bf16.mxu0 0
        %2652 = vmatpush1.bf16.msra.mxu0 0
        %2653 = vmatprep.subr.bf16.mxu0 0
        %2654 = vmatpush1.bf16.msra.mxu0 0
        %2655 = vmatprep.subr.bf16.mxu0 0
        %2656 = vmatpush1.bf16.msra.mxu0 0
        %2657 = vmatprep.subr.bf16.mxu0 0
        %2658 = vmatpush1.bf16.msra.mxu0 0
        %2659 = vmatprep.subr.bf16.mxu0 0
        %2660 = vmatpush1.bf16.msra.mxu0 0
        %2661 = vmatprep.mubr.bf16.mxu0 0
        %2662 = vmatmul.mubr.bf16.gmra.mrb[0].mxu0 %v2417
        %v2663 = vpop.f32.mrb[0].mxu0
        %v2664 = vadd.f32 %v2434, %v2663
        %v2665 = vpop.f32.mrb[0].mxu0
        %v2666 = vpop.f32.mrb[0].mxu0
        %v2667 = vadd.f32 %v2434, %v2666
        %v2668 = vpop.f32.mrb[0].mxu0
        %2669 = vmatprep.mubr.bf16.mxu0 0
        %2670 = vmatmul.mubr.bf16.gmra.mrb[0].mxu0 %v2418
        %v2671 = vpop.f32.mrb[0].mxu0
        %v2672 = vadd.f32 %v2434, %v2671
        %v2673 = vpop.f32.mrb[0].mxu0
        %v2674 = vpop.f32.mrb[0].mxu0
        %v2675 = vadd.f32 %v2434, %v2674
        %v2676 = vpop.f32.mrb[0].mxu0
        %2677 = vmatprep.mubr.bf16.mxu0 0
        %2678 = vmatmul.mubr.bf16.gmra.mrb[0].mxu0 %v2419
        %v2679 = vpop.f32.mrb[0].mxu0
        %v2680 = vadd.f32 %v2434, %v2679
        %v2681 = vpop.f32.mrb[0].mxu0
        %v2682 = vpop.f32.mrb[0].mxu0
        %v2683 = vadd.f32 %v2434, %v2682
        %v2684 = vpop.f32.mrb[0].mxu0
        %2685 = vdwg.mxu0
        %v2687 = vsel %vm887, %v2601, 0
        %v2690 = vsel %vm887, %v2605, 0
        %v2693 = vsel %vm887, %v2611, 0
        %v2696 = vsel %vm887, %v2615, 0
        %v2699 = vsel %vm887, %v2621, 0
        %v2702 = vsel %vm887, %v2625, 0
        %v2705 = vsel %vm887, %v2603, 0
        %v2708 = vsel %vm887, %v2607, 0
        %v2711 = vsel %vm887, %v2613, 0
        %v2714 = vsel %vm887, %v2617, 0
        %v2717 = vsel %vm887, %v2623, 0
        %v2720 = vsel %vm887, %v2627, 0
        %2722 = vmatprep.subr.mxu0 0.0
        %2723 = vmatpush1.xpose.msra.mxu0 %v2705
        %2724 = vmatprep.subr.mxu0 0.0
        %2725 = vmatpush1.xpose.msra.mxu0 %v2708
        %2726 = vmatprep.subr.mxu0 0.0
        %2727 = vmatpush1.xpose.msra.mxu0 %v2711
        %2728 = vmatprep.subr.mxu0 0.0
        %2729 = vmatpush1.xpose.msra.mxu0 %v2714
        %2730 = vmatprep.subr.mxu0 0.0
        %2731 = vmatpush1.xpose.msra.mxu0 %v2717
        %2732 = vmatprep.subr.mxu0 0.0
        %2733 = vmatpush1.xpose.msra.mxu0 %v2720
        %2734 = vmatprep.subr.mxu0 0.0
        %2735 = vmatpush1.xpose.msra.mxu0 0.0
        %2736 = vmatprep.subr.mxu0 0.0
        %2737 = vmatpush1.xpose.msra.mxu0 0.0
        %2738 = vmatprep.subr.mxu0 0.0
        %2739 = vmatpush1.xpose.msra.mxu0 0.0
        %2740 = vmatprep.subr.mxu0 0.0
        %2741 = vmatpush1.xpose.msra.mxu0 0.0
        %2742 = vmatprep.subr.mxu0 0.0
        %2743 = vmatpush1.xpose.msra.mxu0 0.0
        %2744 = vmatprep.subr.mxu0 0.0
        %2745 = vmatpush1.xpose.msra.mxu0 0.0
        %2746 = vmatprep.subr.mxu0 0.0
        %2747 = vmatpush1.xpose.msra.mxu0 0.0
        %2748 = vmatprep.subr.mxu0 0.0
        %2749 = vmatpush1.xpose.msra.mxu0 0.0
        %2750 = vmatprep.subr.mxu0 0.0
        %2751 = vmatpush1.xpose.msra.mxu0 0.0
        %2752 = vmatprep.subr.mxu0 0.0
        %2753 = vmatpush1.xpose.msra.mxu0 0.0
        %2754 = vmatprep.subr.mxu0 0.0
        %2755 = vmatpush1.xpose.msra.mxu0 0.0
        %2756 = vmatprep.subr.mxu0 0.0
        %2757 = vmatpush1.xpose.msra.mxu0 0.0
        %2758 = vmatprep.subr.mxu0 0.0
        %2759 = vmatpush1.xpose.msra.mxu0 0.0
        %2760 = vmatprep.subr.mxu0 0.0
        %2761 = vmatpush1.xpose.msra.mxu0 0.0
        %2762 = vmatprep.subr.mxu0 0.0
        %2763 = vmatpush1.xpose.msra.mxu0 0.0
        %2764 = vmatprep.subr.mxu0 0.0
        %2765 = vmatpush1.xpose.msra.mxu0 0.0
        %2766 = vmatprep.subr.mxu0 0.0
        %2767 = vmatpush1.xpose.msra.mxu0 0.0
        %2768 = vmatprep.subr.mxu0 0.0
        %2769 = vmatpush1.xpose.msra.mxu0 0.0
        %2770 = vmatprep.subr.mxu0 0.0
        %2771 = vmatpush1.xpose.msra.mxu0 0.0
        %2772 = vmatprep.subr.mxu0 0.0
        %2773 = vmatpush1.xpose.msra.mxu0 0.0
        %2774 = vmatprep.subr.mxu0 0.0
        %2775 = vmatpush1.xpose.msra.mxu0 0.0
        %2776 = vmatprep.subr.mxu0 0.0
        %2777 = vmatpush1.xpose.msra.mxu0 0.0
        %2778 = vmatprep.subr.mxu0 0.0
        %2779 = vmatpush1.xpose.msra.mxu0 0.0
        %2780 = vmatprep.subr.mxu0 0.0
        %2781 = vmatpush1.xpose.msra.mxu0 0.0
        %2782 = vmatprep.subr.mxu0 0.0
        %2783 = vmatpush1.xpose.msra.mxu0 0.0
        %2784 = vmatprep.subr.mxu0 0.0
        %2785 = vmatpush1.xpose.msra.mxu0 0.0
        %2786 = vmatprep.mubr.f32.mxu0 0.0
        %2787 = vmatmul.mubr.f32.gmra.mrb[0].mxu0 %v2687
        %v2788 = vpop.f32.mrb[0].mxu0
        %v2789 = vadd.f32 0.0, %v2788
        %v2790 = vpop.f32.mrb[0].mxu0
        %2791 = vmatprep.mubr.f32.mxu0 0.0
        %2792 = vmatmul.mubr.f32.gmra.mrb[0].mxu0 %v2690
        %v2793 = vpop.f32.mrb[0].mxu0
        %v2794 = vadd.f32 0.0, %v2793
        %v2795 = vpop.f32.mrb[0].mxu0
        %2796 = vmatprep.mubr.f32.mxu0 0.0
        %2797 = vmatmul.mubr.f32.gmra.mrb[0].mxu0 %v2693
        %v2798 = vpop.f32.mrb[0].mxu0
        %v2799 = vadd.f32 0.0, %v2798
        %v2800 = vpop.f32.mrb[0].mxu0
        %2801 = vmatprep.mubr.f32.mxu0 0.0
        %2802 = vmatmul.mubr.f32.gmra.mrb[0].mxu0 %v2696
        %v2803 = vpop.f32.mrb[0].mxu0
        %v2804 = vadd.f32 0.0, %v2803
        %v2805 = vpop.f32.mrb[0].mxu0
        %2806 = vmatprep.mubr.f32.mxu0 0.0
        %2807 = vmatmul.mubr.f32.gmra.mrb[0].mxu0 %v2699
        %v2808 = vpop.f32.mrb[0].mxu0
        %v2809 = vadd.f32 0.0, %v2808
        %v2810 = vpop.f32.mrb[0].mxu0
        %2811 = vmatprep.mubr.f32.mxu0 0.0
        %2812 = vmatmul.mubr.f32.gmra.mrb[0].mxu0 %v2702
        %v2813 = vpop.f32.mrb[0].mxu0
        %v2814 = vadd.f32 0.0, %v2813
        %v2815 = vpop.f32.mrb[0].mxu0
        %2816 = vdwg.mxu0
        %v2817 = vmul.f32 %v2789, 0.125
        %v2818 = vmul.f32 %v2794, 0.125
        %v2819 = vmul.f32 %v2799, 0.125
        %v2820 = vmul.f32 %v2804, 0.125
        %v2821 = vmul.f32 %v2809, 0.125
        %v2822 = vmul.f32 %v2814, 0.125
        %v2823 = vsel %vm1025, %v2817, -inf
        %2824 = vmax.xlane.f32.xlu0 %v2823
        %v2825 = vpop.xlane.xlu0 %2824
        %v2826 = vsel %vm1025, %v2818, -inf
        %2827 = vmax.xlane.f32.xlu0 %v2826
        %v2828 = vpop.xlane.xlu0 %2827
        %v2829 = vsel %vm1025, %v2819, -inf
        %2830 = vmax.xlane.f32.xlu0 %v2829
        %v2831 = vpop.xlane.xlu0 %2830
        %v2832 = vsel %vm1025, %v2820, -inf
        %2833 = vmax.xlane.f32.xlu0 %v2832
        %v2834 = vpop.xlane.xlu0 %2833
        %v2835 = vsel %vm1025, %v2821, -inf
        %2836 = vmax.xlane.f32.xlu0 %v2835
        %v2837 = vpop.xlane.xlu0 %2836
        %v2838 = vsel %vm1025, %v2822, -inf
        %2839 = vmax.xlane.f32.xlu0 %v2838
        %v2840 = vpop.xlane.xlu0 %2839
        %v2841 = vsub.f32 %v2817, %v2825
        %v2842 = vsub.f32 %v2818, %v2828
        %v2843 = vsub.f32 %v2819, %v2831
        %v2844 = vsub.f32 %v2820, %v2834
        %v2845 = vsub.f32 %v2821, %v2837
        %v2846 = vsub.f32 %v2822, %v2840
        %v2847 = vmul.f32 %v2841, 1.442695
        %v2848 = vpow.pop %v2847
        %v2849 = vmul.f32 %v2842, 1.442695
        %v2850 = vpow.pop %v2849
        %v2851 = vmul.f32 %v2843, 1.442695
        %v2852 = vpow.pop %v2851
        %v2853 = vmul.f32 %v2844, 1.442695
        %v2854 = vpow.pop %v2853
        %v2855 = vmul.f32 %v2845, 1.442695
        %v2856 = vpow.pop %v2855
        %v2857 = vmul.f32 %v2846, 1.442695
        %v2858 = vpow.pop %v2857
        %v2859 = vsel %vm1025, %v2848, 0.0
        %2860 = vadd.xlane.f32.xlu0 %v2859
        %v2861 = vpop.xlane.xlu0 %2860
        %v2862 = vsel %vm1025, %v2850, 0.0
        %2863 = vadd.xlane.f32.xlu0 %v2862
        %v2864 = vpop.xlane.xlu0 %2863
        %v2865 = vsel %vm1025, %v2852, 0.0
        %2866 = vadd.xlane.f32.xlu0 %v2865
        %v2867 = vpop.xlane.xlu0 %2866
        %v2868 = vsel %vm1025, %v2854, 0.0
        %2869 = vadd.xlane.f32.xlu0 %v2868
        %v2870 = vpop.xlane.xlu0 %2869
        %v2871 = vsel %vm1025, %v2856, 0.0
        %2872 = vadd.xlane.f32.xlu0 %v2871
        %v2873 = vpop.xlane.xlu0 %2872
        %v2874 = vsel %vm1025, %v2858, 0.0
        %2875 = vadd.xlane.f32.xlu0 %v2874
        %v2876 = vpop.xlane.xlu0 %2875
        %v2877 = vrcp.pop %v2861
        %v2878 = vrcp.pop %v2864
        %v2879 = vrcp.pop %v2867
        %v2880 = vrcp.pop %v2870
        %v2881 = vrcp.pop %v2873
        %v2882 = vrcp.pop %v2876
        %v2883 = vmul.f32 %v2848, %v2877
        %v2884 = vmul.f32 %v2850, %v2878
        %v2885 = vmul.f32 %v2852, %v2879
        %v2886 = vmul.f32 %v2854, %v2880
        %v2887 = vmul.f32 %v2856, %v2881
        %v2888 = vmul.f32 %v2858, %v2882
        %v2890 = vsel %vm1025, %v2883, 0
        %v2893 = vsel %vm1025, %v2884, 0
        %v2896 = vsel %vm1025, %v2885, 0
        %v2899 = vsel %vm1025, %v2886, 0
        %v2902 = vsel %vm1025, %v2887, 0
        %v2905 = vsel %vm1025, %v2888, 0
        %2907 = vmatprep.subr.mxu0 0.0
        %2908 = vmatpush1.msra.mxu0 %v2664
        %2909 = vmatprep.subr.mxu0 0.0
        %2910 = vmatpush1.msra.mxu0 %v2667
        %2911 = vmatprep.subr.mxu0 0.0
        %2912 = vmatpush1.msra.mxu0 %v2672
        %2913 = vmatprep.subr.mxu0 0.0
        %2914 = vmatpush1.msra.mxu0 %v2675
        %2915 = vmatprep.subr.mxu0 0.0
        %2916 = vmatpush1.msra.mxu0 %v2680
        %2917 = vmatprep.subr.mxu0 0.0
        %2918 = vmatpush1.msra.mxu0 %v2683
        %2919 = vmatprep.subr.mxu0 0.0
        %2920 = vmatpush1.msra.mxu0 0.0
        %2921 = vmatprep.subr.mxu0 0.0
        %2922 = vmatpush1.msra.mxu0 0.0
        %2923 = vmatprep.subr.mxu0 0.0
        %2924 = vmatpush1.msra.mxu0 0.0
        %2925 = vmatprep.subr.mxu0 0.0
        %2926 = vmatpush1.msra.mxu0 0.0
        %2927 = vmatprep.subr.mxu0 0.0
        %2928 = vmatpush1.msra.mxu0 0.0
        %2929 = vmatprep.subr.mxu0 0.0
        %2930 = vmatpush1.msra.mxu0 0.0
        %2931 = vmatprep.subr.mxu0 0.0
        %2932 = vmatpush1.msra.mxu0 0.0
        %2933 = vmatprep.subr.mxu0 0.0
        %2934 = vmatpush1.msra.mxu0 0.0
        %2935 = vmatprep.subr.mxu0 0.0
        %2936 = vmatpush1.msra.mxu0 0.0
        %2937 = vmatprep.subr.mxu0 0.0
        %2938 = vmatpush1.msra.mxu0 0.0
        %2939 = vmatprep.subr.mxu0 0.0
        %2940 = vmatpush1.msra.mxu0 0.0
        %2941 = vmatprep.subr.mxu0 0.0
        %2942 = vmatpush1.msra.mxu0 0.0
        %2943 = vmatprep.subr.mxu0 0.0
        %2944 = vmatpush1.msra.mxu0 0.0
        %2945 = vmatprep.subr.mxu0 0.0
        %2946 = vmatpush1.msra.mxu0 0.0
        %2947 = vmatprep.subr.mxu0 0.0
        %2948 = vmatpush1.msra.mxu0 0.0
        %2949 = vmatprep.subr.mxu0 0.0
        %2950 = vmatpush1.msra.mxu0 0.0
        %2951 = vmatprep.subr.mxu0 0.0
        %2952 = vmatpush1.msra.mxu0 0.0
        %2953 = vmatprep.subr.mxu0 0.0
        %2954 = vmatpush1.msra.mxu0 0.0
        %2955 = vmatprep.subr.mxu0 0.0
        %2956 = vmatpush1.msra.mxu0 0.0
        %2957 = vmatprep.subr.mxu0 0.0
        %2958 = vmatpush1.msra.mxu0 0.0
        %2959 = vmatprep.subr.mxu0 0.0
        %2960 = vmatpush1.msra.mxu0 0.0
        %2961 = vmatprep.subr.mxu0 0.0
        %2962 = vmatpush1.msra.mxu0 0.0
        %2963 = vmatprep.subr.mxu0 0.0
        %2964 = vmatpush1.msra.mxu0 0.0
        %2965 = vmatprep.subr.mxu0 0.0
        %2966 = vmatpush1.msra.mxu0 0.0
        %2967 = vmatprep.subr.mxu0 0.0
        %2968 = vmatpush1.msra.mxu0 0.0
        %2969 = vmatprep.subr.mxu0 0.0
        %2970 = vmatpush1.msra.mxu0 0.0
        %2971 = vmatprep.mubr.f32.mxu0 0.0
        %2972 = vmatmul.mubr.f32.gmra.mrb[0].mxu0 %v2890
        %v2973 = vpop.f32.mrb[0].mxu0
        %v2974 = vadd.f32 0.0, %v2973
        %v2975 = vpop.f32.mrb[0].mxu0
        %2976 = vmatprep.mubr.f32.mxu0 0.0
        %2977 = vmatmul.mubr.f32.gmra.mrb[0].mxu0 %v2893
        %v2978 = vpop.f32.mrb[0].mxu0
        %v2979 = vadd.f32 0.0, %v2978
        %v2980 = vpop.f32.mrb[0].mxu0
        %2981 = vmatprep.mubr.f32.mxu0 0.0
        %2982 = vmatmul.mubr.f32.gmra.mrb[0].mxu0 %v2896
        %v2983 = vpop.f32.mrb[0].mxu0
        %v2984 = vadd.f32 0.0, %v2983
        %v2985 = vpop.f32.mrb[0].mxu0
        %2986 = vmatprep.mubr.f32.mxu0 0.0
        %2987 = vmatmul.mubr.f32.gmra.mrb[0].mxu0 %v2899
        %v2988 = vpop.f32.mrb[0].mxu0
        %v2989 = vadd.f32 0.0, %v2988
        %v2990 = vpop.f32.mrb[0].mxu0
        %2991 = vmatprep.mubr.f32.mxu0 0.0
        %2992 = vmatmul.mubr.f32.gmra.mrb[0].mxu0 %v2902
        %v2993 = vpop.f32.mrb[0].mxu0
        %v2994 = vadd.f32 0.0, %v2993
        %v2995 = vpop.f32.mrb[0].mxu0
        %2996 = vmatprep.mubr.f32.mxu0 0.0
        %2997 = vmatmul.mubr.f32.gmra.mrb[0].mxu0 %v2905
        %v2998 = vpop.f32.mrb[0].mxu0
        %v2999 = vadd.f32 0.0, %v2998
        %v3000 = vpop.f32.mrb[0].mxu0
        %3001 = vdwg.mxu0
        %3002 = vrot.lane.b32.xlu0 %v2601, 64
        %v3003 = vpop.permute.xlu0 %3002
        %3004 = vrot.lane.b32.xlu0 %v2605, 64
        %v3005 = vpop.permute.xlu0 %3004
        %3006 = vrot.lane.b32.xlu0 %v2611, 64
        %v3007 = vpop.permute.xlu0 %3006
        %3008 = vrot.lane.b32.xlu0 %v2615, 64
        %v3009 = vpop.permute.xlu0 %3008
        %3010 = vrot.lane.b32.xlu0 %v2621, 64
        %v3011 = vpop.permute.xlu0 %3010
        %3012 = vrot.lane.b32.xlu0 %v2625, 64
        %v3013 = vpop.permute.xlu0 %3012
        %3014 = vrot.lane.b32.xlu0 %v2603, 64
        %v3015 = vpop.permute.xlu0 %3014
        %3016 = vrot.lane.b32.xlu0 %v2607, 64
        %v3017 = vpop.permute.xlu0 %3016
        %3018 = vrot.lane.b32.xlu0 %v2613, 64
        %v3019 = vpop.permute.xlu0 %3018
        %3020 = vrot.lane.b32.xlu0 %v2617, 64
        %v3021 = vpop.permute.xlu0 %3020
        %3022 = vrot.lane.b32.xlu0 %v2623, 64
        %v3023 = vpop.permute.xlu0 %3022
        %3024 = vrot.lane.b32.xlu0 %v2627, 64
        %v3025 = vpop.permute.xlu0 %3024
        %v3026 = vsel %vm887, %v3003, 0
        %v3028 = vsel %vm887, %v3005, 0
        %v3030 = vsel %vm887, %v3007, 0
        %v3032 = vsel %vm887, %v3009, 0
        %v3034 = vsel %vm887, %v3011, 0
        %v3036 = vsel %vm887, %v3013, 0
        %v3038 = vsel %vm887, %v3015, 0
        %v3040 = vsel %vm887, %v3017, 0
        %v3042 = vsel %vm887, %v3019, 0
        %v3044 = vsel %vm887, %v3021, 0
        %v3046 = vsel %vm887, %v3023, 0
        %v3048 = vsel %vm887, %v3025, 0
        %3050 = vmatprep.subr.mxu0 0.0
        %3051 = vmatpush1.xpose.msra.mxu0 %v3038
        %3052 = vmatprep.subr.mxu0 0.0
        %3053 = vmatpush1.xpose.msra.mxu0 %v3040
        %3054 = vmatprep.subr.mxu0 0.0
        %3055 = vmatpush1.xpose.msra.mxu0 %v3042
        %3056 = vmatprep.subr.mxu0 0.0
        %3057 = vmatpush1.xpose.msra.mxu0 %v3044
        %3058 = vmatprep.subr.mxu0 0.0
        %3059 = vmatpush1.xpose.msra.mxu0 %v3046
        %3060 = vmatprep.subr.mxu0 0.0
        %3061 = vmatpush1.xpose.msra.mxu0 %v3048
        %3062 = vmatprep.subr.mxu0 0.0
        %3063 = vmatpush1.xpose.msra.mxu0 0.0
        %3064 = vmatprep.subr.mxu0 0.0
        %3065 = vmatpush1.xpose.msra.mxu0 0.0
        %3066 = vmatprep.subr.mxu0 0.0
        %3067 = vmatpush1.xpose.msra.mxu0 0.0
        %3068 = vmatprep.subr.mxu0 0.0
        %3069 = vmatpush1.xpose.msra.mxu0 0.0
        %3070 = vmatprep.subr.mxu0 0.0
        %3071 = vmatpush1.xpose.msra.mxu0 0.0
        %3072 = vmatprep.subr.mxu0 0.0
        %3073 = vmatpush1.xpose.msra.mxu0 0.0
        %3074 = vmatprep.subr.mxu0 0.0
        %3075 = vmatpush1.xpose.msra.mxu0 0.0
        %3076 = vmatprep.subr.mxu0 0.0
        %3077 = vmatpush1.xpose.msra.mxu0 0.0
        %3078 = vmatprep.subr.mxu0 0.0
        %3079 = vmatpush1.xpose.msra.mxu0 0.0
        %3080 = vmatprep.subr.mxu0 0.0
        %3081 = vmatpush1.xpose.msra.mxu0 0.0
        %3082 = vmatprep.subr.mxu0 0.0
        %3083 = vmatpush1.xpose.msra.mxu0 0.0
        %3084 = vmatprep.subr.mxu0 0.0
        %3085 = vmatpush1.xpose.msra.mxu0 0.0
        %3086 = vmatprep.subr.mxu0 0.0
        %3087 = vmatpush1.xpose.msra.mxu0 0.0
        %3088 = vmatprep.subr.mxu0 0.0
        %3089 = vmatpush1.xpose.msra.mxu0 0.0
        %3090 = vmatprep.subr.mxu0 0.0
        %3091 = vmatpush1.xpose.msra.mxu0 0.0
        %3092 = vmatprep.subr.mxu0 0.0
        %3093 = vmatpush1.xpose.msra.mxu0 0.0
        %3094 = vmatprep.subr.mxu0 0.0
        %3095 = vmatpush1.xpose.msra.mxu0 0.0
        %3096 = vmatprep.subr.mxu0 0.0
        %3097 = vmatpush1.xpose.msra.mxu0 0.0
        %3098 = vmatprep.subr.mxu0 0.0
        %3099 = vmatpush1.xpose.msra.mxu0 0.0
        %3100 = vmatprep.subr.mxu0 0.0
        %3101 = vmatpush1.xpose.msra.mxu0 0.0
        %3102 = vmatprep.subr.mxu0 0.0
        %3103 = vmatpush1.xpose.msra.mxu0 0.0
        %3104 = vmatprep.subr.mxu0 0.0
        %3105 = vmatpush1.xpose.msra.mxu0 0.0
        %3106 = vmatprep.subr.mxu0 0.0
        %3107 = vmatpush1.xpose.msra.mxu0 0.0
        %3108 = vmatprep.subr.mxu0 0.0
        %3109 = vmatpush1.xpose.msra.mxu0 0.0
        %3110 = vmatprep.subr.mxu0 0.0
        %3111 = vmatpush1.xpose.msra.mxu0 0.0
        %3112 = vmatprep.subr.mxu0 0.0
        %3113 = vmatpush1.xpose.msra.mxu0 0.0
        %3114 = vmatprep.mubr.f32.mxu0 0.0
        %3115 = vmatmul.mubr.f32.gmra.mrb[0].mxu0 %v3026
        %v3116 = vpop.f32.mrb[0].mxu0
        %v3117 = vadd.f32 0.0, %v3116
        %v3118 = vpop.f32.mrb[0].mxu0
        %3119 = vmatprep.mubr.f32.mxu0 0.0
        %3120 = vmatmul.mubr.f32.gmra.mrb[0].mxu0 %v3028
        %v3121 = vpop.f32.mrb[0].mxu0
        %v3122 = vadd.f32 0.0, %v3121
        %v3123 = vpop.f32.mrb[0].mxu0
        %3124 = vmatprep.mubr.f32.mxu0 0.0
        %3125 = vmatmul.mubr.f32.gmra.mrb[0].mxu0 %v3030
        %v3126 = vpop.f32.mrb[0].mxu0
        %v3127 = vadd.f32 0.0, %v3126
        %v3128 = vpop.f32.mrb[0].mxu0
        %3129 = vmatprep.mubr.f32.mxu0 0.0
        %3130 = vmatmul.mubr.f32.gmra.mrb[0].mxu0 %v3032
        %v3131 = vpop.f32.mrb[0].mxu0
        %v3132 = vadd.f32 0.0, %v3131
        %v3133 = vpop.f32.mrb[0].mxu0
        %3134 = vmatprep.mubr.f32.mxu0 0.0
        %3135 = vmatmul.mubr.f32.gmra.mrb[0].mxu0 %v3034
        %v3136 = vpop.f32.mrb[0].mxu0
        %v3137 = vadd.f32 0.0, %v3136
        %v3138 = vpop.f32.mrb[0].mxu0
        %3139 = vmatprep.mubr.f32.mxu0 0.0
        %3140 = vmatmul.mubr.f32.gmra.mrb[0].mxu0 %v3036
        %v3141 = vpop.f32.mrb[0].mxu0
        %v3142 = vadd.f32 0.0, %v3141
        %v3143 = vpop.f32.mrb[0].mxu0
        %3144 = vdwg.mxu0
        %v3145 = vmul.f32 %v3117, 0.125
        %v3146 = vmul.f32 %v3122, 0.125
        %v3147 = vmul.f32 %v3127, 0.125
        %v3148 = vmul.f32 %v3132, 0.125
        %v3149 = vmul.f32 %v3137, 0.125
        %v3150 = vmul.f32 %v3142, 0.125
        %v3151 = vsel %vm1025, %v3145, -inf
        %3152 = vmax.xlane.f32.xlu0 %v3151
        %v3153 = vpop.xlane.xlu0 %3152
        %v3154 = vsel %vm1025, %v3146, -inf
        %3155 = vmax.xlane.f32.xlu0 %v3154
        %v3156 = vpop.xlane.xlu0 %3155
        %v3157 = vsel %vm1025, %v3147, -inf
        %3158 = vmax.xlane.f32.xlu0 %v3157
        %v3159 = vpop.xlane.xlu0 %3158
        %v3160 = vsel %vm1025, %v3148, -inf
        %3161 = vmax.xlane.f32.xlu0 %v3160
        %v3162 = vpop.xlane.xlu0 %3161
        %v3163 = vsel %vm1025, %v3149, -inf
        %3164 = vmax.xlane.f32.xlu0 %v3163
        %v3165 = vpop.xlane.xlu0 %3164
        %v3166 = vsel %vm1025, %v3150, -inf
        %3167 = vmax.xlane.f32.xlu0 %v3166
        %v3168 = vpop.xlane.xlu0 %3167
        %v3169 = vsub.f32 %v3145, %v3153
        %v3170 = vsub.f32 %v3146, %v3156
        %v3171 = vsub.f32 %v3147, %v3159
        %v3172 = vsub.f32 %v3148, %v3162
        %v3173 = vsub.f32 %v3149, %v3165
        %v3174 = vsub.f32 %v3150, %v3168
        %v3175 = vmul.f32 %v3169, 1.442695
        %v3176 = vpow.pop %v3175
        %v3177 = vmul.f32 %v3170, 1.442695
        %v3178 = vpow.pop %v3177
        %v3179 = vmul.f32 %v3171, 1.442695
        %v3180 = vpow.pop %v3179
        %v3181 = vmul.f32 %v3172, 1.442695
        %v3182 = vpow.pop %v3181
        %v3183 = vmul.f32 %v3173, 1.442695
        %v3184 = vpow.pop %v3183
        %v3185 = vmul.f32 %v3174, 1.442695
        %v3186 = vpow.pop %v3185
        %v3187 = vsel %vm1025, %v3176, 0.0
        %3188 = vadd.xlane.f32.xlu0 %v3187
        %v3189 = vpop.xlane.xlu0 %3188
        %v3190 = vsel %vm1025, %v3178, 0.0
        %3191 = vadd.xlane.f32.xlu0 %v3190
        %v3192 = vpop.xlane.xlu0 %3191
        %v3193 = vsel %vm1025, %v3180, 0.0
        %3194 = vadd.xlane.f32.xlu0 %v3193
        %v3195 = vpop.xlane.xlu0 %3194
        %v3196 = vsel %vm1025, %v3182, 0.0
        %3197 = vadd.xlane.f32.xlu0 %v3196
        %v3198 = vpop.xlane.xlu0 %3197
        %v3199 = vsel %vm1025, %v3184, 0.0
        %3200 = vadd.xlane.f32.xlu0 %v3199
        %v3201 = vpop.xlane.xlu0 %3200
        %v3202 = vsel %vm1025, %v3186, 0.0
        %3203 = vadd.xlane.f32.xlu0 %v3202
        %v3204 = vpop.xlane.xlu0 %3203
        %v3205 = vrcp.pop %v3189
        %v3206 = vrcp.pop %v3192
        %v3207 = vrcp.pop %v3195
        %v3208 = vrcp.pop %v3198
        %v3209 = vrcp.pop %v3201
        %v3210 = vrcp.pop %v3204
        %v3211 = vmul.f32 %v3176, %v3205
        %v3212 = vmul.f32 %v3178, %v3206
        %v3213 = vmul.f32 %v3180, %v3207
        %v3214 = vmul.f32 %v3182, %v3208
        %v3215 = vmul.f32 %v3184, %v3209
        %v3216 = vmul.f32 %v3186, %v3210
        %3223 = vrot.lane.b32.xlu0 %v2664, 64
        %v3224 = vpop.permute.xlu0 %3223
        %3225 = vrot.lane.b32.xlu0 %v2667, 64
        %v3226 = vpop.permute.xlu0 %3225
        %3227 = vrot.lane.b32.xlu0 %v2672, 64
        %v3228 = vpop.permute.xlu0 %3227
        %3229 = vrot.lane.b32.xlu0 %v2675, 64
        %v3230 = vpop.permute.xlu0 %3229
        %3231 = vrot.lane.b32.xlu0 %v2680, 64
        %v3232 = vpop.permute.xlu0 %3231
        %3233 = vrot.lane.b32.xlu0 %v2683, 64
        %v3234 = vpop.permute.xlu0 %3233
        %v3242 = vsel %vm1025, %v3211, 0
        %v3245 = vsel %vm1025, %v3212, 0
        %v3248 = vsel %vm1025, %v3213, 0
        %v3251 = vsel %vm1025, %v3214, 0
        %v3254 = vsel %vm1025, %v3215, 0
        %v3257 = vsel %vm1025, %v3216, 0
        %3259 = vmatprep.subr.mxu0 0.0
        %3260 = vmatpush1.msra.mxu0 %v3224
        %3261 = vmatprep.subr.mxu0 0.0
        %3262 = vmatpush1.msra.mxu0 %v3226
        %3263 = vmatprep.subr.mxu0 0.0
        %3264 = vmatpush1.msra.mxu0 %v3228
        %3265 = vmatprep.subr.mxu0 0.0
        %3266 = vmatpush1.msra.mxu0 %v3230
        %3267 = vmatprep.subr.mxu0 0.0
        %3268 = vmatpush1.msra.mxu0 %v3232
        %3269 = vmatprep.subr.mxu0 0.0
        %3270 = vmatpush1.msra.mxu0 %v3234
        %3271 = vmatprep.subr.mxu0 0.0
        %3272 = vmatpush1.msra.mxu0 0.0
        %3273 = vmatprep.subr.mxu0 0.0
        %3274 = vmatpush1.msra.mxu0 0.0
        %3275 = vmatprep.subr.mxu0 0.0
        %3276 = vmatpush1.msra.mxu0 0.0
        %3277 = vmatprep.subr.mxu0 0.0
        %3278 = vmatpush1.msra.mxu0 0.0
        %3279 = vmatprep.subr.mxu0 0.0
        %3280 = vmatpush1.msra.mxu0 0.0
        %3281 = vmatprep.subr.mxu0 0.0
        %3282 = vmatpush1.msra.mxu0 0.0
        %3283 = vmatprep.subr.mxu0 0.0
        %3284 = vmatpush1.msra.mxu0 0.0
        %3285 = vmatprep.subr.mxu0 0.0
        %3286 = vmatpush1.msra.mxu0 0.0
        %3287 = vmatprep.subr.mxu0 0.0
        %3288 = vmatpush1.msra.mxu0 0.0
        %3289 = vmatprep.subr.mxu0 0.0
        %3290 = vmatpush1.msra.mxu0 0.0
        %3291 = vmatprep.subr.mxu0 0.0
        %3292 = vmatpush1.msra.mxu0 0.0
        %3293 = vmatprep.subr.mxu0 0.0
        %3294 = vmatpush1.msra.mxu0 0.0
        %3295 = vmatprep.subr.mxu0 0.0
        %3296 = vmatpush1.msra.mxu0 0.0
        %3297 = vmatprep.subr.mxu0 0.0
        %3298 = vmatpush1.msra.mxu0 0.0
        %3299 = vmatprep.subr.mxu0 0.0
        %3300 = vmatpush1.msra.mxu0 0.0
        %3301 = vmatprep.subr.mxu0 0.0
        %3302 = vmatpush1.msra.mxu0 0.0
        %3303 = vmatprep.subr.mxu0 0.0
        %3304 = vmatpush1.msra.mxu0 0.0
        %3305 = vmatprep.subr.mxu0 0.0
        %3306 = vmatpush1.msra.mxu0 0.0
        %3307 = vmatprep.subr.mxu0 0.0
        %3308 = vmatpush1.msra.mxu0 0.0
        %3309 = vmatprep.subr.mxu0 0.0
        %3310 = vmatpush1.msra.mxu0 0.0
        %3311 = vmatprep.subr.mxu0 0.0
        %3312 = vmatpush1.msra.mxu0 0.0
        %3313 = vmatprep.subr.mxu0 0.0
        %3314 = vmatpush1.msra.mxu0 0.0
        %3315 = vmatprep.subr.mxu0 0.0
        %3316 = vmatpush1.msra.mxu0 0.0
        %3317 = vmatprep.subr.mxu0 0.0
        %3318 = vmatpush1.msra.mxu0 0.0
        %3319 = vmatprep.subr.mxu0 0.0
        %3320 = vmatpush1.msra.mxu0 0.0
        %3321 = vmatprep.subr.mxu0 0.0
        %3322 = vmatpush1.msra.mxu0 0.0
        %3323 = vmatprep.mubr.f32.mxu0 0.0
        %3324 = vmatmul.mubr.f32.gmra.mrb[0].mxu0 %v3242
        %v3325 = vpop.f32.mrb[0].mxu0
        %v3326 = vadd.f32 0.0, %v3325
        %v3327 = vpop.f32.mrb[0].mxu0
        %3328 = vmatprep.mubr.f32.mxu0 0.0
        %3329 = vmatmul.mubr.f32.gmra.mrb[0].mxu0 %v3245
        %v3330 = vpop.f32.mrb[0].mxu0
        %v3331 = vadd.f32 0.0, %v3330
        %v3332 = vpop.f32.mrb[0].mxu0
        %3333 = vmatprep.mubr.f32.mxu0 0.0
        %3334 = vmatmul.mubr.f32.gmra.mrb[0].mxu0 %v3248
        %v3335 = vpop.f32.mrb[0].mxu0
        %v3336 = vadd.f32 0.0, %v3335
        %v3337 = vpop.f32.mrb[0].mxu0
        %3338 = vmatprep.mubr.f32.mxu0 0.0
        %3339 = vmatmul.mubr.f32.gmra.mrb[0].mxu0 %v3251
        %v3340 = vpop.f32.mrb[0].mxu0
        %v3341 = vadd.f32 0.0, %v3340
        %v3342 = vpop.f32.mrb[0].mxu0
        %3343 = vmatprep.mubr.f32.mxu0 0.0
        %3344 = vmatmul.mubr.f32.gmra.mrb[0].mxu0 %v3254
        %v3345 = vpop.f32.mrb[0].mxu0
        %v3346 = vadd.f32 0.0, %v3345
        %v3347 = vpop.f32.mrb[0].mxu0
        %3348 = vmatprep.mubr.f32.mxu0 0.0
        %3349 = vmatmul.mubr.f32.gmra.mrb[0].mxu0 %v3257
        %v3350 = vpop.f32.mrb[0].mxu0
        %v3351 = vadd.f32 0.0, %v3350
        %v3352 = vpop.f32.mrb[0].mxu0
        %3353 = vdwg.mxu0
        %3360 = vrot.lane.b32.xlu0 %v3326, 64
        %v3361 = vpop.permute.xlu0 %3360
        %3362 = vrot.lane.b32.xlu0 %v3331, 64
        %v3363 = vpop.permute.xlu0 %3362
        %3364 = vrot.lane.b32.xlu0 %v3336, 64
        %v3365 = vpop.permute.xlu0 %3364
        %3366 = vrot.lane.b32.xlu0 %v3341, 64
        %v3367 = vpop.permute.xlu0 %3366
        %3368 = vrot.lane.b32.xlu0 %v3346, 64
        %v3369 = vpop.permute.xlu0 %3368
        %3370 = vrot.lane.b32.xlu0 %v3351, 64
        %v3371 = vpop.permute.xlu0 %3370
        %v3378 = vsel %vm887, %v2974, %v3361
        %v3379 = vsel %vm887, %v2979, %v3363
        %v3380 = vsel %vm887, %v2984, %v3365
        %v3381 = vsel %vm887, %v2989, %v3367
        %v3382 = vsel %vm887, %v2994, %v3369
        %v3383 = vsel %vm887, %v2999, %v3371
        %s3384 = scalar_lea.vmem [#allocation10], 64
        %v3385 = vld [vmem:[%s3384] sm:$0xf]
        %v3386 = vld [vmem:[%s3384 + $0x4] sm:$0xf]
        %v3387 = vld [vmem:[%s3384 + $0x8] sm:$0xf]
        %v3388 = vld [vmem:[%s3384 + $0xc] sm:$0xf]
        %v3389 = vld [vmem:[%s3384 + $0x10] sm:$0xf]
        %v3390 = vld [vmem:[%s3384 + $0x14] sm:$0xf]
        %v3391 = vld [vmem:[%s3384 + $0x18] sm:$0xf]
        %v3392 = vld [vmem:[%s3384 + $0x1c] sm:$0xf]
        %v3393 = vld [vmem:[%s3384 + $0x20] sm:$0xf]
        %v3394 = vld [vmem:[%s3384 + $0x24] sm:$0xf]
        %v3395 = vld [vmem:[%s3384 + $0x28] sm:$0xf]
        %v3396 = vld [vmem:[%s3384 + $0x2c] sm:$0xf]
        %v3397 = vld [vmem:[%s3384 + $0x30] sm:$0xf]
        %v3398 = vld [vmem:[%s3384 + $0x34] sm:$0xf]
        %v3399 = vld [vmem:[%s3384 + $0x38] sm:$0xf]
        %v3400 = vld [vmem:[%s3384 + $0x3c] sm:$0xf]
        %v3401 = vpack.c.bf16 %v3379, %v3378
        %v3402 = vpack.c.bf16 %v3381, %v3380
        %v3403 = vpack.c.bf16 %v3383, %v3382
        %s3404 = scalar_lea.vmem [#allocation11], 1
        %v3405 = vld [vmem:[%s3404] sm:$0x1]
        %v3407 = vlaneseq
        %v3408 = vshrl.u32 %v3407, 7
        %v3409 = vsub.s32 0, %v3408
        %v3410 = vrot.slane %v3405, %v3409
        %v3428 = vunpack.c.l.b16 %v3385
        %v3429 = vunpack.c.l.b16 %v3386
        %v3430 = vunpack.c.l.b16 %v3387
        %v3431 = vunpack.c.l.b16 %v3388
        %v3432 = vunpack.c.l.b16 %v3389
        %v3433 = vunpack.c.l.b16 %v3390
        %v3434 = vunpack.c.l.b16 %v3391
        %v3435 = vunpack.c.l.b16 %v3392
        %v3436 = vunpack.c.l.b16 %v3393
        %v3437 = vunpack.c.l.b16 %v3394
        %v3438 = vunpack.c.l.b16 %v3395
        %v3439 = vunpack.c.l.b16 %v3396
        %v3440 = vunpack.c.l.b16 %v3397
        %v3441 = vunpack.c.l.b16 %v3398
        %v3442 = vunpack.c.l.b16 %v3399
        %v3443 = vunpack.c.l.b16 %v3400
        %v3444 = vpack.c.b16 %v3429, %v3428
        %v3445 = vpack.c.b16 %v3431, %v3430
        %v3446 = vpack.c.b16 %v3433, %v3432
        %v3447 = vpack.c.b16 %v3435, %v3434
        %v3448 = vpack.c.b16 %v3437, %v3436
        %v3449 = vpack.c.b16 %v3439, %v3438
        %v3450 = vpack.c.b16 %v3441, %v3440
        %v3451 = vpack.c.b16 %v3443, %v3442
        %3460 = vmatprep.subr.bf16.mxu0 0
        %3461 = vmatpush1.bf16.msra.mxu0 %v3444
        %3462 = vmatprep.subr.bf16.mxu0 0
        %3463 = vmatpush1.bf16.msra.mxu0 %v3445
        %3464 = vmatprep.subr.bf16.mxu0 0
        %3465 = vmatpush1.bf16.msra.mxu0 %v3446
        %3466 = vmatprep.subr.bf16.mxu0 0
        %3467 = vmatpush1.bf16.msra.mxu0 %v3447
        %3468 = vmatprep.subr.bf16.mxu0 0
        %3469 = vmatpush1.bf16.msra.mxu0 %v3448
        %3470 = vmatprep.subr.bf16.mxu0 0
        %3471 = vmatpush1.bf16.msra.mxu0 %v3449
        %3472 = vmatprep.subr.bf16.mxu0 0
        %3473 = vmatpush1.bf16.msra.mxu0 %v3450
        %3474 = vmatprep.subr.bf16.mxu0 0
        %3475 = vmatpush1.bf16.msra.mxu0 %v3451
        %3476 = vmatprep.subr.bf16.mxu0 0
        %3477 = vmatpush1.bf16.msra.mxu0 0
        %3478 = vmatprep.subr.bf16.mxu0 0
        %3479 = vmatpush1.bf16.msra.mxu0 0
        %3480 = vmatprep.subr.bf16.mxu0 0
        %3481 = vmatpush1.bf16.msra.mxu0 0
        %3482 = vmatprep.subr.bf16.mxu0 0
        %3483 = vmatpush1.bf16.msra.mxu0 0
        %3484 = vmatprep.subr.bf16.mxu0 0
        %3485 = vmatpush1.bf16.msra.mxu0 0
        %3486 = vmatprep.subr.bf16.mxu0 0
        %3487 = vmatpush1.bf16.msra.mxu0 0
        %3488 = vmatprep.subr.bf16.mxu0 0
        %3489 = vmatpush1.bf16.msra.mxu0 0
        %3490 = vmatprep.subr.bf16.mxu0 0
        %3491 = vmatpush1.bf16.msra.mxu0 0
        %3492 = vmatprep.mubr.bf16.mxu0 0
        %3493 = vmatmul.mubr.bf16.gmra.mrb[0].mxu0 %v3401
        %v3494 = vpop.f32.mrb[0].mxu0
        %v3495 = vadd.f32 %v3410, %v3494
        %v3496 = vpop.f32.mrb[0].mxu0
        %v3497 = vpop.f32.mrb[0].mxu0
        %v3498 = vadd.f32 %v3410, %v3497
        %v3499 = vpop.f32.mrb[0].mxu0
        %3500 = vmatprep.mubr.bf16.mxu0 0
        %3501 = vmatmul.mubr.bf16.gmra.mrb[0].mxu0 %v3402
        %v3502 = vpop.f32.mrb[0].mxu0
        %v3503 = vadd.f32 %v3410, %v3502
        %v3504 = vpop.f32.mrb[0].mxu0
        %v3505 = vpop.f32.mrb[0].mxu0
        %v3506 = vadd.f32 %v3410, %v3505
        %v3507 = vpop.f32.mrb[0].mxu0
        %3508 = vmatprep.mubr.bf16.mxu0 0
        %3509 = vmatmul.mubr.bf16.gmra.mrb[0].mxu0 %v3403
        %v3510 = vpop.f32.mrb[0].mxu0
        %v3511 = vadd.f32 %v3410, %v3510
        %v3512 = vpop.f32.mrb[0].mxu0
        %v3513 = vpop.f32.mrb[0].mxu0
        %v3514 = vadd.f32 %v3410, %v3513
        %v3515 = vpop.f32.mrb[0].mxu0
        %3516 = vdwg.mxu0
        %s3517 = scalar_lea.vmem [#allocation19], 4
        %v3518 = vld [vmem:[%s3517] sm:$0xf]
        %v3519 = vadd.f32 %v2378, %v3495
        %v3520 = vadd.f32 %v2379, %v3498
        %v3521 = vadd.f32 %v2380, %v3503
        %v3522 = vadd.f32 %v2381, %v3506
        %v3523 = vadd.f32 %v2382, %v3511
        %v3524 = vadd.f32 %v2383, %v3514
        %3525 = vadd.xlane.f32.xlu0 %v3519
        %v3526 = vpop.xlane.xlu0 %3525
        %3527 = vadd.xlane.f32.xlu0 %v3520
        %v3528 = vpop.xlane.xlu0 %3527
        %3529 = vadd.xlane.f32.xlu0 %v3521
        %v3530 = vpop.xlane.xlu0 %3529
        %3531 = vadd.xlane.f32.xlu0 %v3522
        %v3532 = vpop.xlane.xlu0 %3531
        %3533 = vadd.xlane.f32.xlu0 %v3523
        %v3534 = vpop.xlane.xlu0 %3533
        %3535 = vadd.xlane.f32.xlu0 %v3524
        %v3536 = vpop.xlane.xlu0 %3535
        %v3537 = vmul.f32 %v3526, %v1737
        %v3538 = vmul.f32 %v3528, %v1737
        %v3539 = vmul.f32 %v3530, %v1737
        %v3540 = vmul.f32 %v3532, %v1737
        %v3541 = vmul.f32 %v3534, %v1737
        %v3542 = vmul.f32 %v3536, %v1737
        %v3543 = vsub.f32 %v3519, %v3537
        %v3544 = vsub.f32 %v3520, %v3538
        %v3545 = vsub.f32 %v3521, %v3539
        %v3546 = vsub.f32 %v3522, %v3540
        %v3547 = vsub.f32 %v3523, %v3541
        %v3548 = vsub.f32 %v3524, %v3542
        %v3549 = vmul.f32 %v3543, %v3543
        %v3550 = vmul.f32 %v3544, %v3544
        %v3551 = vmul.f32 %v3545, %v3545
        %v3552 = vmul.f32 %v3546, %v3546
        %v3553 = vmul.f32 %v3547, %v3547
        %v3554 = vmul.f32 %v3548, %v3548
        %3555 = vadd.xlane.f32.xlu0 %v3549
        %v3556 = vpop.xlane.xlu0 %3555
        %3557 = vadd.xlane.f32.xlu0 %v3550
        %v3558 = vpop.xlane.xlu0 %3557
        %3559 = vadd.xlane.f32.xlu0 %v3551
        %v3560 = vpop.xlane.xlu0 %3559
        %3561 = vadd.xlane.f32.xlu0 %v3552
        %v3562 = vpop.xlane.xlu0 %3561
        %3563 = vadd.xlane.f32.xlu0 %v3553
        %v3564 = vpop.xlane.xlu0 %3563
        %3565 = vadd.xlane.f32.xlu0 %v3554
        %v3566 = vpop.xlane.xlu0 %3565
        %v3567 = vmul.f32 %v3556, %v1737
        %v3568 = vmul.f32 %v3558, %v1737
        %v3569 = vmul.f32 %v3560, %v1737
        %v3570 = vmul.f32 %v3562, %v1737
        %v3571 = vmul.f32 %v3564, %v1737
        %v3572 = vmul.f32 %v3566, %v1737
        %v3573 = vadd.f32 %v3567, 1e-12
        %v3574 = vadd.f32 %v3568, 1e-12
        %v3575 = vadd.f32 %v3569, 1e-12
        %v3576 = vadd.f32 %v3570, 1e-12
        %v3577 = vadd.f32 %v3571, 1e-12
        %v3578 = vadd.f32 %v3572, 1e-12
        %v3579 = vrsqrt.pop %v3573
        %v3580 = vrsqrt.pop %v3574
        %v3581 = vrsqrt.pop %v3575
        %v3582 = vrsqrt.pop %v3576
        %v3583 = vrsqrt.pop %v3577
        %v3584 = vrsqrt.pop %v3578
        %v3585 = vmul.f32 %v3543, %v3579
        %v3586 = vmul.f32 %v3544, %v3580
        %v3587 = vmul.f32 %v3545, %v3581
        %v3588 = vmul.f32 %v3546, %v3582
        %v3589 = vmul.f32 %v3547, %v3583
        %v3590 = vmul.f32 %v3548, %v3584
        %v3591 = vlaneseq
        %v3592 = vshrl.u32 %v3591, 7
        %v3593 = vsub.s32 0, %v3592
        %v3594 = vrot.slane %v3518, %v3593
        %v3595 = vmul.f32 %v3585, %v3594
        %v3596 = vmul.f32 %v3586, %v3594
        %v3597 = vmul.f32 %v3587, %v3594
        %v3598 = vmul.f32 %v3588, %v3594
        %v3599 = vmul.f32 %v3589, %v3594
        %v3600 = vmul.f32 %v3590, %v3594
        %v3601 = vlaneseq
        %v3602 = vshrl.u32 %v3601, 7
        %v3603 = vsub.s32 1, %v3602
        %v3604 = vrot.slane %v3518, %v3603
        %v3605 = vadd.f32 %v3595, %v3604
        %v3606 = vadd.f32 %v3596, %v3604
        %v3607 = vadd.f32 %v3597, %v3604
        %v3608 = vadd.f32 %v3598, %v3604
        %v3609 = vadd.f32 %v3599, %v3604
        %v3610 = vadd.f32 %v3600, %v3604
        %s3611 = scalar_lea.vmem [#allocation13], 128
        %v3612 = vld [vmem:[%s3611] sm:$0xff]
        %v3613 = vld [vmem:[%s3611 + $0x8] sm:$0xff]
        %v3614 = vld [vmem:[%s3611 + $0x10] sm:$0xff]
        %v3615 = vld [vmem:[%s3611 + $0x18] sm:$0xff]
        %v3616 = vld [vmem:[%s3611 + $0x20] sm:$0xff]
        %v3617 = vld [vmem:[%s3611 + $0x28] sm:$0xff]
        %v3618 = vld [vmem:[%s3611 + $0x30] sm:$0xff]
        %v3619 = vld [vmem:[%s3611 + $0x38] sm:$0xff]
        %v3620 = vld [vmem:[%s3611 + $0x40] sm:$0xff]
        %v3621 = vld [vmem:[%s3611 + $0x48] sm:$0xff]
        %v3622 = vld [vmem:[%s3611 + $0x50] sm:$0xff]
        %v3623 = vld [vmem:[%s3611 + $0x58] sm:$0xff]
        %v3624 = vld [vmem:[%s3611 + $0x60] sm:$0xff]
        %v3625 = vld [vmem:[%s3611 + $0x68] sm:$0xff]
        %v3626 = vld [vmem:[%s3611 + $0x70] sm:$0xff]
        %v3627 = vld [vmem:[%s3611 + $0x78] sm:$0xff]
        %v3628 = vpack.c.bf16 %v3606, %v3605
        %v3629 = vpack.c.bf16 %v3608, %v3607
        %v3630 = vpack.c.bf16 %v3610, %v3609
        %s3631 = scalar_lea.vmem [#allocation14], 2
        %v3632 = vld [vmem:[%s3631] sm:$0x3]
        %v3634 = vlaneseq
        %v3635 = vshrl.u32 %v3634, 7
        %v3636 = vsub.s32 0, %v3635
        %v3637 = vrot.slane %v3632, %v3636
        %v3638 = vlaneseq
        %v3639 = vshrl.u32 %v3638, 7
        %v3640 = vsub.s32 1, %v3639
        %v3641 = vrot.slane %v3632, %v3640
        %v3660 = vunpack.c.l.b16 %v3612
        %v3661 = vunpack.c.h.b16 %v3612
        %v3662 = vunpack.c.l.b16 %v3613
        %v3663 = vunpack.c.h.b16 %v3613
        %v3664 = vunpack.c.l.b16 %v3614
        %v3665 = vunpack.c.h.b16 %v3614
        %v3666 = vunpack.c.l.b16 %v3615
        %v3667 = vunpack.c.h.b16 %v3615
        %v3668 = vunpack.c.l.b16 %v3616
        %v3669 = vunpack.c.h.b16 %v3616
        %v3670 = vunpack.c.l.b16 %v3617
        %v3671 = vunpack.c.h.b16 %v3617
        %v3672 = vunpack.c.l.b16 %v3618
        %v3673 = vunpack.c.h.b16 %v3618
        %v3674 = vunpack.c.l.b16 %v3619
        %v3675 = vunpack.c.h.b16 %v3619
        %v3676 = vunpack.c.l.b16 %v3620
        %v3677 = vunpack.c.h.b16 %v3620
        %v3678 = vunpack.c.l.b16 %v3621
        %v3679 = vunpack.c.h.b16 %v3621
        %v3680 = vunpack.c.l.b16 %v3622
        %v3681 = vunpack.c.h.b16 %v3622
        %v3682 = vunpack.c.l.b16 %v3623
        %v3683 = vunpack.c.h.b16 %v3623
        %v3684 = vunpack.c.l.b16 %v3624
        %v3685 = vunpack.c.h.b16 %v3624
        %v3686 = vunpack.c.l.b16 %v3625
        %v3687 = vunpack.c.h.b16 %v3625
        %v3688 = vunpack.c.l.b16 %v3626
        %v3689 = vunpack.c.h.b16 %v3626
        %v3690 = vunpack.c.l.b16 %v3627
        %v3691 = vunpack.c.h.b16 %v3627
        %v3692 = vpack.c.b16 %v3662, %v3660
        %v3693 = vpack.c.b16 %v3663, %v3661
        %v3694 = vpack.c.b16 %v3666, %v3664
        %v3695 = vpack.c.b16 %v3667, %v3665
        %v3696 = vpack.c.b16 %v3670, %v3668
        %v3697 = vpack.c.b16 %v3671, %v3669
        %v3698 = vpack.c.b16 %v3674, %v3672
        %v3699 = vpack.c.b16 %v3675, %v3673
        %v3700 = vpack.c.b16 %v3678, %v3676
        %v3701 = vpack.c.b16 %v3679, %v3677
        %v3702 = vpack.c.b16 %v3682, %v3680
        %v3703 = vpack.c.b16 %v3683, %v3681
        %v3704 = vpack.c.b16 %v3686, %v3684
        %v3705 = vpack.c.b16 %v3687, %v3685
        %v3706 = vpack.c.b16 %v3690, %v3688
        %v3707 = vpack.c.b16 %v3691, %v3689
        %3724 = vmatprep.subr.bf16.mxu0 %v3693
        %3725 = vmatpush1.bf16.msra.mxu0 %v3692
        %3726 = vmatprep.subr.bf16.mxu0 %v3695
        %3727 = vmatpush1.bf16.msra.mxu0 %v3694
        %3728 = vmatprep.subr.bf16.mxu0 %v3697
        %3729 = vmatpush1.bf16.msra.mxu0 %v3696
        %3730 = vmatprep.subr.bf16.mxu0 %v3699
        %3731 = vmatpush1.bf16.msra.mxu0 %v3698
        %3732 = vmatprep.subr.bf16.mxu0 %v3701
        %3733 = vmatpush1.bf16.msra.mxu0 %v3700
        %3734 = vmatprep.subr.bf16.mxu0 %v3703
        %3735 = vmatpush1.bf16.msra.mxu0 %v3702
        %3736 = vmatprep.subr.bf16.mxu0 %v3705
        %3737 = vmatpush1.bf16.msra.mxu0 %v3704
        %3738 = vmatprep.subr.bf16.mxu0 %v3707
        %3739 = vmatpush1.bf16.msra.mxu0 %v3706
        %3740 = vmatprep.subr.bf16.mxu0 0
        %3741 = vmatpush1.bf16.msra.mxu0 0
        %3742 = vmatprep.subr.bf16.mxu0 0
        %3743 = vmatpush1.bf16.msra.mxu0 0
        %3744 = vmatprep.subr.bf16.mxu0 0
        %3745 = vmatpush1.bf16.msra.mxu0 0
        %3746 = vmatprep.subr.bf16.mxu0 0
        %3747 = vmatpush1.bf16.msra.mxu0 0
        %3748 = vmatprep.subr.bf16.mxu0 0
        %3749 = vmatpush1.bf16.msra.mxu0 0
        %3750 = vmatprep.subr.bf16.mxu0 0
        %3751 = vmatpush1.bf16.msra.mxu0 0
        %3752 = vmatprep.subr.bf16.mxu0 0
        %3753 = vmatpush1.bf16.msra.mxu0 0
        %3754 = vmatprep.subr.bf16.mxu0 0
        %3755 = vmatpush1.bf16.msra.mxu0 0
        %3756 = vmatprep.mubr.bf16.mxu0 0
        %3757 = vmatmul.mubr.bf16.gmra.mrb[0].mxu0 %v3628
        %v3758 = vpop.f32.mrb[0].mxu0
        %v3759 = vadd.f32 %v3637, %v3758
        %v3760 = vpop.f32.mrb[0].mxu0
        %v3761 = vadd.f32 %v3641, %v3760
        %v3762 = vpop.f32.mrb[0].mxu0
        %v3763 = vadd.f32 %v3637, %v3762
        %v3764 = vpop.f32.mrb[0].mxu0
        %v3765 = vadd.f32 %v3641, %v3764
        %3766 = vmatprep.mubr.bf16.mxu0 0
        %3767 = vmatmul.mubr.bf16.gmra.mrb[0].mxu0 %v3629
        %v3768 = vpop.f32.mrb[0].mxu0
        %v3769 = vadd.f32 %v3637, %v3768
        %v3770 = vpop.f32.mrb[0].mxu0
        %v3771 = vadd.f32 %v3641, %v3770
        %v3772 = vpop.f32.mrb[0].mxu0
        %v3773 = vadd.f32 %v3637, %v3772
        %v3774 = vpop.f32.mrb[0].mxu0
        %v3775 = vadd.f32 %v3641, %v3774
        %3776 = vmatprep.mubr.bf16.mxu0 0
        %3777 = vmatmul.mubr.bf16.gmra.mrb[0].mxu0 %v3630
        %v3778 = vpop.f32.mrb[0].mxu0
        %v3779 = vadd.f32 %v3637, %v3778
        %v3780 = vpop.f32.mrb[0].mxu0
        %v3781 = vadd.f32 %v3641, %v3780
        %v3782 = vpop.f32.mrb[0].mxu0
        %v3783 = vadd.f32 %v3637, %v3782
        %v3784 = vpop.f32.mrb[0].mxu0
        %v3785 = vadd.f32 %v3641, %v3784
        %3786 = vdwg.mxu0
        %v3787 = vmul.f32 %v3759, 0.5
        %v3788 = vmul.f32 %v3761, 0.5
        %v3789 = vmul.f32 %v3763, 0.5
        %v3790 = vmul.f32 %v3765, 0.5
        %v3791 = vmul.f32 %v3769, 0.5
        %v3792 = vmul.f32 %v3771, 0.5
        %v3793 = vmul.f32 %v3773, 0.5
        %v3794 = vmul.f32 %v3775, 0.5
        %v3795 = vmul.f32 %v3779, 0.5
        %v3796 = vmul.f32 %v3781, 0.5
        %v3797 = vmul.f32 %v3783, 0.5
        %v3798 = vmul.f32 %v3785, 0.5
        %v3799 = vmul.f32 %v3759, 0.044715
        %v3800 = vmul.f32 %v3761, 0.044715
        %v3801 = vmul.f32 %v3763, 0.044715
        %v3802 = vmul.f32 %v3765, 0.044715
        %v3803 = vmul.f32 %v3769, 0.044715
        %v3804 = vmul.f32 %v3771, 0.044715
        %v3805 = vmul.f32 %v3773, 0.044715
        %v3806 = vmul.f32 %v3775, 0.044715
        %v3807 = vmul.f32 %v3779, 0.044715
        %v3808 = vmul.f32 %v3781, 0.044715
        %v3809 = vmul.f32 %v3783, 0.044715
        %v3810 = vmul.f32 %v3785, 0.044715
        %v3811 = vmul.f32 %v3799, %v3759
        %v3812 = vmul.f32 %v3800, %v3761
        %v3813 = vmul.f32 %v3801, %v3763
        %v3814 = vmul.f32 %v3802, %v3765
        %v3815 = vmul.f32 %v3803, %v3769
        %v3816 = vmul.f32 %v3804, %v3771
        %v3817 = vmul.f32 %v3805, %v3773
        %v3818 = vmul.f32 %v3806, %v3775
        %v3819 = vmul.f32 %v3807, %v3779
        %v3820 = vmul.f32 %v3808, %v3781
        %v3821 = vmul.f32 %v3809, %v3783
        %v3822 = vmul.f32 %v3810, %v3785
        %v3823 = vmul.f32 %v3811, %v3759
        %v3824 = vmul.f32 %v3812, %v3761
        %v3825 = vmul.f32 %v3813, %v3763
        %v3826 = vmul.f32 %v3814, %v3765
        %v3827 = vmul.f32 %v3815, %v3769
        %v3828 = vmul.f32 %v3816, %v3771
        %v3829 = vmul.f32 %v3817, %v3773
        %v3830 = vmul.f32 %v3818, %v3775
        %v3831 = vmul.f32 %v3819, %v3779
        %v3832 = vmul.f32 %v3820, %v3781
        %v3833 = vmul.f32 %v3821, %v3783
        %v3834 = vmul.f32 %v3822, %v3785
        %v3835 = vadd.f32 %v3759, %v3823
        %v3836 = vadd.f32 %v3761, %v3824
        %v3837 = vadd.f32 %v3763, %v3825
        %v3838 = vadd.f32 %v3765, %v3826
        %v3839 = vadd.f32 %v3769, %v3827
        %v3840 = vadd.f32 %v3771, %v3828
        %v3841 = vadd.f32 %v3773, %v3829
        %v3842 = vadd.f32 %v3775, %v3830
        %v3843 = vadd.f32 %v3779, %v3831
        %v3844 = vadd.f32 %v3781, %v3832
        %v3845 = vadd.f32 %v3783, %v3833
        %v3846 = vadd.f32 %v3785, %v3834
        %v3847 = vmul.f32 %v3835, 0.7978846
        %v3848 = vmul.f32 %v3836, 0.7978846
        %v3849 = vmul.f32 %v3837, 0.7978846
        %v3850 = vmul.f32 %v3838, 0.7978846
        %v3851 = vmul.f32 %v3839, 0.7978846
        %v3852 = vmul.f32 %v3840, 0.7978846
        %v3853 = vmul.f32 %v3841, 0.7978846
        %v3854 = vmul.f32 %v3842, 0.7978846
        %v3855 = vmul.f32 %v3843, 0.7978846
        %v3856 = vmul.f32 %v3844, 0.7978846
        %v3857 = vmul.f32 %v3845, 0.7978846
        %v3858 = vmul.f32 %v3846, 0.7978846
        %v3859 = vtanh.pop %v3847
        %v3860 = vtanh.pop %v3848
        %v3861 = vtanh.pop %v3849
        %v3862 = vtanh.pop %v3850
        %v3863 = vtanh.pop %v3851
        %v3864 = vtanh.pop %v3852
        %v3865 = vtanh.pop %v3853
        %v3866 = vtanh.pop %v3854
        %v3867 = vtanh.pop %v3855
        %v3868 = vtanh.pop %v3856
        %v3869 = vtanh.pop %v3857
        %v3870 = vtanh.pop %v3858
        %v3871 = vadd.f32 %v3859, 1.0
        %v3872 = vadd.f32 %v3860, 1.0
        %v3873 = vadd.f32 %v3861, 1.0
        %v3874 = vadd.f32 %v3862, 1.0
        %v3875 = vadd.f32 %v3863, 1.0
        %v3876 = vadd.f32 %v3864, 1.0
        %v3877 = vadd.f32 %v3865, 1.0
        %v3878 = vadd.f32 %v3866, 1.0
        %v3879 = vadd.f32 %v3867, 1.0
        %v3880 = vadd.f32 %v3868, 1.0
        %v3881 = vadd.f32 %v3869, 1.0
        %v3882 = vadd.f32 %v3870, 1.0
        %v3883 = vmul.f32 %v3787, %v3871
        %v3884 = vmul.f32 %v3788, %v3872
        %v3885 = vmul.f32 %v3789, %v3873
        %v3886 = vmul.f32 %v3790, %v3874
        %v3887 = vmul.f32 %v3791, %v3875
        %v3888 = vmul.f32 %v3792, %v3876
        %v3889 = vmul.f32 %v3793, %v3877
        %v3890 = vmul.f32 %v3794, %v3878
        %v3891 = vmul.f32 %v3795, %v3879
        %v3892 = vmul.f32 %v3796, %v3880
        %v3893 = vmul.f32 %v3797, %v3881
        %v3894 = vmul.f32 %v3798, %v3882
        %s3895 = scalar_lea.vmem [#allocation16], 128
        %v3896 = vld [vmem:[%s3895] sm:$0xf]
        %v3897 = vld [vmem:[%s3895 + $0x4] sm:$0xf]
        %v3898 = vld [vmem:[%s3895 + $0x8] sm:$0xf]
        %v3899 = vld [vmem:[%s3895 + $0xc] sm:$0xf]
        %v3900 = vld [vmem:[%s3895 + $0x10] sm:$0xf]
        %v3901 = vld [vmem:[%s3895 + $0x14] sm:$0xf]
        %v3902 = vld [vmem:[%s3895 + $0x18] sm:$0xf]
        %v3903 = vld [vmem:[%s3895 + $0x1c] sm:$0xf]
        %v3904 = vld [vmem:[%s3895 + $0x20] sm:$0xf]
        %v3905 = vld [vmem:[%s3895 + $0x24] sm:$0xf]
        %v3906 = vld [vmem:[%s3895 + $0x28] sm:$0xf]
        %v3907 = vld [vmem:[%s3895 + $0x2c] sm:$0xf]
        %v3908 = vld [vmem:[%s3895 + $0x30] sm:$0xf]
        %v3909 = vld [vmem:[%s3895 + $0x34] sm:$0xf]
        %v3910 = vld [vmem:[%s3895 + $0x38] sm:$0xf]
        %v3911 = vld [vmem:[%s3895 + $0x3c] sm:$0xf]
        %v3912 = vld [vmem:[%s3895 + $0x40] sm:$0xf]
        %v3913 = vld [vmem:[%s3895 + $0x44] sm:$0xf]
        %v3914 = vld [vmem:[%s3895 + $0x48] sm:$0xf]
        %v3915 = vld [vmem:[%s3895 + $0x4c] sm:$0xf]
        %v3916 = vld [vmem:[%s3895 + $0x50] sm:$0xf]
        %v3917 = vld [vmem:[%s3895 + $0x54] sm:$0xf]
        %v3918 = vld [vmem:[%s3895 + $0x58] sm:$0xf]
        %v3919 = vld [vmem:[%s3895 + $0x5c] sm:$0xf]
        %v3920 = vld [vmem:[%s3895 + $0x60] sm:$0xf]
        %v3921 = vld [vmem:[%s3895 + $0x64] sm:$0xf]
        %v3922 = vld [vmem:[%s3895 + $0x68] sm:$0xf]
        %v3923 = vld [vmem:[%s3895 + $0x6c] sm:$0xf]
        %v3924 = vld [vmem:[%s3895 + $0x70] sm:$0xf]
        %v3925 = vld [vmem:[%s3895 + $0x74] sm:$0xf]
        %v3926 = vld [vmem:[%s3895 + $0x78] sm:$0xf]
        %v3927 = vld [vmem:[%s3895 + $0x7c] sm:$0xf]
        %v3928 = vpack.c.bf16 %v3885, %v3883
        %v3929 = vpack.c.bf16 %v3886, %v3884
        %v3930 = vpack.c.bf16 %v3889, %v3887
        %v3931 = vpack.c.bf16 %v3890, %v3888
        %v3932 = vpack.c.bf16 %v3893, %v3891
        %v3933 = vpack.c.bf16 %v3894, %v3892
        %s3934 = scalar_lea.vmem [#allocation17], 1
        %v3935 = vld [vmem:[%s3934] sm:$0x1]
        %v3937 = vlaneseq
        %v3938 = vshrl.u32 %v3937, 7
        %v3939 = vsub.s32 0, %v3938
        %v3940 = vrot.slane %v3935, %v3939
        %v3974 = vunpack.c.l.b16 %v3896
        %v3975 = vunpack.c.l.b16 %v3897
        %v3976 = vunpack.c.l.b16 %v3898
        %v3977 = vunpack.c.l.b16 %v3899
        %v3978 = vunpack.c.l.b16 %v3900
        %v3979 = vunpack.c.l.b16 %v3901
        %v3980 = vunpack.c.l.b16 %v3902
        %v3981 = vunpack.c.l.b16 %v3903
        %v3982 = vunpack.c.l.b16 %v3904
        %v3983 = vunpack.c.l.b16 %v3905
        %v3984 = vunpack.c.l.b16 %v3906
        %v3985 = vunpack.c.l.b16 %v3907
        %v3986 = vunpack.c.l.b16 %v3908
        %v3987 = vunpack.c.l.b16 %v3909
        %v3988 = vunpack.c.l.b16 %v3910
        %v3989 = vunpack.c.l.b16 %v3911
        %v3990 = vunpack.c.l.b16 %v3912
        %v3991 = vunpack.c.l.b16 %v3913
        %v3992 = vunpack.c.l.b16 %v3914
        %v3993 = vunpack.c.l.b16 %v3915
        %v3994 = vunpack.c.l.b16 %v3916
        %v3995 = vunpack.c.l.b16 %v3917
        %v3996 = vunpack.c.l.b16 %v3918
        %v3997 = vunpack.c.l.b16 %v3919
        %v3998 = vunpack.c.l.b16 %v3920
        %v3999 = vunpack.c.l.b16 %v3921
        %v4000 = vunpack.c.l.b16 %v3922
        %v4001 = vunpack.c.l.b16 %v3923
        %v4002 = vunpack.c.l.b16 %v3924
        %v4003 = vunpack.c.l.b16 %v3925
        %v4004 = vunpack.c.l.b16 %v3926
        %v4005 = vunpack.c.l.b16 %v3927
        %v4006 = vpack.c.b16 %v3975, %v3974
        %v4007 = vpack.c.b16 %v3977, %v3976
        %v4008 = vpack.c.b16 %v3979, %v3978
        %v4009 = vpack.c.b16 %v3981, %v3980
        %v4010 = vpack.c.b16 %v3983, %v3982
        %v4011 = vpack.c.b16 %v3985, %v3984
        %v4012 = vpack.c.b16 %v3987, %v3986
        %v4013 = vpack.c.b16 %v3989, %v3988
        %v4014 = vpack.c.b16 %v3991, %v3990
        %v4015 = vpack.c.b16 %v3993, %v3992
        %v4016 = vpack.c.b16 %v3995, %v3994
        %v4017 = vpack.c.b16 %v3997, %v3996
        %v4018 = vpack.c.b16 %v3999, %v3998
        %v4019 = vpack.c.b16 %v4001, %v4000
        %v4020 = vpack.c.b16 %v4003, %v4002
        %v4021 = vpack.c.b16 %v4005, %v4004
        %4038 = vmatprep.subr.bf16.mxu0 0
        %4039 = vmatpush1.bf16.msra.mxu0 %v4006
        %4040 = vmatprep.subr.bf16.mxu0 0
        %4041 = vmatpush1.bf16.msra.mxu0 %v4007
        %4042 = vmatprep.subr.bf16.mxu0 0
        %4043 = vmatpush1.bf16.msra.mxu0 %v4008
        %4044 = vmatprep.subr.bf16.mxu0 0
        %4045 = vmatpush1.bf16.msra.mxu0 %v4009
        %4046 = vmatprep.subr.bf16.mxu0 0
        %4047 = vmatpush1.bf16.msra.mxu0 %v4010
        %4048 = vmatprep.subr.bf16.mxu0 0
        %4049 = vmatpush1.bf16.msra.mxu0 %v4011
        %4050 = vmatprep.subr.bf16.mxu0 0
        %4051 = vmatpush1.bf16.msra.mxu0 %v4012
        %4052 = vmatprep.subr.bf16.mxu0 0
        %4053 = vmatpush1.bf16.msra.mxu0 %v4013
        %4054 = vmatprep.subr.bf16.mxu0 0
        %4055 = vmatpush1.bf16.msra.mxu0 %v4014
        %4056 = vmatprep.subr.bf16.mxu0 0
        %4057 = vmatpush1.bf16.msra.mxu0 %v4015
        %4058 = vmatprep.subr.bf16.mxu0 0
        %4059 = vmatpush1.bf16.msra.mxu0 %v4016
        %4060 = vmatprep.subr.bf16.mxu0 0
        %4061 = vmatpush1.bf16.msra.mxu0 %v4017
        %4062 = vmatprep.subr.bf16.mxu0 0
        %4063 = vmatpush1.bf16.msra.mxu0 %v4018
        %4064 = vmatprep.subr.bf16.mxu0 0
        %4065 = vmatpush1.bf16.msra.mxu0 %v4019
        %4066 = vmatprep.subr.bf16.mxu0 0
        %4067 = vmatpush1.bf16.msra.mxu0 %v4020
        %4068 = vmatprep.subr.bf16.mxu0 0
        %4069 = vmatpush1.bf16.msra.mxu0 %v4021
        %4070 = vmatprep.mubr.bf16.mxu0 %v3929
        %4071 = vmatmul.mubr.bf16.gmra.mrb[0].mxu0 %v3928
        %v4072 = vpop.f32.mrb[0].mxu0
        %v4073 = vadd.f32 %v3940, %v4072
        %v4074 = vpop.f32.mrb[0].mxu0
        %v4075 = vpop.f32.mrb[0].mxu0
        %v4076 = vpop.f32.mrb[0].mxu0
        %4077 = vmatprep.mubr.bf16.mxu0 %v3931
        %4078 = vmatmul.mubr.bf16.gmra.mrb[0].mxu0 %v3930
        %v4079 = vpop.f32.mrb[0].mxu0
        %v4080 = vpop.f32.mrb[0].mxu0
        %v4081 = vpop.f32.mrb[0].mxu0
        %v4082 = vpop.f32.mrb[0].mxu0
        %4083 = vmatprep.mubr.bf16.mxu0 %v3933
        %4084 = vmatmul.mubr.bf16.gmra.mrb[0].mxu0 %v3932
        %v4085 = vpop.f32.mrb[0].mxu0
        %v4086 = vpop.f32.mrb[0].mxu0
        %v4087 = vpop.f32.mrb[0].mxu0
        %v4088 = vpop.f32.mrb[0].mxu0
        %4089 = vdwg.mxu0
        %v4090 = vadd.f32 %v3605, %v4073
        %4091 = vadd.xlane.f32.xlu0 %v4090
        %v4092 = vpop.xlane.xlu0 %4091
        %v4093 = vmul.f32 %v4092, %v1737
        %v4094 = vsub.f32 %v4090, %v4093
        %v4095 = vmul.f32 %v4094, %v4094
        %4096 = vadd.xlane.f32.xlu0 %v4095
        %v4097 = vpop.xlane.xlu0 %4096
        %v4098 = vmul.f32 %v4097, %v1737
        %v4099 = vadd.f32 %v4098, 1e-12
        %v4100 = vrsqrt.pop %v4099
        %v4101 = vmul.f32 %v4094, %v4100
        %v4102 = vlaneseq
        %v4103 = vshrl.u32 %v4102, 7
        %v4104 = vsub.s32 2, %v4103
        %v4105 = vrot.slane %v3518, %v4104
        %v4106 = vmul.f32 %v4101, %v4105
        %v4107 = vlaneseq
        %v4108 = vshrl.u32 %v4107, 7
        %v4109 = vsub.s32 3, %v4108
        %v4110 = vrot.slane %v3518, %v4109
        %v4111 = vadd.f32 %v4106, %v4110
        %4112 = vst [vmem:[%s573] sm:$0x1] %v4111
        %s4113 = sand.u32 %s284, 1
        %s4114 = scalar_lea.sflag [#allocation4], %s4113
        %s4115 = sand.u32 %s284, 1
        %s4116 = scalar_lea.vmem [#allocation20], %s4115
        // Predicated region
        $region109: #{tpu_custom_call.1} parent=63 // pred_check
          %p4117 = pneg %p294
        $region110: #{tpu_custom_call.1} parent=63 // pred_check_branch
          %4119 = sbr.rel (%p4117) target = $region112
        $region111: #{tpu_custom_call.1} parent=63 // pred_region
          %s4121 = ssub.s32 16, 16
          %4122 = vsyncadd %s4114, %s4121
          %s4123 = smul.addr %s35, 16
          %s4124 = scalar_lea.hbm %s11, %s4123
          %s4126 = sshll.u32 %s4116, 4
          %s4127 = int_to_ptr.vmem [resolvable:$true] %s4126
          %4129 = dma.vmem_to_hbm [thread:$0]  %s4127, 16, %s4124, %s4114
        $region112: #{tpu_custom_call.1} parent=63 // pred_fallthru
          _
      $region64: #{tpu_custom_call.1} parent=5 // pred_fallthru
        _
      %p4130 = scmp.le.s32.totalorder 2, %s30
      // Predicated region
      $region113: #{tpu_custom_call.1} parent=5 // pred_check
        %p4131 = pneg %p4130
      $region114: #{tpu_custom_call.1} parent=5 // pred_check_branch
        %4133 = sbr.rel (%p4131) target = $region116
      $region115: #{tpu_custom_call.1} parent=5 // pred_region
        %s4134 = ssub.s32 %s30, 2
        // Predicated region
        $region117: #{tpu_custom_call.1} parent=115 // pred_check
          %p4135 = pneg %p300
        $region118: #{tpu_custom_call.1} parent=115 // pred_check_branch
          %4137 = sbr.rel (%p4135) target = $region120
        $region119: #{tpu_custom_call.1} parent=115 // pred_region
          %s4138 = sand.u32 %s285, 1
          %s4139 = scalar_lea.sflag [#allocation4], %s4138
          %s4140 = sand.u32 %s285, 1
          %s4141 = scalar_lea.vmem [#allocation20], %s4140
          %4142 = dma.done %s4139, 16
        $region120: #{tpu_custom_call.1} parent=115 // pred_fallthru
          _
      $region116: #{tpu_custom_call.1} parent=5 // pred_fallthru
        _
    $region6: #{tpu_custom_call.1} parent=1 // loop_footer
      %s34 = sadd.s32 1, %s30
    $region7: #{tpu_custom_call.1} parent=1 // loop_footer_branch
      %29 = sbr.rel target = $region3
    $region8: #{tpu_custom_call.1} parent=1 // loop_exit
      _
    %4143 = vsyncpa [#allocation3], 1
    %s4144 = scalar_lea.sflag [#allocation3], 1
    %4145 = vsyncpa %s4144, 1
    %4146 = vsyncpa [#allocation6], 1
    %s4147 = scalar_lea.sflag [#allocation6], 1
    %4148 = vsyncpa %s4147, 1
    %4149 = vsyncpa [#allocation9], 1
    %4150 = vsyncpa [#allocation12], 1
    %4151 = vsyncpa [#allocation15], 1
    %4152 = vsyncpa [#allocation18], 1
    %4153 = vsyncpa [#allocation4], 1
    %s4154 = scalar_lea.sflag [#allocation4], 1
    %4155 = vsyncpa %s4154, 1

</llo_original>
